<compile_context>
chip_gen: v7x
topology: tpu7x:2x2x1
jax: 0.10.0
libtpu: 0.0.40
codegen_flags: <defaults>
</compile_context>

<pallas_src>
import functools
import math

import jax
import jax.numpy as jnp
from jax.experimental import pallas as pl
from jax.experimental.pallas import tpu as pltpu

NEG_INF = -1e30  # finite mask value


def _layernorm(x, gamma, beta, eps=1e-5):
    mu = jnp.mean(x, axis=-1, keepdims=True)
    var = jnp.mean((x - mu) ** 2, axis=-1, keepdims=True)
    return (x - mu) * jax.lax.rsqrt(var + eps) * gamma + beta


def transformer_block_kernel(
    xq_ref, xkv_ref,              # (1, bq, emb), (1, n, emb)
    wq_ref, wk_ref, wv_ref,       # (heads, emb, hidden); 1/sqrt(hidden) folded into wq/wk
    wu_ref, bu_ref,               # (heads, hidden, emb), (1, emb)
    g1_ref, be1_ref,              # (1, emb)
    w1_ref, b1_ref,               # (emb, ffd), (1, ffd)
    w2_ref, b2_ref,               # (ffd, emb), (1, emb)
    g2_ref, be2_ref,              # (1, emb)
    o_ref,                        # (1, bq, emb)
    *, heads, block_q):
    qi = pl.program_id(1)

    x_q = xq_ref[0].astype(jnp.float32)       # residual path kept in f32
    x_kv = xkv_ref[0]
    n = x_kv.shape[0]
    emb = x_q.shape[1]
    cdt = wq_ref.dtype                        # MXU operand dtype (f32 or bf16)

    xq_c = x_q.astype(cdt)
    xkv_c = x_kv.astype(cdt)

    # Causal mask with global row indices for this query block (hoisted out of
    # the head loop; finite mask value instead of -inf).
    row = jax.lax.broadcasted_iota(jnp.int32, (block_q, n), 0) + qi * block_q
    col = jax.lax.broadcasted_iota(jnp.int32, (block_q, n), 1)
    causal = col <= row

    # Attention with fused unifyheads accumulation (no lane slicing / concat).
    acc = jnp.zeros((block_q, emb), jnp.float32)
    for h in range(heads):                    # heads is static & small
        q_h = jnp.dot(xq_c, wq_ref[h], preferred_element_type=jnp.float32)
        k_h = jnp.dot(xkv_c, wk_ref[h], preferred_element_type=jnp.float32)
        v_h = jnp.dot(xkv_c, wv_ref[h], preferred_element_type=jnp.float32)

        s = jnp.dot(q_h.astype(cdt), k_h.astype(cdt).T,
                    preferred_element_type=jnp.float32)          # (bq, n)
        s = jnp.where(causal, s, NEG_INF)
        s = s - jnp.max(s, axis=-1, keepdims=True)
        p = jnp.exp(s)                                            # f32 softmax math
        inv_l = pl.reciprocal(jnp.sum(p, axis=-1, keepdims=True), approx=True)

        out_h = jnp.dot(p.astype(cdt), v_h.astype(cdt),
                        preferred_element_type=jnp.float32) * inv_l
        acc = acc + jnp.dot(out_h.astype(cdt), wu_ref[h],
                            preferred_element_type=jnp.float32)

    att = acc + bu_ref[...]

    # residual + LayerNorm 1 (f32)
    y = _layernorm(att + x_q, g1_ref[...], be1_ref[...])

    # feed-forward: Linear -> ReLU -> Linear
    ff = jnp.dot(y.astype(cdt), w1_ref[...],
                 preferred_element_type=jnp.float32) + b1_ref[...]
    ff = jnp.maximum(ff, 0.0)
    ff = jnp.dot(ff.astype(cdt), w2_ref[...],
                 preferred_element_type=jnp.float32) + b2_ref[...]

    # residual + LayerNorm 2 (f32)
    z = _layernorm(ff + y, g2_ref[...], be2_ref[...])
    o_ref[0] = z.astype(o_ref.dtype)


def transformer_block(x, params, *, heads, hidden, block_q=None, compute_dtype=None):
    bs, n, emb = x.shape
    cdt = compute_dtype or x.dtype

    if block_q is None:
        block_q = n if n <= 256 else 256
    assert n % block_q == 0 and (block_q == n or block_q % 8 == 0)
    num_q = n // block_q

    scale = 1.0 / math.sqrt(hidden)
    # Head-major weights; attention scale folded into wq/wk; matmul weights in
    # the compute dtype (halves weight DMA bytes when bf16).
    wq3 = (params["wq"] * scale).reshape(emb, heads, hidden).transpose(1, 0, 2).astype(cdt)
    wk3 = (params["wk"] * scale).reshape(emb, heads, hidden).transpose(1, 0, 2).astype(cdt)
    wv3 = params["wv"].reshape(emb, heads, hidden).transpose(1, 0, 2).astype(cdt)
    wu3 = params["wu"].reshape(heads, hidden, emb).astype(cdt)
    w1 = params["w1"].astype(cdt)
    w2 = params["w2"].astype(cdt)

    weights = [wq3, wk3, wv3, wu3, params["bu"], params["g1"], params["be1"],
               w1, params["b1"], w2, params["b2"], params["g2"], params["be2"]]

    def full_spec(a):
        nd = a.ndim
        # Constant index_map -> block stays resident across all grid steps.
        return pl.BlockSpec(a.shape, lambda b, q, _nd=nd: (0,) * _nd)

    in_specs = [
        pl.BlockSpec((1, block_q, emb), lambda b, q: (b, q, 0)),   # query rows
        pl.BlockSpec((1, n, emb), lambda b, q: (b, 0, 0)),         # full seq (resident across q)
    ] + [full_spec(w) for w in weights]
    out_spec = pl.BlockSpec((1, block_q, emb), lambda b, q: (b, q, 0))

    kernel = functools.partial(transformer_block_kernel,
                               heads=heads, block_q=block_q)
    return pl.pallas_call(
        kernel,
        out_shape=jax.ShapeDtypeStruct((bs, n, emb), x.dtype),
        grid=(bs, num_q),
        in_specs=in_specs,
        out_specs=out_spec,
        compiler_params=pltpu.CompilerParams(
            dimension_semantics=("parallel", "parallel"),
            vmem_limit_bytes=64 * 1024 * 1024,
        ),
    )(x, x, *weights)


def ref_transformer_block(x, p, *, heads, hidden):
    """Pure-JAX reference mirroring the PyTorch forward."""
    bs, n, emb = x.shape
    scale = 1.0 / (hidden ** 0.5)
    q = (x @ p["wq"]).reshape(bs, n, heads, hidden).transpose(0, 2, 1, 3) * scale
    k = (x @ p["wk"]).reshape(bs, n, heads, hidden).transpose(0, 2, 1, 3) * scale
    v = (x @ p["wv"]).reshape(bs, n, heads, hidden).transpose(0, 2, 1, 3)
    dot = q @ k.transpose(0, 1, 3, 2)
    mask = jnp.tril(jnp.ones((n, n), dtype=bool))
    dot = jnp.where(mask, dot, -jnp.inf)
    att = jax.nn.softmax(dot, axis=-1)
    out = (att @ v).transpose(0, 2, 1, 3).reshape(bs, n, heads * hidden)
    out = out @ p["wu"] + p["bu"][0]

    def ln(a, g, b):
        mu = jnp.mean(a, axis=-1, keepdims=True)
        var = jnp.mean((a - mu) ** 2, axis=-1, keepdims=True)
        return (a - mu) * jax.lax.rsqrt(var + 1e-5) * g + b

    y = ln(out + x, p["g1"][0], p["be1"][0])
    ff = jnp.maximum(y @ p["w1"] + p["b1"][0], 0.0) @ p["w2"] + p["b2"][0]
    return ln(ff + y, p["g2"][0], p["be2"][0])


def init_params(key, emb, hidden, heads, ff_mult):
    keys = jax.random.split(key, 8)
    s = 0.02
    hh = heads * hidden
    ffd = ff_mult * emb
    return {
        "wq": s * jax.random.normal(keys[0], (emb, hh), jnp.float32),
        "wk": s * jax.random.normal(keys[1], (emb, hh), jnp.float32),
        "wv": s * jax.random.normal(keys[2], (emb, hh), jnp.float32),
        "wu": s * jax.random.normal(keys[3], (hh, emb), jnp.float32),
        "bu": s * jax.random.normal(keys[4], (1, emb), jnp.float32),
        "g1": jnp.ones((1, emb), jnp.float32),
        "be1": jnp.zeros((1, emb), jnp.float32),
        "w1": s * jax.random.normal(keys[5], (emb, ffd), jnp.float32),
        "b1": s * jax.random.normal(keys[6], (1, ffd), jnp.float32),
        "w2": s * jax.random.normal(keys[7], (ffd, emb), jnp.float32),
        "b2": jnp.zeros((1, emb), jnp.float32),
        "g2": jnp.ones((1, emb), jnp.float32),
        "be2": jnp.zeros((1, emb), jnp.float32),
    }


if __name__ == "__main__":
    bs, n, emb = 2, 8, 32
    heads, hidden, ff_mult = 4, 16, 4

    key = jax.random.PRNGKey(0)
    kx, kp = jax.random.split(key)
    x = jax.random.normal(kx, (bs, n, emb), jnp.float32)
    params = init_params(kp, emb, hidden, heads, ff_mult)

    ref = ref_transformer_block(x, params, heads=heads, hidden=hidden)

    # f32 MXU path (tight check)
    out = transformer_block(x, params, heads=heads, hidden=hidden)
    out = jax.block_until_ready(out)
    assert out.shape == (bs, n, emb)
    assert jnp.allclose(out, ref, atol=1e-3, rtol=1e-3), "f32 mismatch vs JAX reference"

    # bf16 MXU operands, f32 accumulation (perf path; looser check)
    out_bf16 = transformer_block(x, params, heads=heads, hidden=hidden,
                                 compute_dtype=jnp.bfloat16)
    out_bf16 = jax.block_until_ready(out_bf16)
    assert jnp.allclose(out_bf16, ref, atol=5e-2, rtol=5e-2), "bf16 mismatch vs JAX reference"

    print("KERNEL_OK")
</pallas_src>

<mosaic_0001>
module attributes {stable_mosaic.version = 11 : i64} {
  func.func @transformer_block_kernel(%arg0: i32, %arg1: i32, %arg2: memref<1x8x32xf32, #tpu.memory_space<vmem>>, %arg3: memref<1x8x32xf32, #tpu.memory_space<vmem>>, %arg4: memref<4x32x16xf32, #tpu.memory_space<vmem>>, %arg5: memref<4x32x16xf32, #tpu.memory_space<vmem>>, %arg6: memref<4x32x16xf32, #tpu.memory_space<vmem>>, %arg7: memref<4x16x32xf32, #tpu.memory_space<vmem>>, %arg8: memref<1x32xf32, #tpu.memory_space<vmem>>, %arg9: memref<1x32xf32, #tpu.memory_space<vmem>>, %arg10: memref<1x32xf32, #tpu.memory_space<vmem>>, %arg11: memref<32x128xf32, #tpu.memory_space<vmem>>, %arg12: memref<1x128xf32, #tpu.memory_space<vmem>>, %arg13: memref<128x32xf32, #tpu.memory_space<vmem>>, %arg14: memref<1x32xf32, #tpu.memory_space<vmem>>, %arg15: memref<1x32xf32, #tpu.memory_space<vmem>>, %arg16: memref<1x32xf32, #tpu.memory_space<vmem>>, %arg17: memref<1x8x32xf32, #tpu.memory_space<vmem>>) attributes {dimension_semantics = [#tpu.dimension_semantics<parallel>, #tpu.dimension_semantics<parallel>], iteration_bounds = array<i64: 2, 1>, scalar_prefetch = 0 : i64, scratch_operands = 0 : i64, tpu.core_type = #tpu.core_type<tc>, window_params = [{transform_indices = @transform_0, window_bounds = array<i64: 1, 8, 32>}, {transform_indices = @transform_1, window_bounds = array<i64: 1, 8, 32>}, {pipeline_mode = #tpu.pipeline_mode<synchronous>, transform_indices = @transform_2, window_bounds = array<i64: 4, 32, 16>}, {pipeline_mode = #tpu.pipeline_mode<synchronous>, transform_indices = @transform_3, window_bounds = array<i64: 4, 32, 16>}, {pipeline_mode = #tpu.pipeline_mode<synchronous>, transform_indices = @transform_4, window_bounds = array<i64: 4, 32, 16>}, {pipeline_mode = #tpu.pipeline_mode<synchronous>, transform_indices = @transform_5, window_bounds = array<i64: 4, 16, 32>}, {pipeline_mode = #tpu.pipeline_mode<synchronous>, transform_indices = @transform_6, window_bounds = array<i64: 1, 32>}, {pipeline_mode = #tpu.pipeline_mode<synchronous>, transform_indices = @transform_7, window_bounds = array<i64: 1, 32>}, {pipeline_mode = #tpu.pipeline_mode<synchronous>, transform_indices = @transform_8, window_bounds = array<i64: 1, 32>}, {pipeline_mode = #tpu.pipeline_mode<synchronous>, transform_indices = @transform_9, window_bounds = array<i64: 32, 128>}, {pipeline_mode = #tpu.pipeline_mode<synchronous>, transform_indices = @transform_10, window_bounds = array<i64: 1, 128>}, {pipeline_mode = #tpu.pipeline_mode<synchronous>, transform_indices = @transform_11, window_bounds = array<i64: 128, 32>}, {pipeline_mode = #tpu.pipeline_mode<synchronous>, transform_indices = @transform_12, window_bounds = array<i64: 1, 32>}, {pipeline_mode = #tpu.pipeline_mode<synchronous>, transform_indices = @transform_13, window_bounds = array<i64: 1, 32>}, {pipeline_mode = #tpu.pipeline_mode<synchronous>, transform_indices = @transform_14, window_bounds = array<i64: 1, 32>}, {transform_indices = @transform_15, window_bounds = array<i64: 1, 8, 32>}]} {
    %c0 = arith.constant 0 : index
    %c0_0 = arith.constant 0 : index
    %c0_1 = arith.constant 0 : index
    %0 = vector.load %arg2[%c0, %c0_0, %c0_1] : memref<1x8x32xf32, #tpu.memory_space<vmem>>, vector<1x8x32xf32>
    %1 = vector.shape_cast %0 : vector<1x8x32xf32> to vector<8x32xf32>
    %c0_2 = arith.constant 0 : index
    %c0_3 = arith.constant 0 : index
    %c0_4 = arith.constant 0 : index
    %2 = vector.load %arg3[%c0_2, %c0_3, %c0_4] : memref<1x8x32xf32, #tpu.memory_space<vmem>>, vector<1x8x32xf32>
    %3 = vector.shape_cast %2 : vector<1x8x32xf32> to vector<8x32xf32>
    %4 = tpu.iota {dimensions = array<i32: 0>} : vector<8x8xi32>
    %c8_i32 = arith.constant 8 : i32
    %5 = arith.muli %arg1, %c8_i32 : i32
    %6 = vector.broadcast %5 : i32 to vector<8x8xi32>
    %7 = arith.addi %4, %6 : vector<8x8xi32>
    %8 = tpu.iota {dimensions = array<i32: 1>} : vector<8x8xi32>
    %9 = arith.cmpi sle, %8, %7 : vector<8x8xi32>
    %cst = arith.constant 0.000000e+00 : f32
    %10 = vector.broadcast %cst : f32 to vector<8x32xf32>
    %c0_5 = arith.constant 0 : index
    %c0_6 = arith.constant 0 : index
    %c0_7 = arith.constant 0 : index
    %11 = vector.load %arg4[%c0_5, %c0_6, %c0_7] : memref<4x32x16xf32, #tpu.memory_space<vmem>>, vector<1x32x16xf32>
    %12 = vector.shape_cast %11 : vector<1x32x16xf32> to vector<32x16xf32>
    %cst_8 = arith.constant dense<0.000000e+00> : vector<8x16xf32>
    %13 = tpu.matmul %1, %12, %cst_8 {dimension_numbers = #tpu.dot_dimension_numbers<[1], [0], [0], [1], [0, 0, 1, 1], [], []>} : vector<8x32xf32>, vector<32x16xf32>, vector<8x16xf32> -> vector<8x16xf32>
    %c0_9 = arith.constant 0 : index
    %c0_10 = arith.constant 0 : index
    %c0_11 = arith.constant 0 : index
    %14 = vector.load %arg5[%c0_9, %c0_10, %c0_11] : memref<4x32x16xf32, #tpu.memory_space<vmem>>, vector<1x32x16xf32>
    %15 = vector.shape_cast %14 : vector<1x32x16xf32> to vector<32x16xf32>
    %cst_12 = arith.constant dense<0.000000e+00> : vector<8x16xf32>
    %16 = tpu.matmul %3, %15, %cst_12 {dimension_numbers = #tpu.dot_dimension_numbers<[1], [0], [0], [1], [0, 0, 1, 1], [], []>} : vector<8x32xf32>, vector<32x16xf32>, vector<8x16xf32> -> vector<8x16xf32>
    %c0_13 = arith.constant 0 : index
    %c0_14 = arith.constant 0 : index
    %c0_15 = arith.constant 0 : index
    %17 = vector.load %arg6[%c0_13, %c0_14, %c0_15] : memref<4x32x16xf32, #tpu.memory_space<vmem>>, vector<1x32x16xf32>
    %18 = vector.shape_cast %17 : vector<1x32x16xf32> to vector<32x16xf32>
    %cst_16 = arith.constant dense<0.000000e+00> : vector<8x16xf32>
    %19 = tpu.matmul %3, %18, %cst_16 {dimension_numbers = #tpu.dot_dimension_numbers<[1], [0], [0], [1], [0, 0, 1, 1], [], []>} : vector<8x32xf32>, vector<32x16xf32>, vector<8x16xf32> -> vector<8x16xf32>
    %20 = tpu.transpose %16, [1, 0] : vector<8x16xf32> -> vector<16x8xf32>
    %cst_17 = arith.constant dense<0.000000e+00> : vector<8x8xf32>
    %21 = tpu.matmul %13, %20, %cst_17 {dimension_numbers = #tpu.dot_dimension_numbers<[1], [0], [0], [1], [0, 0, 1, 1], [], []>} : vector<8x16xf32>, vector<16x8xf32>, vector<8x8xf32> -> vector<8x8xf32>
    %cst_18 = arith.constant -1.000000e+30 : f32
    %22 = vector.broadcast %cst_18 : f32 to vector<8x8xf32>
    %23 = arith.select %9, %21, %22 : vector<8x8xi1>, vector<8x8xf32>
    %cst_19 = arith.constant dense<0xFF800000> : vector<8xf32>
    %24 = vector.multi_reduction <maximumf>, %23, %cst_19 [1] : vector<8x8xf32> to vector<8xf32>
    %25 = vector.shape_cast %24 : vector<8xf32> to vector<8x1xf32>
    %26 = vector.broadcast %25 : vector<8x1xf32> to vector<8x8xf32>
    %27 = arith.subf %23, %26 : vector<8x8xf32>
    %28 = math.exp %27 : vector<8x8xf32>
    %cst_20 = arith.constant dense<0.000000e+00> : vector<8xf32>
    %29 = vector.multi_reduction <add>, %28, %cst_20 [1] : vector<8x8xf32> to vector<8xf32>
    %30 = vector.shape_cast %29 : vector<8xf32> to vector<8x1xf32>
    %31 = tpu.reciprocal %30 {approx = true} : vector<8x1xf32> -> vector<8x1xf32>
    %cst_21 = arith.constant dense<0.000000e+00> : vector<8x16xf32>
    %32 = tpu.matmul %28, %19, %cst_21 {dimension_numbers = #tpu.dot_dimension_numbers<[1], [0], [0], [1], [0, 0, 1, 1], [], []>} : vector<8x8xf32>, vector<8x16xf32>, vector<8x16xf32> -> vector<8x16xf32>
    %33 = vector.broadcast %31 : vector<8x1xf32> to vector<8x16xf32>
    %34 = arith.mulf %32, %33 : vector<8x16xf32>
    %c0_22 = arith.constant 0 : index
    %c0_23 = arith.constant 0 : index
    %c0_24 = arith.constant 0 : index
    %35 = vector.load %arg7[%c0_22, %c0_23, %c0_24] : memref<4x16x32xf32, #tpu.memory_space<vmem>>, vector<1x16x32xf32>
    %36 = vector.shape_cast %35 : vector<1x16x32xf32> to vector<16x32xf32>
    %cst_25 = arith.constant dense<0.000000e+00> : vector<8x32xf32>
    %37 = tpu.matmul %34, %36, %cst_25 {dimension_numbers = #tpu.dot_dimension_numbers<[1], [0], [0], [1], [0, 0, 1, 1], [], []>} : vector<8x16xf32>, vector<16x32xf32>, vector<8x32xf32> -> vector<8x32xf32>
    %38 = arith.addf %10, %37 : vector<8x32xf32>
    %c1 = arith.constant 1 : index
    %c0_26 = arith.constant 0 : index
    %c0_27 = arith.constant 0 : index
    %39 = vector.load %arg4[%c1, %c0_26, %c0_27] : memref<4x32x16xf32, #tpu.memory_space<vmem>>, vector<1x32x16xf32>
    %40 = vector.shape_cast %39 : vector<1x32x16xf32> to vector<32x16xf32>
    %cst_28 = arith.constant dense<0.000000e+00> : vector<8x16xf32>
    %41 = tpu.matmul %1, %40, %cst_28 {dimension_numbers = #tpu.dot_dimension_numbers<[1], [0], [0], [1], [0, 0, 1, 1], [], []>} : vector<8x32xf32>, vector<32x16xf32>, vector<8x16xf32> -> vector<8x16xf32>
    %c1_29 = arith.constant 1 : index
    %c0_30 = arith.constant 0 : index
    %c0_31 = arith.constant 0 : index
    %42 = vector.load %arg5[%c1_29, %c0_30, %c0_31] : memref<4x32x16xf32, #tpu.memory_space<vmem>>, vector<1x32x16xf32>
    %43 = vector.shape_cast %42 : vector<1x32x16xf32> to vector<32x16xf32>
    %cst_32 = arith.constant dense<0.000000e+00> : vector<8x16xf32>
    %44 = tpu.matmul %3, %43, %cst_32 {dimension_numbers = #tpu.dot_dimension_numbers<[1], [0], [0], [1], [0, 0, 1, 1], [], []>} : vector<8x32xf32>, vector<32x16xf32>, vector<8x16xf32> -> vector<8x16xf32>
    %c1_33 = arith.constant 1 : index
    %c0_34 = arith.constant 0 : index
    %c0_35 = arith.constant 0 : index
    %45 = vector.load %arg6[%c1_33, %c0_34, %c0_35] : memref<4x32x16xf32, #tpu.memory_space<vmem>>, vector<1x32x16xf32>
    %46 = vector.shape_cast %45 : vector<1x32x16xf32> to vector<32x16xf32>
    %cst_36 = arith.constant dense<0.000000e+00> : vector<8x16xf32>
    %47 = tpu.matmul %3, %46, %cst_36 {dimension_numbers = #tpu.dot_dimension_numbers<[1], [0], [0], [1], [0, 0, 1, 1], [], []>} : vector<8x32xf32>, vector<32x16xf32>, vector<8x16xf32> -> vector<8x16xf32>
    %48 = tpu.transpose %44, [1, 0] : vector<8x16xf32> -> vector<16x8xf32>
    %cst_37 = arith.constant dense<0.000000e+00> : vector<8x8xf32>
    %49 = tpu.matmul %41, %48, %cst_37 {dimension_numbers = #tpu.dot_dimension_numbers<[1], [0], [0], [1], [0, 0, 1, 1], [], []>} : vector<8x16xf32>, vector<16x8xf32>, vector<8x8xf32> -> vector<8x8xf32>
    %cst_38 = arith.constant -1.000000e+30 : f32
    %50 = vector.broadcast %cst_38 : f32 to vector<8x8xf32>
    %51 = arith.select %9, %49, %50 : vector<8x8xi1>, vector<8x8xf32>
    %cst_39 = arith.constant dense<0xFF800000> : vector<8xf32>
    %52 = vector.multi_reduction <maximumf>, %51, %cst_39 [1] : vector<8x8xf32> to vector<8xf32>
    %53 = vector.shape_cast %52 : vector<8xf32> to vector<8x1xf32>
    %54 = vector.broadcast %53 : vector<8x1xf32> to vector<8x8xf32>
    %55 = arith.subf %51, %54 : vector<8x8xf32>
    %56 = math.exp %55 : vector<8x8xf32>
    %cst_40 = arith.constant dense<0.000000e+00> : vector<8xf32>
    %57 = vector.multi_reduction <add>, %56, %cst_40 [1] : vector<8x8xf32> to vector<8xf32>
    %58 = vector.shape_cast %57 : vector<8xf32> to vector<8x1xf32>
    %59 = tpu.reciprocal %58 {approx = true} : vector<8x1xf32> -> vector<8x1xf32>
    %cst_41 = arith.constant dense<0.000000e+00> : vector<8x16xf32>
    %60 = tpu.matmul %56, %47, %cst_41 {dimension_numbers = #tpu.dot_dimension_numbers<[1], [0], [0], [1], [0, 0, 1, 1], [], []>} : vector<8x8xf32>, vector<8x16xf32>, vector<8x16xf32> -> vector<8x16xf32>
    %61 = vector.broadcast %59 : vector<8x1xf32> to vector<8x16xf32>
    %62 = arith.mulf %60, %61 : vector<8x16xf32>
    %c1_42 = arith.constant 1 : index
    %c0_43 = arith.constant 0 : index
    %c0_44 = arith.constant 0 : index
    %63 = vector.load %arg7[%c1_42, %c0_43, %c0_44] : memref<4x16x32xf32, #tpu.memory_space<vmem>>, vector<1x16x32xf32>
    %64 = vector.shape_cast %63 : vector<1x16x32xf32> to vector<16x32xf32>
    %cst_45 = arith.constant dense<0.000000e+00> : vector<8x32xf32>
    %65 = tpu.matmul %62, %64, %cst_45 {dimension_numbers = #tpu.dot_dimension_numbers<[1], [0], [0], [1], [0, 0, 1, 1], [], []>} : vector<8x16xf32>, vector<16x32xf32>, vector<8x32xf32> -> vector<8x32xf32>
    %66 = arith.addf %38, %65 : vector<8x32xf32>
    %c2 = arith.constant 2 : index
    %c0_46 = arith.constant 0 : index
    %c0_47 = arith.constant 0 : index
    %67 = vector.load %arg4[%c2, %c0_46, %c0_47] : memref<4x32x16xf32, #tpu.memory_space<vmem>>, vector<1x32x16xf32>
    %68 = vector.shape_cast %67 : vector<1x32x16xf32> to vector<32x16xf32>
    %cst_48 = arith.constant dense<0.000000e+00> : vector<8x16xf32>
    %69 = tpu.matmul %1, %68, %cst_48 {dimension_numbers = #tpu.dot_dimension_numbers<[1], [0], [0], [1], [0, 0, 1, 1], [], []>} : vector<8x32xf32>, vector<32x16xf32>, vector<8x16xf32> -> vector<8x16xf32>
    %c2_49 = arith.constant 2 : index
    %c0_50 = arith.constant 0 : index
    %c0_51 = arith.constant 0 : index
    %70 = vector.load %arg5[%c2_49, %c0_50, %c0_51] : memref<4x32x16xf32, #tpu.memory_space<vmem>>, vector<1x32x16xf32>
    %71 = vector.shape_cast %70 : vector<1x32x16xf32> to vector<32x16xf32>
    %cst_52 = arith.constant dense<0.000000e+00> : vector<8x16xf32>
    %72 = tpu.matmul %3, %71, %cst_52 {dimension_numbers = #tpu.dot_dimension_numbers<[1], [0], [0], [1], [0, 0, 1, 1], [], []>} : vector<8x32xf32>, vector<32x16xf32>, vector<8x16xf32> -> vector<8x16xf32>
    %c2_53 = arith.constant 2 : index
    %c0_54 = arith.constant 0 : index
    %c0_55 = arith.constant 0 : index
    %73 = vector.load %arg6[%c2_53, %c0_54, %c0_55] : memref<4x32x16xf32, #tpu.memory_space<vmem>>, vector<1x32x16xf32>
    %74 = vector.shape_cast %73 : vector<1x32x16xf32> to vector<32x16xf32>
    %cst_56 = arith.constant dense<0.000000e+00> : vector<8x16xf32>
    %75 = tpu.matmul %3, %74, %cst_56 {dimension_numbers = #tpu.dot_dimension_numbers<[1], [0], [0], [1], [0, 0, 1, 1], [], []>} : vector<8x32xf32>, vector<32x16xf32>, vector<8x16xf32> -> vector<8x16xf32>
    %76 = tpu.transpose %72, [1, 0] : vector<8x16xf32> -> vector<16x8xf32>
    %cst_57 = arith.constant dense<0.000000e+00> : vector<8x8xf32>
    %77 = tpu.matmul %69, %76, %cst_57 {dimension_numbers = #tpu.dot_dimension_numbers<[1], [0], [0], [1], [0, 0, 1, 1], [], []>} : vector<8x16xf32>, vector<16x8xf32>, vector<8x8xf32> -> vector<8x8xf32>
    %cst_58 = arith.constant -1.000000e+30 : f32
    %78 = vector.broadcast %cst_58 : f32 to vector<8x8xf32>
    %79 = arith.select %9, %77, %78 : vector<8x8xi1>, vector<8x8xf32>
    %cst_59 = arith.constant dense<0xFF800000> : vector<8xf32>
    %80 = vector.multi_reduction <maximumf>, %79, %cst_59 [1] : vector<8x8xf32> to vector<8xf32>
    %81 = vector.shape_cast %80 : vector<8xf32> to vector<8x1xf32>
    %82 = vector.broadcast %81 : vector<8x1xf32> to vector<8x8xf32>
    %83 = arith.subf %79, %82 : vector<8x8xf32>
    %84 = math.exp %83 : vector<8x8xf32>
    %cst_60 = arith.constant dense<0.000000e+00> : vector<8xf32>
    %85 = vector.multi_reduction <add>, %84, %cst_60 [1] : vector<8x8xf32> to vector<8xf32>
    %86 = vector.shape_cast %85 : vector<8xf32> to vector<8x1xf32>
    %87 = tpu.reciprocal %86 {approx = true} : vector<8x1xf32> -> vector<8x1xf32>
    %cst_61 = arith.constant dense<0.000000e+00> : vector<8x16xf32>
    %88 = tpu.matmul %84, %75, %cst_61 {dimension_numbers = #tpu.dot_dimension_numbers<[1], [0], [0], [1], [0, 0, 1, 1], [], []>} : vector<8x8xf32>, vector<8x16xf32>, vector<8x16xf32> -> vector<8x16xf32>
    %89 = vector.broadcast %87 : vector<8x1xf32> to vector<8x16xf32>
    %90 = arith.mulf %88, %89 : vector<8x16xf32>
    %c2_62 = arith.constant 2 : index
    %c0_63 = arith.constant 0 : index
    %c0_64 = arith.constant 0 : index
    %91 = vector.load %arg7[%c2_62, %c0_63, %c0_64] : memref<4x16x32xf32, #tpu.memory_space<vmem>>, vector<1x16x32xf32>
    %92 = vector.shape_cast %91 : vector<1x16x32xf32> to vector<16x32xf32>
    %cst_65 = arith.constant dense<0.000000e+00> : vector<8x32xf32>
    %93 = tpu.matmul %90, %92, %cst_65 {dimension_numbers = #tpu.dot_dimension_numbers<[1], [0], [0], [1], [0, 0, 1, 1], [], []>} : vector<8x16xf32>, vector<16x32xf32>, vector<8x32xf32> -> vector<8x32xf32>
    %94 = arith.addf %66, %93 : vector<8x32xf32>
    %c3 = arith.constant 3 : index
    %c0_66 = arith.constant 0 : index
    %c0_67 = arith.constant 0 : index
    %95 = vector.load %arg4[%c3, %c0_66, %c0_67] : memref<4x32x16xf32, #tpu.memory_space<vmem>>, vector<1x32x16xf32>
    %96 = vector.shape_cast %95 : vector<1x32x16xf32> to vector<32x16xf32>
    %cst_68 = arith.constant dense<0.000000e+00> : vector<8x16xf32>
    %97 = tpu.matmul %1, %96, %cst_68 {dimension_numbers = #tpu.dot_dimension_numbers<[1], [0], [0], [1], [0, 0, 1, 1], [], []>} : vector<8x32xf32>, vector<32x16xf32>, vector<8x16xf32> -> vector<8x16xf32>
    %c3_69 = arith.constant 3 : index
    %c0_70 = arith.constant 0 : index
    %c0_71 = arith.constant 0 : index
    %98 = vector.load %arg5[%c3_69, %c0_70, %c0_71] : memref<4x32x16xf32, #tpu.memory_space<vmem>>, vector<1x32x16xf32>
    %99 = vector.shape_cast %98 : vector<1x32x16xf32> to vector<32x16xf32>
    %cst_72 = arith.constant dense<0.000000e+00> : vector<8x16xf32>
    %100 = tpu.matmul %3, %99, %cst_72 {dimension_numbers = #tpu.dot_dimension_numbers<[1], [0], [0], [1], [0, 0, 1, 1], [], []>} : vector<8x32xf32>, vector<32x16xf32>, vector<8x16xf32> -> vector<8x16xf32>
    %c3_73 = arith.constant 3 : index
    %c0_74 = arith.constant 0 : index
    %c0_75 = arith.constant 0 : index
    %101 = vector.load %arg6[%c3_73, %c0_74, %c0_75] : memref<4x32x16xf32, #tpu.memory_space<vmem>>, vector<1x32x16xf32>
    %102 = vector.shape_cast %101 : vector<1x32x16xf32> to vector<32x16xf32>
    %cst_76 = arith.constant dense<0.000000e+00> : vector<8x16xf32>
    %103 = tpu.matmul %3, %102, %cst_76 {dimension_numbers = #tpu.dot_dimension_numbers<[1], [0], [0], [1], [0, 0, 1, 1], [], []>} : vector<8x32xf32>, vector<32x16xf32>, vector<8x16xf32> -> vector<8x16xf32>
    %104 = tpu.transpose %100, [1, 0] : vector<8x16xf32> -> vector<16x8xf32>
    %cst_77 = arith.constant dense<0.000000e+00> : vector<8x8xf32>
    %105 = tpu.matmul %97, %104, %cst_77 {dimension_numbers = #tpu.dot_dimension_numbers<[1], [0], [0], [1], [0, 0, 1, 1], [], []>} : vector<8x16xf32>, vector<16x8xf32>, vector<8x8xf32> -> vector<8x8xf32>
    %cst_78 = arith.constant -1.000000e+30 : f32
    %106 = vector.broadcast %cst_78 : f32 to vector<8x8xf32>
    %107 = arith.select %9, %105, %106 : vector<8x8xi1>, vector<8x8xf32>
    %cst_79 = arith.constant dense<0xFF800000> : vector<8xf32>
    %108 = vector.multi_reduction <maximumf>, %107, %cst_79 [1] : vector<8x8xf32> to vector<8xf32>
    %109 = vector.shape_cast %108 : vector<8xf32> to vector<8x1xf32>
    %110 = vector.broadcast %109 : vector<8x1xf32> to vector<8x8xf32>
    %111 = arith.subf %107, %110 : vector<8x8xf32>
    %112 = math.exp %111 : vector<8x8xf32>
    %cst_80 = arith.constant dense<0.000000e+00> : vector<8xf32>
    %113 = vector.multi_reduction <add>, %112, %cst_80 [1] : vector<8x8xf32> to vector<8xf32>
    %114 = vector.shape_cast %113 : vector<8xf32> to vector<8x1xf32>
    %115 = tpu.reciprocal %114 {approx = true} : vector<8x1xf32> -> vector<8x1xf32>
    %cst_81 = arith.constant dense<0.000000e+00> : vector<8x16xf32>
    %116 = tpu.matmul %112, %103, %cst_81 {dimension_numbers = #tpu.dot_dimension_numbers<[1], [0], [0], [1], [0, 0, 1, 1], [], []>} : vector<8x8xf32>, vector<8x16xf32>, vector<8x16xf32> -> vector<8x16xf32>
    %117 = vector.broadcast %115 : vector<8x1xf32> to vector<8x16xf32>
    %118 = arith.mulf %116, %117 : vector<8x16xf32>
    %c3_82 = arith.constant 3 : index
    %c0_83 = arith.constant 0 : index
    %c0_84 = arith.constant 0 : index
    %119 = vector.load %arg7[%c3_82, %c0_83, %c0_84] : memref<4x16x32xf32, #tpu.memory_space<vmem>>, vector<1x16x32xf32>
    %120 = vector.shape_cast %119 : vector<1x16x32xf32> to vector<16x32xf32>
    %cst_85 = arith.constant dense<0.000000e+00> : vector<8x32xf32>
    %121 = tpu.matmul %118, %120, %cst_85 {dimension_numbers = #tpu.dot_dimension_numbers<[1], [0], [0], [1], [0, 0, 1, 1], [], []>} : vector<8x16xf32>, vector<16x32xf32>, vector<8x32xf32> -> vector<8x32xf32>
    %122 = arith.addf %94, %121 : vector<8x32xf32>
    %c0_86 = arith.constant 0 : index
    %c0_87 = arith.constant 0 : index
    %123 = vector.load %arg8[%c0_86, %c0_87] : memref<1x32xf32, #tpu.memory_space<vmem>>, vector<1x32xf32>
    %124 = vector.broadcast %123 : vector<1x32xf32> to vector<8x32xf32>
    %125 = arith.addf %122, %124 : vector<8x32xf32>
    %126 = arith.addf %125, %1 : vector<8x32xf32>
    %c0_88 = arith.constant 0 : index
    %c0_89 = arith.constant 0 : index
    %127 = vector.load %arg9[%c0_88, %c0_89] : memref<1x32xf32, #tpu.memory_space<vmem>>, vector<1x32xf32>
    %c0_90 = arith.constant 0 : index
    %c0_91 = arith.constant 0 : index
    %128 = vector.load %arg10[%c0_90, %c0_91] : memref<1x32xf32, #tpu.memory_space<vmem>>, vector<1x32xf32>
    %cst_92 = arith.constant dense<0.000000e+00> : vector<8xf32>
    %129 = vector.multi_reduction <add>, %126, %cst_92 [1] : vector<8x32xf32> to vector<8xf32>
    %130 = vector.shape_cast %129 : vector<8xf32> to vector<8x1xf32>
    %cst_93 = arith.constant 3.200000e+01 : f32
    %131 = vector.broadcast %cst_93 : f32 to vector<8x1xf32>
    %132 = arith.divf %130, %131 : vector<8x1xf32>
    %133 = vector.broadcast %132 : vector<8x1xf32> to vector<8x32xf32>
    %134 = arith.subf %126, %133 : vector<8x32xf32>
    %135 = arith.mulf %134, %134 : vector<8x32xf32>
    %cst_94 = arith.constant dense<0.000000e+00> : vector<8xf32>
    %136 = vector.multi_reduction <add>, %135, %cst_94 [1] : vector<8x32xf32> to vector<8xf32>
    %137 = vector.shape_cast %136 : vector<8xf32> to vector<8x1xf32>
    %cst_95 = arith.constant 3.200000e+01 : f32
    %138 = vector.broadcast %cst_95 : f32 to vector<8x1xf32>
    %139 = arith.divf %137, %138 : vector<8x1xf32>
    %140 = vector.broadcast %132 : vector<8x1xf32> to vector<8x32xf32>
    %141 = arith.subf %126, %140 : vector<8x32xf32>
    %cst_96 = arith.constant 9.99999974E-6 : f32
    %142 = vector.broadcast %cst_96 : f32 to vector<8x1xf32>
    %143 = arith.addf %139, %142 : vector<8x1xf32>
    %144 = math.rsqrt %143 : vector<8x1xf32>
    %145 = vector.broadcast %144 : vector<8x1xf32> to vector<8x32xf32>
    %146 = arith.mulf %141, %145 : vector<8x32xf32>
    %147 = vector.broadcast %127 : vector<1x32xf32> to vector<8x32xf32>
    %148 = arith.mulf %146, %147 : vector<8x32xf32>
    %149 = vector.broadcast %128 : vector<1x32xf32> to vector<8x32xf32>
    %150 = arith.addf %148, %149 : vector<8x32xf32>
    %c0_97 = arith.constant 0 : index
    %c0_98 = arith.constant 0 : index
    %151 = vector.load %arg11[%c0_97, %c0_98] : memref<32x128xf32, #tpu.memory_space<vmem>>, vector<32x128xf32>
    %cst_99 = arith.constant dense<0.000000e+00> : vector<8x128xf32>
    %152 = tpu.matmul %150, %151, %cst_99 {dimension_numbers = #tpu.dot_dimension_numbers<[1], [0], [0], [1], [0, 0, 1, 1], [], []>} : vector<8x32xf32>, vector<32x128xf32>, vector<8x128xf32> -> vector<8x128xf32>
    %c0_100 = arith.constant 0 : index
    %c0_101 = arith.constant 0 : index
    %153 = vector.load %arg12[%c0_100, %c0_101] : memref<1x128xf32, #tpu.memory_space<vmem>>, vector<1x128xf32>
    %154 = vector.broadcast %153 : vector<1x128xf32> to vector<8x128xf32>
    %155 = arith.addf %152, %154 : vector<8x128xf32>
    %cst_102 = arith.constant 0.000000e+00 : f32
    %156 = vector.broadcast %cst_102 : f32 to vector<8x128xf32>
    %157 = arith.maximumf %155, %156 : vector<8x128xf32>
    %c0_103 = arith.constant 0 : index
    %c0_104 = arith.constant 0 : index
    %158 = vector.load %arg13[%c0_103, %c0_104] : memref<128x32xf32, #tpu.memory_space<vmem>>, vector<128x32xf32>
    %cst_105 = arith.constant dense<0.000000e+00> : vector<8x32xf32>
    %159 = tpu.matmul %157, %158, %cst_105 {dimension_numbers = #tpu.dot_dimension_numbers<[1], [0], [0], [1], [0, 0, 1, 1], [], []>} : vector<8x128xf32>, vector<128x32xf32>, vector<8x32xf32> -> vector<8x32xf32>
    %c0_106 = arith.constant 0 : index
    %c0_107 = arith.constant 0 : index
    %160 = vector.load %arg14[%c0_106, %c0_107] : memref<1x32xf32, #tpu.memory_space<vmem>>, vector<1x32xf32>
    %161 = vector.broadcast %160 : vector<1x32xf32> to vector<8x32xf32>
    %162 = arith.addf %159, %161 : vector<8x32xf32>
    %163 = arith.addf %162, %150 : vector<8x32xf32>
    %c0_108 = arith.constant 0 : index
    %c0_109 = arith.constant 0 : index
    %164 = vector.load %arg15[%c0_108, %c0_109] : memref<1x32xf32, #tpu.memory_space<vmem>>, vector<1x32xf32>
    %c0_110 = arith.constant 0 : index
    %c0_111 = arith.constant 0 : index
    %165 = vector.load %arg16[%c0_110, %c0_111] : memref<1x32xf32, #tpu.memory_space<vmem>>, vector<1x32xf32>
    %cst_112 = arith.constant dense<0.000000e+00> : vector<8xf32>
    %166 = vector.multi_reduction <add>, %163, %cst_112 [1] : vector<8x32xf32> to vector<8xf32>
    %167 = vector.shape_cast %166 : vector<8xf32> to vector<8x1xf32>
    %cst_113 = arith.constant 3.200000e+01 : f32
    %168 = vector.broadcast %cst_113 : f32 to vector<8x1xf32>
    %169 = arith.divf %167, %168 : vector<8x1xf32>
    %170 = vector.broadcast %169 : vector<8x1xf32> to vector<8x32xf32>
    %171 = arith.subf %163, %170 : vector<8x32xf32>
    %172 = arith.mulf %171, %171 : vector<8x32xf32>
    %cst_114 = arith.constant dense<0.000000e+00> : vector<8xf32>
    %173 = vector.multi_reduction <add>, %172, %cst_114 [1] : vector<8x32xf32> to vector<8xf32>
    %174 = vector.shape_cast %173 : vector<8xf32> to vector<8x1xf32>
    %cst_115 = arith.constant 3.200000e+01 : f32
    %175 = vector.broadcast %cst_115 : f32 to vector<8x1xf32>
    %176 = arith.divf %174, %175 : vector<8x1xf32>
    %177 = vector.broadcast %169 : vector<8x1xf32> to vector<8x32xf32>
    %178 = arith.subf %163, %177 : vector<8x32xf32>
    %cst_116 = arith.constant 9.99999974E-6 : f32
    %179 = vector.broadcast %cst_116 : f32 to vector<8x1xf32>
    %180 = arith.addf %176, %179 : vector<8x1xf32>
    %181 = math.rsqrt %180 : vector<8x1xf32>
    %182 = vector.broadcast %181 : vector<8x1xf32> to vector<8x32xf32>
    %183 = arith.mulf %178, %182 : vector<8x32xf32>
    %184 = vector.broadcast %164 : vector<1x32xf32> to vector<8x32xf32>
    %185 = arith.mulf %183, %184 : vector<8x32xf32>
    %186 = vector.broadcast %165 : vector<1x32xf32> to vector<8x32xf32>
    %187 = arith.addf %185, %186 : vector<8x32xf32>
    %c0_117 = arith.constant 0 : index
    %c0_118 = arith.constant 0 : index
    %c0_119 = arith.constant 0 : index
    %188 = vector.load %arg17[%c0_117, %c0_118, %c0_119] : memref<1x8x32xf32, #tpu.memory_space<vmem>>, vector<1x8x32xf32>
    %189 = vector.shape_cast %188 : vector<1x8x32xf32> to vector<8x32xf32>
    %190 = vector.shape_cast %187 : vector<8x32xf32> to vector<1x8x32xf32>
    tpu.vector_store %arg17[%c0_117, %c0_118, %c0_119], %190 {strides = array<i32>} : memref<1x8x32xf32, #tpu.memory_space<vmem>>, vector<1x8x32xf32>,
    return
  }
  func.func @transform_0(%arg0: i32, %arg1: i32) -> (i32, i32, i32) {
    %c0_i32 = arith.constant 0 : i32
    %c0_i32_0 = arith.constant 0 : i32
    return %arg0, %arg1, %c0_i32 : i32, i32, i32
  }
  func.func @transform_1(%arg0: i32, %arg1: i32) -> (i32, i32, i32) {
    %c0_i32 = arith.constant 0 : i32
    %c0_i32_0 = arith.constant 0 : i32
    %c0_i32_1 = arith.constant 0 : i32
    return %arg0, %c0_i32, %c0_i32_0 : i32, i32, i32
  }
  func.func @transform_2(%arg0: i32, %arg1: i32) -> (i32, i32, i32) {
    %c0_i32 = arith.constant 0 : i32
    %c0_i32_0 = arith.constant 0 : i32
    %c0_i32_1 = arith.constant 0 : i32
    %c0_i32_2 = arith.constant 0 : i32
    return %c0_i32, %c0_i32_0, %c0_i32_1 : i32, i32, i32
  }
  func.func @transform_3(%arg0: i32, %arg1: i32) -> (i32, i32, i32) {
    %c0_i32 = arith.constant 0 : i32
    %c0_i32_0 = arith.constant 0 : i32
    %c0_i32_1 = arith.constant 0 : i32
    %c0_i32_2 = arith.constant 0 : i32
    return %c0_i32, %c0_i32_0, %c0_i32_1 : i32, i32, i32
  }
  func.func @transform_4(%arg0: i32, %arg1: i32) -> (i32, i32, i32) {
    %c0_i32 = arith.constant 0 : i32
    %c0_i32_0 = arith.constant 0 : i32
    %c0_i32_1 = arith.constant 0 : i32
    %c0_i32_2 = arith.constant 0 : i32
    return %c0_i32, %c0_i32_0, %c0_i32_1 : i32, i32, i32
  }
  func.func @transform_5(%arg0: i32, %arg1: i32) -> (i32, i32, i32) {
    %c0_i32 = arith.constant 0 : i32
    %c0_i32_0 = arith.constant 0 : i32
    %c0_i32_1 = arith.constant 0 : i32
    %c0_i32_2 = arith.constant 0 : i32
    return %c0_i32, %c0_i32_0, %c0_i32_1 : i32, i32, i32
  }
  func.func @transform_6(%arg0: i32, %arg1: i32) -> (i32, i32) {
    %c0_i32 = arith.constant 0 : i32
    %c0_i32_0 = arith.constant 0 : i32
    %c0_i32_1 = arith.constant 0 : i32
    return %c0_i32, %c0_i32_0 : i32, i32
  }
  func.func @transform_7(%arg0: i32, %arg1: i32) -> (i32, i32) {
    %c0_i32 = arith.constant 0 : i32
    %c0_i32_0 = arith.constant 0 : i32
    %c0_i32_1 = arith.constant 0 : i32
    return %c0_i32, %c0_i32_0 : i32, i32
  }
  func.func @transform_8(%arg0: i32, %arg1: i32) -> (i32, i32) {
    %c0_i32 = arith.constant 0 : i32
    %c0_i32_0 = arith.constant 0 : i32
    %c0_i32_1 = arith.constant 0 : i32
    return %c0_i32, %c0_i32_0 : i32, i32
  }
  func.func @transform_9(%arg0: i32, %arg1: i32) -> (i32, i32) {
    %c0_i32 = arith.constant 0 : i32
    %c0_i32_0 = arith.constant 0 : i32
    %c0_i32_1 = arith.constant 0 : i32
    return %c0_i32, %c0_i32_0 : i32, i32
  }
  func.func @transform_10(%arg0: i32, %arg1: i32) -> (i32, i32) {
    %c0_i32 = arith.constant 0 : i32
    %c0_i32_0 = arith.constant 0 : i32
    %c0_i32_1 = arith.constant 0 : i32
    return %c0_i32, %c0_i32_0 : i32, i32
  }
  func.func @transform_11(%arg0: i32, %arg1: i32) -> (i32, i32) {
    %c0_i32 = arith.constant 0 : i32
    %c0_i32_0 = arith.constant 0 : i32
    %c0_i32_1 = arith.constant 0 : i32
    return %c0_i32, %c0_i32_0 : i32, i32
  }
  func.func @transform_12(%arg0: i32, %arg1: i32) -> (i32, i32) {
    %c0_i32 = arith.constant 0 : i32
    %c0_i32_0 = arith.constant 0 : i32
    %c0_i32_1 = arith.constant 0 : i32
    return %c0_i32, %c0_i32_0 : i32, i32
  }
  func.func @transform_13(%arg0: i32, %arg1: i32) -> (i32, i32) {
    %c0_i32 = arith.constant 0 : i32
    %c0_i32_0 = arith.constant 0 : i32
    %c0_i32_1 = arith.constant 0 : i32
    return %c0_i32, %c0_i32_0 : i32, i32
  }
  func.func @transform_14(%arg0: i32, %arg1: i32) -> (i32, i32) {
    %c0_i32 = arith.constant 0 : i32
    %c0_i32_0 = arith.constant 0 : i32
    %c0_i32_1 = arith.constant 0 : i32
    return %c0_i32, %c0_i32_0 : i32, i32
  }
  func.func @transform_15(%arg0: i32, %arg1: i32) -> (i32, i32, i32) {
    %c0_i32 = arith.constant 0 : i32
    %c0_i32_0 = arith.constant 0 : i32
    return %arg0, %arg1, %c0_i32 : i32, i32, i32
  }
}

</mosaic_0001>

<llo_original>
// kernel: tpu_custom_call.1
$region0: #{tpu_custom_call.1}
  #allocation0 [shape = 'u32[]', space=smem, size = 0x4, offset = 0x4, fixed_abs, tag = 'smem constant byte address 0x4 - core index']
  #allocation1 [shape = 'u32[144,128]{1,0:T(1,128)}', space=vmem, size = 0x12000, scoped, tag = 'internal scratch']
  %s0 = inlined_call_operand.hbm [shape: f32[2,8,32], index: 0, kind: input, shape index: {}]
  %s1 = inlined_call_operand.hbm [shape: f32[2,8,32], index: 1, kind: input, shape index: {}]
  %s2 = inlined_call_operand.hbm [shape: f32[4,32,16], index: 2, kind: input, shape index: {}]
  %s3 = inlined_call_operand.hbm [shape: f32[4,32,16], index: 3, kind: input, shape index: {}]
  %s4 = inlined_call_operand.hbm [shape: f32[4,32,16], index: 4, kind: input, shape index: {}]
  %s5 = inlined_call_operand.hbm [shape: f32[4,16,32], index: 5, kind: input, shape index: {}]
  %s6 = inlined_call_operand.hbm [shape: f32[1,32], index: 6, kind: input, shape index: {}]
  %s7 = inlined_call_operand.hbm [shape: f32[1,32], index: 7, kind: input, shape index: {}]
  %s8 = inlined_call_operand.hbm [shape: f32[1,32], index: 8, kind: input, shape index: {}]
  %s9 = inlined_call_operand.hbm [shape: f32[32,128], index: 9, kind: input, shape index: {}]
  %s10 = inlined_call_operand.hbm [shape: f32[1,128], index: 10, kind: input, shape index: {}]
  %s11 = inlined_call_operand.hbm [shape: f32[128,32], index: 11, kind: input, shape index: {}]
  %s12 = inlined_call_operand.hbm [shape: f32[1,32], index: 12, kind: input, shape index: {}]
  %s13 = inlined_call_operand.hbm [shape: f32[1,32], index: 13, kind: input, shape index: {}]
  %s14 = inlined_call_operand.hbm [shape: f32[1,32], index: 14, kind: input, shape index: {}]
  %s15 = inlined_call_operand.hbm [shape: f32[2,8,32], index: 15, kind: output, shape index: {}]
  %s16 = sld [smem:[#allocation0]]
  $region153: #{tpu_custom_call.1} parent=0
    _
  %s18 = ssub.s32 1, %s16
  %s19 = scalar_select 0, %s18, %s16
  $region1: #{tpu_custom_call.1} parent=0
    #allocation2 [shape = 'u8[8192]{0}', space=vmem, size = 0x2000, scoped, tag = 'input window, operand 0']
    #allocation3 [shape = 's32[2]{0}', space=sflag, size = 0x8, scoped, tag = 'scoped memory for tpu_custom_call.1']
    #allocation4 [shape = 's32[2]{0}', space=sflag, size = 0x8, scoped, tag = 'scoped memory for tpu_custom_call.1']
    #allocation5 [shape = 'u8[8192]{0}', space=vmem, size = 0x2000, scoped, tag = 'input window, operand 1']
    #allocation6 [shape = 's32[2]{0}', space=sflag, size = 0x8, scoped, tag = 'scoped memory for tpu_custom_call.1']
    #allocation7 [shape = 'u8[65536]{0}', space=vmem, size = 0x10000, scoped, tag = 'input window, operand 2, single buffered']
    #allocation8 [shape = 'u8[65536]{0}', space=vmem, size = 0x10000, scoped, tag = 'input window, operand 3, single buffered']
    #allocation9 [shape = 's32[1]{0}', space=sflag, size = 0x4, scoped, tag = 'scoped memory for tpu_custom_call.1']
    #allocation10 [shape = 'u8[65536]{0}', space=vmem, size = 0x10000, scoped, tag = 'input window, operand 4, single buffered']
    #allocation11 [shape = 'u8[32768]{0}', space=vmem, size = 0x8000, scoped, tag = 'input window, operand 5, single buffered']
    #allocation12 [shape = 's32[1]{0}', space=sflag, size = 0x4, scoped, tag = 'scoped memory for tpu_custom_call.1']
    #allocation13 [shape = 'u8[512]{0}', space=vmem, size = 0x400, scoped, tag = 'input window, operand 6, single buffered']
    #allocation14 [shape = 'u8[512]{0}', space=vmem, size = 0x400, scoped, tag = 'input window, operand 7, single buffered']
    #allocation15 [shape = 's32[1]{0}', space=sflag, size = 0x4, scoped, tag = 'scoped memory for tpu_custom_call.1']
    #allocation16 [shape = 'u8[512]{0}', space=vmem, size = 0x400, scoped, tag = 'input window, operand 8, single buffered']
    #allocation17 [shape = 'u8[16384]{0}', space=vmem, size = 0x4000, scoped, tag = 'input window, operand 9, single buffered']
    #allocation18 [shape = 's32[1]{0}', space=sflag, size = 0x4, scoped, tag = 'scoped memory for tpu_custom_call.1']
    #allocation19 [shape = 'u8[512]{0}', space=vmem, size = 0x400, scoped, tag = 'input window, operand 10, single buffered']
    #allocation20 [shape = 'u8[65536]{0}', space=vmem, size = 0x10000, scoped, tag = 'input window, operand 11, single buffered']
    #allocation21 [shape = 's32[1]{0}', space=sflag, size = 0x4, scoped, tag = 'scoped memory for tpu_custom_call.1']
    #allocation22 [shape = 'u8[512]{0}', space=vmem, size = 0x400, scoped, tag = 'input window, operand 12, single buffered']
    #allocation23 [shape = 'u8[512]{0}', space=vmem, size = 0x400, scoped, tag = 'input window, operand 13, single buffered']
    #allocation24 [shape = 's32[1]{0}', space=sflag, size = 0x4, scoped, tag = 'scoped memory for tpu_custom_call.1']
    #allocation25 [shape = 'u8[512]{0}', space=vmem, size = 0x400, scoped, tag = 'input window, operand 14, single buffered']
    #allocation26 [shape = 'u8[8192]{0}', space=vmem, size = 0x2000, scoped, tag = 'output window, operand 0']
    %20 = vsyncpa [#allocation3], 0
    %s21 = scalar_lea.sflag [#allocation3], 1
    %22 = vsyncpa %s21, 0
    %23 = vsyncpa [#allocation6], 0
    %s24 = scalar_lea.sflag [#allocation6], 1
    %25 = vsyncpa %s24, 0
    %26 = vsyncpa [#allocation9], 0
    %27 = vsyncpa [#allocation12], 0
    %28 = vsyncpa [#allocation15], 0
    %29 = vsyncpa [#allocation18], 0
    %30 = vsyncpa [#allocation21], 0
    %31 = vsyncpa [#allocation24], 0
    %32 = vsyncpa [#allocation4], 0
    %s33 = scalar_lea.sflag [#allocation4], 1
    %34 = vsyncpa %s33, 0
    loop: start=0, step=1, limit=4
    $region2: #{tpu_custom_call.1} parent=1 // loop_pre_header
      _
    $region3: #{tpu_custom_call.1} parent=1 // loop_header
      %s36 = sphi 0, %s40
      %p37 = scmp.ge.s32.totalorder %s36, 4
      %s43 = sphi 0, %s55
      %s44 = sphi 0, %s51
      %s45 = sphi 0, %s43
      %s46 = sphi 0, %s44
      %s47 = sphi 0, %s45
      %s48 = sphi 0, %s46
      %s60 = sphi 0, %s62
      %s63 = sphi 0, %s60
      %s64 = sphi 0, %s63
      %s80 = sphi 0, %s64
      %s86 = sphi 0, %s88
      %s89 = sphi 0, %s86
      %s90 = sphi 0, %s89
      %s106 = sphi 0, %s90
      %s110 = sphi 0, %s110
      %s112 = sphi 0, %s110
      %s113 = sphi 0, %s112
      %s127 = sphi 0, %s113
      %s131 = sphi 0, %s131
      %s133 = sphi 0, %s131
      %s134 = sphi 0, %s133
      %s148 = sphi 0, %s134
      %s152 = sphi 0, %s152
      %s154 = sphi 0, %s152
      %s155 = sphi 0, %s154
      %s169 = sphi 0, %s155
      %s173 = sphi 0, %s173
      %s175 = sphi 0, %s173
      %s176 = sphi 0, %s175
      %s190 = sphi 0, %s176
      %s194 = sphi 0, %s194
      %s196 = sphi 0, %s194
      %s197 = sphi 0, %s196
      %s211 = sphi 0, %s197
      %s215 = sphi 0, %s215
      %s217 = sphi 0, %s215
      %s218 = sphi 0, %s217
      %s232 = sphi 0, %s218
      %s236 = sphi 0, %s236
      %s238 = sphi 0, %s236
      %s239 = sphi 0, %s238
      %s253 = sphi 0, %s239
      %s257 = sphi 0, %s257
      %s259 = sphi 0, %s257
      %s260 = sphi 0, %s259
      %s274 = sphi 0, %s260
      %s278 = sphi 0, %s278
      %s280 = sphi 0, %s278
      %s281 = sphi 0, %s280
      %s295 = sphi 0, %s281
      %s299 = sphi 0, %s299
      %s301 = sphi 0, %s299
      %s302 = sphi 0, %s301
      %s316 = sphi 0, %s302
      %s320 = sphi 0, %s320
      %s322 = sphi 0, %s320
      %s323 = sphi 0, %s322
      %s337 = sphi 0, %s323
      %s341 = sphi 0, %s341
      %s343 = sphi 0, %s341
      %s344 = sphi 0, %s343
      %s358 = sphi 0, %s344
      %s362 = sphi 0, %s362
      %s364 = sphi 0, %s362
      %s365 = sphi 0, %s364
      %s379 = sphi 0, %s365
      %s387 = sphi 0, %s389
      %s390 = sphi 0, %s387
      %s391 = sphi 0, %s390
      %s407 = sphi 0, %s391
    $region4: #{tpu_custom_call.1} parent=1 // loop_header_branch
      %39 = sbr.rel (%p37) target = $region8
    $region5: #{tpu_custom_call.1} parent=1 // loop_body
      %s41 = ssub.s32 %s36, 1
      %s42 = ssub.s32 %s36, 2
      %s49 = sadd.s32 1, %s44
      %p50 = scmp.ge.s32.totalorder %s49, 1
      %s51 = scalar_select %p50, 0, %s49
      %s52 = sadd.s32 1, %s43
      %s53 = scalar_select %p50, %s52, %s43
      %p54 = scmp.ge.s32.totalorder %s53, 2
      %s55 = scalar_select %p54, 0, %s53
      %s56 = ssub.s32 %s43, %s55
      %s57 = ssub.s32 %s44, %s51
      %s58 = sor.u32 %s56, %s57
      %p59 = scmp.eq.s32.totalorder %s58, 0
      %s61 = sadd.s32 %s60, 1
      %s62 = scalar_select %p59, %s60, %s61
      %p65 = pneg %p59
      %p66 = scmp.eq.s32.totalorder %s36, 1
      %p67 = por %p65, %p66
      %p68 = scmp.ne.s32.totalorder %s60, %s63
      %p69 = scmp.eq.s32.totalorder %s36, 0
      %p70 = por %p68, %p69
      %p71 = scmp.ne.s32.totalorder %s60, %s63
      %p72 = scmp.eq.s32.totalorder %s41, 1
      %p73 = por %p71, %p72
      %p74 = scmp.ne.s32.totalorder %s63, %s64
      %p75 = scmp.eq.s32.totalorder %s41, 0
      %p76 = por %p74, %p75
      %p77 = scmp.ne.s32.totalorder %s63, %s64
      %p78 = scmp.eq.s32.totalorder %s42, 1
      %p79 = por %p77, %p78
      %p81 = scmp.ne.s32.totalorder %s64, %s80
      %p82 = scmp.eq.s32.totalorder %s42, 0
      %p83 = por %p81, %p82
      %s84 = ssub.s32 %s43, %s55
      %p85 = scmp.eq.s32.totalorder %s84, 0
      %s87 = sadd.s32 %s86, 1
      %s88 = scalar_select %p85, %s86, %s87
      %p91 = pneg %p85
      %p92 = scmp.eq.s32.totalorder %s36, 1
      %p93 = por %p91, %p92
      %p94 = scmp.ne.s32.totalorder %s86, %s89
      %p95 = scmp.eq.s32.totalorder %s36, 0
      %p96 = por %p94, %p95
      %p97 = scmp.ne.s32.totalorder %s86, %s89
      %p98 = scmp.eq.s32.totalorder %s41, 1
      %p99 = por %p97, %p98
      %p100 = scmp.ne.s32.totalorder %s89, %s90
      %p101 = scmp.eq.s32.totalorder %s41, 0
      %p102 = por %p100, %p101
      %p103 = scmp.ne.s32.totalorder %s89, %s90
      %p104 = scmp.eq.s32.totalorder %s42, 1
      %p105 = por %p103, %p104
      %p107 = scmp.ne.s32.totalorder %s90, %s106
      %p108 = scmp.eq.s32.totalorder %s42, 0
      %p109 = por %p107, %p108
      %s111 = sadd.s32 %s110, 1
      %p114 = scmp.eq.s32.totalorder %s36, 1
      %p115 = scmp.ne.s32.totalorder %s110, %s112
      %p116 = scmp.eq.s32.totalorder %s36, 0
      %p117 = por %p115, %p116
      %p118 = scmp.ne.s32.totalorder %s110, %s112
      %p119 = scmp.eq.s32.totalorder %s41, 1
      %p120 = por %p118, %p119
      %p121 = scmp.ne.s32.totalorder %s112, %s113
      %p122 = scmp.eq.s32.totalorder %s41, 0
      %p123 = por %p121, %p122
      %p124 = scmp.ne.s32.totalorder %s112, %s113
      %p125 = scmp.eq.s32.totalorder %s42, 1
      %p126 = por %p124, %p125
      %p128 = scmp.ne.s32.totalorder %s113, %s127
      %p129 = scmp.eq.s32.totalorder %s42, 0
      %p130 = por %p128, %p129
      %s132 = sadd.s32 %s131, 1
      %p135 = scmp.eq.s32.totalorder %s36, 1
      %p136 = scmp.ne.s32.totalorder %s131, %s133
      %p137 = scmp.eq.s32.totalorder %s36, 0
      %p138 = por %p136, %p137
      %p139 = scmp.ne.s32.totalorder %s131, %s133
      %p140 = scmp.eq.s32.totalorder %s41, 1
      %p141 = por %p139, %p140
      %p142 = scmp.ne.s32.totalorder %s133, %s134
      %p143 = scmp.eq.s32.totalorder %s41, 0
      %p144 = por %p142, %p143
      %p145 = scmp.ne.s32.totalorder %s133, %s134
      %p146 = scmp.eq.s32.totalorder %s42, 1
      %p147 = por %p145, %p146
      %p149 = scmp.ne.s32.totalorder %s134, %s148
      %p150 = scmp.eq.s32.totalorder %s42, 0
      %p151 = por %p149, %p150
      %s153 = sadd.s32 %s152, 1
      %p156 = scmp.eq.s32.totalorder %s36, 1
      %p157 = scmp.ne.s32.totalorder %s152, %s154
      %p158 = scmp.eq.s32.totalorder %s36, 0
      %p159 = por %p157, %p158
      %p160 = scmp.ne.s32.totalorder %s152, %s154
      %p161 = scmp.eq.s32.totalorder %s41, 1
      %p162 = por %p160, %p161
      %p163 = scmp.ne.s32.totalorder %s154, %s155
      %p164 = scmp.eq.s32.totalorder %s41, 0
      %p165 = por %p163, %p164
      %p166 = scmp.ne.s32.totalorder %s154, %s155
      %p167 = scmp.eq.s32.totalorder %s42, 1
      %p168 = por %p166, %p167
      %p170 = scmp.ne.s32.totalorder %s155, %s169
      %p171 = scmp.eq.s32.totalorder %s42, 0
      %p172 = por %p170, %p171
      %s174 = sadd.s32 %s173, 1
      %p177 = scmp.eq.s32.totalorder %s36, 1
      %p178 = scmp.ne.s32.totalorder %s173, %s175
      %p179 = scmp.eq.s32.totalorder %s36, 0
      %p180 = por %p178, %p179
      %p181 = scmp.ne.s32.totalorder %s173, %s175
      %p182 = scmp.eq.s32.totalorder %s41, 1
      %p183 = por %p181, %p182
      %p184 = scmp.ne.s32.totalorder %s175, %s176
      %p185 = scmp.eq.s32.totalorder %s41, 0
      %p186 = por %p184, %p185
      %p187 = scmp.ne.s32.totalorder %s175, %s176
      %p188 = scmp.eq.s32.totalorder %s42, 1
      %p189 = por %p187, %p188
      %p191 = scmp.ne.s32.totalorder %s176, %s190
      %p192 = scmp.eq.s32.totalorder %s42, 0
      %p193 = por %p191, %p192
      %s195 = sadd.s32 %s194, 1
      %p198 = scmp.eq.s32.totalorder %s36, 1
      %p199 = scmp.ne.s32.totalorder %s194, %s196
      %p200 = scmp.eq.s32.totalorder %s36, 0
      %p201 = por %p199, %p200
      %p202 = scmp.ne.s32.totalorder %s194, %s196
      %p203 = scmp.eq.s32.totalorder %s41, 1
      %p204 = por %p202, %p203
      %p205 = scmp.ne.s32.totalorder %s196, %s197
      %p206 = scmp.eq.s32.totalorder %s41, 0
      %p207 = por %p205, %p206
      %p208 = scmp.ne.s32.totalorder %s196, %s197
      %p209 = scmp.eq.s32.totalorder %s42, 1
      %p210 = por %p208, %p209
      %p212 = scmp.ne.s32.totalorder %s197, %s211
      %p213 = scmp.eq.s32.totalorder %s42, 0
      %p214 = por %p212, %p213
      %s216 = sadd.s32 %s215, 1
      %p219 = scmp.eq.s32.totalorder %s36, 1
      %p220 = scmp.ne.s32.totalorder %s215, %s217
      %p221 = scmp.eq.s32.totalorder %s36, 0
      %p222 = por %p220, %p221
      %p223 = scmp.ne.s32.totalorder %s215, %s217
      %p224 = scmp.eq.s32.totalorder %s41, 1
      %p225 = por %p223, %p224
      %p226 = scmp.ne.s32.totalorder %s217, %s218
      %p227 = scmp.eq.s32.totalorder %s41, 0
      %p228 = por %p226, %p227
      %p229 = scmp.ne.s32.totalorder %s217, %s218
      %p230 = scmp.eq.s32.totalorder %s42, 1
      %p231 = por %p229, %p230
      %p233 = scmp.ne.s32.totalorder %s218, %s232
      %p234 = scmp.eq.s32.totalorder %s42, 0
      %p235 = por %p233, %p234
      %s237 = sadd.s32 %s236, 1
      %p240 = scmp.eq.s32.totalorder %s36, 1
      %p241 = scmp.ne.s32.totalorder %s236, %s238
      %p242 = scmp.eq.s32.totalorder %s36, 0
      %p243 = por %p241, %p242
      %p244 = scmp.ne.s32.totalorder %s236, %s238
      %p245 = scmp.eq.s32.totalorder %s41, 1
      %p246 = por %p244, %p245
      %p247 = scmp.ne.s32.totalorder %s238, %s239
      %p248 = scmp.eq.s32.totalorder %s41, 0
      %p249 = por %p247, %p248
      %p250 = scmp.ne.s32.totalorder %s238, %s239
      %p251 = scmp.eq.s32.totalorder %s42, 1
      %p252 = por %p250, %p251
      %p254 = scmp.ne.s32.totalorder %s239, %s253
      %p255 = scmp.eq.s32.totalorder %s42, 0
      %p256 = por %p254, %p255
      %s258 = sadd.s32 %s257, 1
      %p261 = scmp.eq.s32.totalorder %s36, 1
      %p262 = scmp.ne.s32.totalorder %s257, %s259
      %p263 = scmp.eq.s32.totalorder %s36, 0
      %p264 = por %p262, %p263
      %p265 = scmp.ne.s32.totalorder %s257, %s259
      %p266 = scmp.eq.s32.totalorder %s41, 1
      %p267 = por %p265, %p266
      %p268 = scmp.ne.s32.totalorder %s259, %s260
      %p269 = scmp.eq.s32.totalorder %s41, 0
      %p270 = por %p268, %p269
      %p271 = scmp.ne.s32.totalorder %s259, %s260
      %p272 = scmp.eq.s32.totalorder %s42, 1
      %p273 = por %p271, %p272
      %p275 = scmp.ne.s32.totalorder %s260, %s274
      %p276 = scmp.eq.s32.totalorder %s42, 0
      %p277 = por %p275, %p276
      %s279 = sadd.s32 %s278, 1
      %p282 = scmp.eq.s32.totalorder %s36, 1
      %p283 = scmp.ne.s32.totalorder %s278, %s280
      %p284 = scmp.eq.s32.totalorder %s36, 0
      %p285 = por %p283, %p284
      %p286 = scmp.ne.s32.totalorder %s278, %s280
      %p287 = scmp.eq.s32.totalorder %s41, 1
      %p288 = por %p286, %p287
      %p289 = scmp.ne.s32.totalorder %s280, %s281
      %p290 = scmp.eq.s32.totalorder %s41, 0
      %p291 = por %p289, %p290
      %p292 = scmp.ne.s32.totalorder %s280, %s281
      %p293 = scmp.eq.s32.totalorder %s42, 1
      %p294 = por %p292, %p293
      %p296 = scmp.ne.s32.totalorder %s281, %s295
      %p297 = scmp.eq.s32.totalorder %s42, 0
      %p298 = por %p296, %p297
      %s300 = sadd.s32 %s299, 1
      %p303 = scmp.eq.s32.totalorder %s36, 1
      %p304 = scmp.ne.s32.totalorder %s299, %s301
      %p305 = scmp.eq.s32.totalorder %s36, 0
      %p306 = por %p304, %p305
      %p307 = scmp.ne.s32.totalorder %s299, %s301
      %p308 = scmp.eq.s32.totalorder %s41, 1
      %p309 = por %p307, %p308
      %p310 = scmp.ne.s32.totalorder %s301, %s302
      %p311 = scmp.eq.s32.totalorder %s41, 0
      %p312 = por %p310, %p311
      %p313 = scmp.ne.s32.totalorder %s301, %s302
      %p314 = scmp.eq.s32.totalorder %s42, 1
      %p315 = por %p313, %p314
      %p317 = scmp.ne.s32.totalorder %s302, %s316
      %p318 = scmp.eq.s32.totalorder %s42, 0
      %p319 = por %p317, %p318
      %s321 = sadd.s32 %s320, 1
      %p324 = scmp.eq.s32.totalorder %s36, 1
      %p325 = scmp.ne.s32.totalorder %s320, %s322
      %p326 = scmp.eq.s32.totalorder %s36, 0
      %p327 = por %p325, %p326
      %p328 = scmp.ne.s32.totalorder %s320, %s322
      %p329 = scmp.eq.s32.totalorder %s41, 1
      %p330 = por %p328, %p329
      %p331 = scmp.ne.s32.totalorder %s322, %s323
      %p332 = scmp.eq.s32.totalorder %s41, 0
      %p333 = por %p331, %p332
      %p334 = scmp.ne.s32.totalorder %s322, %s323
      %p335 = scmp.eq.s32.totalorder %s42, 1
      %p336 = por %p334, %p335
      %p338 = scmp.ne.s32.totalorder %s323, %s337
      %p339 = scmp.eq.s32.totalorder %s42, 0
      %p340 = por %p338, %p339
      %s342 = sadd.s32 %s341, 1
      %p345 = scmp.eq.s32.totalorder %s36, 1
      %p346 = scmp.ne.s32.totalorder %s341, %s343
      %p347 = scmp.eq.s32.totalorder %s36, 0
      %p348 = por %p346, %p347
      %p349 = scmp.ne.s32.totalorder %s341, %s343
      %p350 = scmp.eq.s32.totalorder %s41, 1
      %p351 = por %p349, %p350
      %p352 = scmp.ne.s32.totalorder %s343, %s344
      %p353 = scmp.eq.s32.totalorder %s41, 0
      %p354 = por %p352, %p353
      %p355 = scmp.ne.s32.totalorder %s343, %s344
      %p356 = scmp.eq.s32.totalorder %s42, 1
      %p357 = por %p355, %p356
      %p359 = scmp.ne.s32.totalorder %s344, %s358
      %p360 = scmp.eq.s32.totalorder %s42, 0
      %p361 = por %p359, %p360
      %s363 = sadd.s32 %s362, 1
      %p366 = scmp.eq.s32.totalorder %s36, 1
      %p367 = scmp.ne.s32.totalorder %s362, %s364
      %p368 = scmp.eq.s32.totalorder %s36, 0
      %p369 = por %p367, %p368
      %p370 = scmp.ne.s32.totalorder %s362, %s364
      %p371 = scmp.eq.s32.totalorder %s41, 1
      %p372 = por %p370, %p371
      %p373 = scmp.ne.s32.totalorder %s364, %s365
      %p374 = scmp.eq.s32.totalorder %s41, 0
      %p375 = por %p373, %p374
      %p376 = scmp.ne.s32.totalorder %s364, %s365
      %p377 = scmp.eq.s32.totalorder %s42, 1
      %p378 = por %p376, %p377
      %p380 = scmp.ne.s32.totalorder %s365, %s379
      %p381 = scmp.eq.s32.totalorder %s42, 0
      %p382 = por %p380, %p381
      %s383 = ssub.s32 %s43, %s55
      %s384 = ssub.s32 %s44, %s51
      %s385 = sor.u32 %s383, %s384
      %p386 = scmp.eq.s32.totalorder %s385, 0
      %s388 = sadd.s32 %s387, 1
      %s389 = scalar_select %p386, %s387, %s388
      %p392 = pneg %p386
      %p393 = scmp.eq.s32.totalorder %s36, 1
      %p394 = por %p392, %p393
      %p395 = scmp.ne.s32.totalorder %s387, %s390
      %p396 = scmp.eq.s32.totalorder %s36, 0
      %p397 = por %p395, %p396
      %p398 = scmp.ne.s32.totalorder %s387, %s390
      %p399 = scmp.eq.s32.totalorder %s41, 1
      %p400 = por %p398, %p399
      %p401 = scmp.ne.s32.totalorder %s390, %s391
      %p402 = scmp.eq.s32.totalorder %s41, 0
      %p403 = por %p401, %p402
      %p404 = scmp.ne.s32.totalorder %s390, %s391
      %p405 = scmp.eq.s32.totalorder %s42, 1
      %p406 = por %p404, %p405
      %p408 = scmp.ne.s32.totalorder %s391, %s407
      %p409 = scmp.eq.s32.totalorder %s42, 0
      %p410 = por %p408, %p409
      %p411 = scmp.le.s32.totalorder 1, %s36
      %p412 = scmp.lt.s32.totalorder %s36, 3
      %p413 = pnand %p411, %p412
      %p414 = pneg %p413
      // Predicated region
      $region9: #{tpu_custom_call.1} parent=5 // pred_check
        _
      $region10: #{tpu_custom_call.1} parent=5 // pred_check_branch
        %416 = sbr.rel (%p413) target = $region12
      $region11: #{tpu_custom_call.1} parent=5 // pred_region
        %s417 = ssub.s32 %s36, 1
        // Predicated region
        $region13: #{tpu_custom_call.1} parent=11 // pred_check
          %p418 = pneg %p123
        $region14: #{tpu_custom_call.1} parent=11 // pred_check_branch
          %420 = sbr.rel (%p418) target = $region16
        $region15: #{tpu_custom_call.1} parent=11 // pred_region
          %s422 = ssub.s32 2048, 2048
          %423 = vsyncadd [#allocation6], %s422
          %s424 = sshll.u32 [#allocation7], 4
          %s425 = int_to_ptr.vmem [resolvable:$true] %s424
          %430 = dma.hbm_to_vmem [thread:$0]  %s2, 2048, %s425, [#allocation6], 128, 128, 8
        $region16: #{tpu_custom_call.1} parent=11 // pred_fallthru
          _
        // Predicated region
        $region17: #{tpu_custom_call.1} parent=11 // pred_check
          %p431 = pneg %p144
        $region18: #{tpu_custom_call.1} parent=11 // pred_check_branch
          %433 = sbr.rel (%p431) target = $region20
        $region19: #{tpu_custom_call.1} parent=11 // pred_region
          %s435 = ssub.s32 2048, 2048
          %436 = vsyncadd [#allocation9], %s435
          %s437 = sshll.u32 [#allocation8], 4
          %s438 = int_to_ptr.vmem [resolvable:$true] %s437
          %443 = dma.hbm_to_vmem [thread:$0]  %s3, 2048, %s438, [#allocation9], 128, 128, 8
        $region20: #{tpu_custom_call.1} parent=11 // pred_fallthru
          _
        // Predicated region
        $region21: #{tpu_custom_call.1} parent=11 // pred_check
          %p444 = pneg %p165
        $region22: #{tpu_custom_call.1} parent=11 // pred_check_branch
          %446 = sbr.rel (%p444) target = $region24
        $region23: #{tpu_custom_call.1} parent=11 // pred_region
          %s448 = ssub.s32 2048, 2048
          %449 = vsyncadd [#allocation9], %s448
          %s450 = sshll.u32 [#allocation10], 4
          %s451 = int_to_ptr.vmem [resolvable:$true] %s450
          %456 = dma.hbm_to_vmem [thread:$0]  %s4, 2048, %s451, [#allocation9], 128, 128, 8
        $region24: #{tpu_custom_call.1} parent=11 // pred_fallthru
          _
        // Predicated region
        $region25: #{tpu_custom_call.1} parent=11 // pred_check
          %p457 = pneg %p186
        $region26: #{tpu_custom_call.1} parent=11 // pred_check_branch
          %459 = sbr.rel (%p457) target = $region28
        $region27: #{tpu_custom_call.1} parent=11 // pred_region
          %s461 = ssub.s32 1024, 1024
          %462 = vsyncadd [#allocation12], %s461
          %s463 = sshll.u32 [#allocation11], 4
          %s464 = int_to_ptr.vmem [resolvable:$true] %s463
          %469 = dma.hbm_to_vmem [thread:$0]  %s5, 1024, %s464, [#allocation12], 128, 128, 8
        $region28: #{tpu_custom_call.1} parent=11 // pred_fallthru
          _
        // Predicated region
        $region29: #{tpu_custom_call.1} parent=11 // pred_check
          %p470 = pneg %p207
        $region30: #{tpu_custom_call.1} parent=11 // pred_check_branch
          %472 = sbr.rel (%p470) target = $region32
        $region31: #{tpu_custom_call.1} parent=11 // pred_region
          %s474 = ssub.s32 16, 16
          %475 = vsyncadd [#allocation12], %s474
          %s477 = sshll.u32 [#allocation13], 4
          %s478 = int_to_ptr.vmem [resolvable:$true] %s477
          %480 = dma.hbm_to_vmem [thread:$0]  %s6, 16, %s478, [#allocation12]
        $region32: #{tpu_custom_call.1} parent=11 // pred_fallthru
          _
        // Predicated region
        $region33: #{tpu_custom_call.1} parent=11 // pred_check
          %p481 = pneg %p228
        $region34: #{tpu_custom_call.1} parent=11 // pred_check_branch
          %483 = sbr.rel (%p481) target = $region36
        $region35: #{tpu_custom_call.1} parent=11 // pred_region
          %s485 = ssub.s32 16, 16
          %486 = vsyncadd [#allocation15], %s485
          %s488 = sshll.u32 [#allocation14], 4
          %s489 = int_to_ptr.vmem [resolvable:$true] %s488
          %491 = dma.hbm_to_vmem [thread:$0]  %s7, 16, %s489, [#allocation15]
        $region36: #{tpu_custom_call.1} parent=11 // pred_fallthru
          _
        // Predicated region
        $region37: #{tpu_custom_call.1} parent=11 // pred_check
          %p492 = pneg %p249
        $region38: #{tpu_custom_call.1} parent=11 // pred_check_branch
          %494 = sbr.rel (%p492) target = $region40
        $region39: #{tpu_custom_call.1} parent=11 // pred_region
          %s496 = ssub.s32 16, 16
          %497 = vsyncadd [#allocation15], %s496
          %s499 = sshll.u32 [#allocation16], 4
          %s500 = int_to_ptr.vmem [resolvable:$true] %s499
          %502 = dma.hbm_to_vmem [thread:$0]  %s8, 16, %s500, [#allocation15]
        $region40: #{tpu_custom_call.1} parent=11 // pred_fallthru
          _
        // Predicated region
        $region41: #{tpu_custom_call.1} parent=11 // pred_check
          %p503 = pneg %p270
        $region42: #{tpu_custom_call.1} parent=11 // pred_check_branch
          %505 = sbr.rel (%p503) target = $region44
        $region43: #{tpu_custom_call.1} parent=11 // pred_region
          %s507 = ssub.s32 512, 512
          %508 = vsyncadd [#allocation18], %s507
          %s509 = sshll.u32 [#allocation17], 4
          %s510 = int_to_ptr.vmem [resolvable:$true] %s509
          %515 = dma.hbm_to_vmem [thread:$0]  %s9, 512, %s510, [#allocation18], 128, 128, 8
        $region44: #{tpu_custom_call.1} parent=11 // pred_fallthru
          _
        // Predicated region
        $region45: #{tpu_custom_call.1} parent=11 // pred_check
          %p516 = pneg %p291
        $region46: #{tpu_custom_call.1} parent=11 // pred_check_branch
          %518 = sbr.rel (%p516) target = $region48
        $region47: #{tpu_custom_call.1} parent=11 // pred_region
          %s520 = ssub.s32 16, 16
          %521 = vsyncadd [#allocation18], %s520
          %s523 = sshll.u32 [#allocation19], 4
          %s524 = int_to_ptr.vmem [resolvable:$true] %s523
          %526 = dma.hbm_to_vmem [thread:$0]  %s10, 16, %s524, [#allocation18]
        $region48: #{tpu_custom_call.1} parent=11 // pred_fallthru
          _
        // Predicated region
        $region49: #{tpu_custom_call.1} parent=11 // pred_check
          %p527 = pneg %p312
        $region50: #{tpu_custom_call.1} parent=11 // pred_check_branch
          %529 = sbr.rel (%p527) target = $region52
        $region51: #{tpu_custom_call.1} parent=11 // pred_region
          %s531 = ssub.s32 2048, 2048
          %532 = vsyncadd [#allocation21], %s531
          %s533 = sshll.u32 [#allocation20], 4
          %s534 = int_to_ptr.vmem [resolvable:$true] %s533
          %539 = dma.hbm_to_vmem [thread:$0]  %s11, 2048, %s534, [#allocation21], 128, 128, 8
        $region52: #{tpu_custom_call.1} parent=11 // pred_fallthru
          _
        // Predicated region
        $region53: #{tpu_custom_call.1} parent=11 // pred_check
          %p540 = pneg %p333
        $region54: #{tpu_custom_call.1} parent=11 // pred_check_branch
          %542 = sbr.rel (%p540) target = $region56
        $region55: #{tpu_custom_call.1} parent=11 // pred_region
          %s544 = ssub.s32 16, 16
          %545 = vsyncadd [#allocation21], %s544
          %s547 = sshll.u32 [#allocation22], 4
          %s548 = int_to_ptr.vmem [resolvable:$true] %s547
          %550 = dma.hbm_to_vmem [thread:$0]  %s12, 16, %s548, [#allocation21]
        $region56: #{tpu_custom_call.1} parent=11 // pred_fallthru
          _
        // Predicated region
        $region57: #{tpu_custom_call.1} parent=11 // pred_check
          %p551 = pneg %p354
        $region58: #{tpu_custom_call.1} parent=11 // pred_check_branch
          %553 = sbr.rel (%p551) target = $region60
        $region59: #{tpu_custom_call.1} parent=11 // pred_region
          %s555 = ssub.s32 16, 16
          %556 = vsyncadd [#allocation24], %s555
          %s558 = sshll.u32 [#allocation23], 4
          %s559 = int_to_ptr.vmem [resolvable:$true] %s558
          %561 = dma.hbm_to_vmem [thread:$0]  %s13, 16, %s559, [#allocation24]
        $region60: #{tpu_custom_call.1} parent=11 // pred_fallthru
          _
        // Predicated region
        $region61: #{tpu_custom_call.1} parent=11 // pred_check
          %p562 = pneg %p375
        $region62: #{tpu_custom_call.1} parent=11 // pred_check_branch
          %564 = sbr.rel (%p562) target = $region64
        $region63: #{tpu_custom_call.1} parent=11 // pred_region
          %s566 = ssub.s32 16, 16
          %567 = vsyncadd [#allocation24], %s566
          %s569 = sshll.u32 [#allocation25], 4
          %s570 = int_to_ptr.vmem [resolvable:$true] %s569
          %572 = dma.hbm_to_vmem [thread:$0]  %s14, 16, %s570, [#allocation24]
        $region64: #{tpu_custom_call.1} parent=11 // pred_fallthru
          _
      $region12: #{tpu_custom_call.1} parent=5 // pred_fallthru
        _
      %p573 = scmp.lt.s32.totalorder %s36, 2
      // Predicated region
      $region65: #{tpu_custom_call.1} parent=5 // pred_check
        %p574 = pneg %p573
      $region66: #{tpu_custom_call.1} parent=5 // pred_check_branch
        %576 = sbr.rel (%p574) target = $region68
      $region67: #{tpu_custom_call.1} parent=5 // pred_region
        // Predicated region
        $region69: #{tpu_custom_call.1} parent=67 // pred_check
          %p577 = pneg %p70
        $region70: #{tpu_custom_call.1} parent=67 // pred_check_branch
          %579 = sbr.rel (%p577) target = $region72
        $region71: #{tpu_custom_call.1} parent=67 // pred_region
          %s580 = sand.u32 %s60, 1
          %s581 = scalar_lea.sflag [#allocation3], %s580
          %s582 = sand.u32 %s60, 1
          %s583 = smul.addr %s582, 8
          %s584 = scalar_lea.vmem [#allocation2], %s583
          %s586 = ssub.s32 128, 128
          %587 = vsyncadd %s581, %s586
          %s588 = sadd.s32 %s44, %s43
          %s589 = smul.addr %s588, 128
          %s590 = scalar_lea.hbm %s0, %s589
          %s592 = sshll.u32 %s584, 4
          %s593 = int_to_ptr.vmem [resolvable:$true] %s592
          %595 = dma.hbm_to_vmem [thread:$0]  %s590, 128, %s593, %s581
        $region72: #{tpu_custom_call.1} parent=67 // pred_fallthru
          _
        // Predicated region
        $region73: #{tpu_custom_call.1} parent=67 // pred_check
          %p596 = pneg %p96
        $region74: #{tpu_custom_call.1} parent=67 // pred_check_branch
          %598 = sbr.rel (%p596) target = $region76
        $region75: #{tpu_custom_call.1} parent=67 // pred_region
          %s599 = sand.u32 %s36, 1
          %s600 = scalar_lea.sflag [#allocation6], %s599
          %s601 = sand.u32 %s86, 1
          %s602 = smul.addr %s601, 8
          %s603 = scalar_lea.vmem [#allocation5], %s602
          %s605 = ssub.s32 128, 128
          %606 = vsyncadd %s600, %s605
          %s607 = smul.addr %s43, 128
          %s608 = scalar_lea.hbm %s1, %s607
          %s610 = sshll.u32 %s603, 4
          %s611 = int_to_ptr.vmem [resolvable:$true] %s610
          %613 = dma.hbm_to_vmem [thread:$0]  %s608, 128, %s611, %s600
        $region76: #{tpu_custom_call.1} parent=67 // pred_fallthru
          _
      $region68: #{tpu_custom_call.1} parent=5 // pred_fallthru
        _
      %p614 = scmp.le.s32.totalorder 1, %s36
      %p615 = scmp.lt.s32.totalorder %s36, 3
      %p616 = pnand %p614, %p615
      %p617 = pneg %p616
      // Predicated region
      $region77: #{tpu_custom_call.1} parent=5 // pred_check
        _
      $region78: #{tpu_custom_call.1} parent=5 // pred_check_branch
        %619 = sbr.rel (%p616) target = $region80
      $region79: #{tpu_custom_call.1} parent=5 // pred_region
        %s620 = ssub.s32 %s36, 1
        %s621 = sand.u32 %s63, 1
        %s622 = scalar_lea.sflag [#allocation3], %s621
        %s623 = sand.u32 %s63, 1
        %s624 = smul.addr %s623, 8
        %s625 = scalar_lea.vmem [#allocation2], %s624
        // Predicated region
        $region81: #{tpu_custom_call.1} parent=79 // pred_check
          %p626 = pneg %p76
        $region82: #{tpu_custom_call.1} parent=79 // pred_check_branch
          %628 = sbr.rel (%p626) target = $region84
        $region83: #{tpu_custom_call.1} parent=79 // pred_region
          %629 = dma.done %s622, 128
        $region84: #{tpu_custom_call.1} parent=79 // pred_fallthru
          _
        %s630 = sand.u32 %s41, 1
        %s631 = scalar_lea.sflag [#allocation6], %s630
        %s632 = sand.u32 %s89, 1
        %s633 = smul.addr %s632, 8
        %s634 = scalar_lea.vmem [#allocation5], %s633
        // Predicated region
        $region85: #{tpu_custom_call.1} parent=79 // pred_check
          %p635 = pneg %p102
        $region86: #{tpu_custom_call.1} parent=79 // pred_check_branch
          %637 = sbr.rel (%p635) target = $region88
        $region87: #{tpu_custom_call.1} parent=79 // pred_region
          %638 = dma.done %s631, 128
        $region88: #{tpu_custom_call.1} parent=79 // pred_fallthru
          _
        // Predicated region
        $region89: #{tpu_custom_call.1} parent=79 // pred_check
          %p639 = pneg %p123
        $region90: #{tpu_custom_call.1} parent=79 // pred_check_branch
          %641 = sbr.rel (%p639) target = $region92
        $region91: #{tpu_custom_call.1} parent=79 // pred_region
          %642 = dma.done [#allocation6], 2048
        $region92: #{tpu_custom_call.1} parent=79 // pred_fallthru
          _
        // Predicated region
        $region93: #{tpu_custom_call.1} parent=79 // pred_check
          %p643 = pneg %p144
        $region94: #{tpu_custom_call.1} parent=79 // pred_check_branch
          %645 = sbr.rel (%p643) target = $region96
        $region95: #{tpu_custom_call.1} parent=79 // pred_region
          %646 = dma.done [#allocation9], 2048
        $region96: #{tpu_custom_call.1} parent=79 // pred_fallthru
          _
        // Predicated region
        $region97: #{tpu_custom_call.1} parent=79 // pred_check
          %p647 = pneg %p165
        $region98: #{tpu_custom_call.1} parent=79 // pred_check_branch
          %649 = sbr.rel (%p647) target = $region100
        $region99: #{tpu_custom_call.1} parent=79 // pred_region
          %650 = dma.done [#allocation9], 2048
        $region100: #{tpu_custom_call.1} parent=79 // pred_fallthru
          _
        // Predicated region
        $region101: #{tpu_custom_call.1} parent=79 // pred_check
          %p651 = pneg %p186
        $region102: #{tpu_custom_call.1} parent=79 // pred_check_branch
          %653 = sbr.rel (%p651) target = $region104
        $region103: #{tpu_custom_call.1} parent=79 // pred_region
          %654 = dma.done [#allocation12], 1024
        $region104: #{tpu_custom_call.1} parent=79 // pred_fallthru
          _
        // Predicated region
        $region105: #{tpu_custom_call.1} parent=79 // pred_check
          %p655 = pneg %p207
        $region106: #{tpu_custom_call.1} parent=79 // pred_check_branch
          %657 = sbr.rel (%p655) target = $region108
        $region107: #{tpu_custom_call.1} parent=79 // pred_region
          %658 = dma.done [#allocation12], 16
        $region108: #{tpu_custom_call.1} parent=79 // pred_fallthru
          _
        // Predicated region
        $region109: #{tpu_custom_call.1} parent=79 // pred_check
          %p659 = pneg %p228
        $region110: #{tpu_custom_call.1} parent=79 // pred_check_branch
          %661 = sbr.rel (%p659) target = $region112
        $region111: #{tpu_custom_call.1} parent=79 // pred_region
          %662 = dma.done [#allocation15], 16
        $region112: #{tpu_custom_call.1} parent=79 // pred_fallthru
          _
        // Predicated region
        $region113: #{tpu_custom_call.1} parent=79 // pred_check
          %p663 = pneg %p249
        $region114: #{tpu_custom_call.1} parent=79 // pred_check_branch
          %665 = sbr.rel (%p663) target = $region116
        $region115: #{tpu_custom_call.1} parent=79 // pred_region
          %666 = dma.done [#allocation15], 16
        $region116: #{tpu_custom_call.1} parent=79 // pred_fallthru
          _
        // Predicated region
        $region117: #{tpu_custom_call.1} parent=79 // pred_check
          %p667 = pneg %p270
        $region118: #{tpu_custom_call.1} parent=79 // pred_check_branch
          %669 = sbr.rel (%p667) target = $region120
        $region119: #{tpu_custom_call.1} parent=79 // pred_region
          %670 = dma.done [#allocation18], 512
        $region120: #{tpu_custom_call.1} parent=79 // pred_fallthru
          _
        // Predicated region
        $region121: #{tpu_custom_call.1} parent=79 // pred_check
          %p671 = pneg %p291
        $region122: #{tpu_custom_call.1} parent=79 // pred_check_branch
          %673 = sbr.rel (%p671) target = $region124
        $region123: #{tpu_custom_call.1} parent=79 // pred_region
          %674 = dma.done [#allocation18], 16
        $region124: #{tpu_custom_call.1} parent=79 // pred_fallthru
          _
        // Predicated region
        $region125: #{tpu_custom_call.1} parent=79 // pred_check
          %p675 = pneg %p312
        $region126: #{tpu_custom_call.1} parent=79 // pred_check_branch
          %677 = sbr.rel (%p675) target = $region128
        $region127: #{tpu_custom_call.1} parent=79 // pred_region
          %678 = dma.done [#allocation21], 2048
        $region128: #{tpu_custom_call.1} parent=79 // pred_fallthru
          _
        // Predicated region
        $region129: #{tpu_custom_call.1} parent=79 // pred_check
          %p679 = pneg %p333
        $region130: #{tpu_custom_call.1} parent=79 // pred_check_branch
          %681 = sbr.rel (%p679) target = $region132
        $region131: #{tpu_custom_call.1} parent=79 // pred_region
          %682 = dma.done [#allocation21], 16
        $region132: #{tpu_custom_call.1} parent=79 // pred_fallthru
          _
        // Predicated region
        $region133: #{tpu_custom_call.1} parent=79 // pred_check
          %p683 = pneg %p354
        $region134: #{tpu_custom_call.1} parent=79 // pred_check_branch
          %685 = sbr.rel (%p683) target = $region136
        $region135: #{tpu_custom_call.1} parent=79 // pred_region
          %686 = dma.done [#allocation24], 16
        $region136: #{tpu_custom_call.1} parent=79 // pred_fallthru
          _
        // Predicated region
        $region137: #{tpu_custom_call.1} parent=79 // pred_check
          %p687 = pneg %p375
        $region138: #{tpu_custom_call.1} parent=79 // pred_check_branch
          %689 = sbr.rel (%p687) target = $region140
        $region139: #{tpu_custom_call.1} parent=79 // pred_region
          %690 = dma.done [#allocation24], 16
        $region140: #{tpu_custom_call.1} parent=79 // pred_fallthru
          _
        %s691 = sand.u32 %s63, 1
        %s692 = scalar_lea.sflag [#allocation3], %s691
        %s693 = sand.u32 %s63, 1
        %s694 = smul.addr %s693, 8
        %s695 = scalar_lea.vmem [#allocation2], %s694
        %p696 = pneg %p76
        %p697 = pneg %p73
        %s698 = sand.u32 %s41, 1
        %s699 = scalar_lea.sflag [#allocation6], %s698
        %s700 = sand.u32 %s89, 1
        %s701 = smul.addr %s700, 8
        %s702 = scalar_lea.vmem [#allocation5], %s701
        %p703 = pneg %p102
        %p704 = pneg %p99
        %p705 = pneg %p123
        %p706 = pneg %p120
        %p707 = pneg %p144
        %p708 = pneg %p141
        %p709 = pneg %p165
        %p710 = pneg %p162
        %p711 = pneg %p186
        %p712 = pneg %p183
        %p713 = pneg %p207
        %p714 = pneg %p204
        %p715 = pneg %p228
        %p716 = pneg %p225
        %p717 = pneg %p249
        %p718 = pneg %p246
        %p719 = pneg %p270
        %p720 = pneg %p267
        %p721 = pneg %p291
        %p722 = pneg %p288
        %p723 = pneg %p312
        %p724 = pneg %p309
        %p725 = pneg %p333
        %p726 = pneg %p330
        %p727 = pneg %p354
        %p728 = pneg %p351
        %p729 = pneg %p375
        %p730 = pneg %p372
        %p731 = pneg %p403
        %p732 = pneg %p400
        %s733 = sand.u32 %s390, 1
        %s734 = scalar_lea.sflag [#allocation4], %s733
        %s735 = sand.u32 %s390, 1
        %s736 = smul.addr %s735, 8
        %s737 = scalar_lea.vmem [#allocation26], %s736
        %v738 = vld [vmem:[%s625] sm:$0xff]
        %v739 = vld [vmem:[%s634] sm:$0xff]
        %v740 = vlaneseq
        %v741 = vshrl.u32 %v740, 7
        %s742 = smul.u32 %s46, 8
        %v743 = vstv %s742
        %v744 = vadd.s32 %v741, %v743
        %v745 = vlaneseq
        %v746 = vand.u32 %v745, 127
        %vm747 = vcmp.le.s32.totalorder %v746, %v744
        %v748 = vld [vmem:[#allocation7] sm:$0xff]
        %v749 = vld [vmem:[#allocation7 + $0x8] sm:$0xff]
        %v750 = vld [vmem:[#allocation7 + $0x10] sm:$0xff]
        %v751 = vld [vmem:[#allocation7 + $0x18] sm:$0xff]
        %vm752 = vcmask 261120
        %v754 = vsel %vm752, %v738, 0
        %756 = vmatprep.subr.mxu0 0.0
        %757 = vmatpush1.msra.mxu0 %v748
        %758 = vmatprep.subr.mxu0 0.0
        %759 = vmatpush1.msra.mxu0 %v749
        %760 = vmatprep.subr.mxu0 0.0
        %761 = vmatpush1.msra.mxu0 %v750
        %762 = vmatprep.subr.mxu0 0.0
        %763 = vmatpush1.msra.mxu0 %v751
        %764 = vmatprep.subr.mxu0 0.0
        %765 = vmatpush1.msra.mxu0 0.0
        %766 = vmatprep.subr.mxu0 0.0
        %767 = vmatpush1.msra.mxu0 0.0
        %768 = vmatprep.subr.mxu0 0.0
        %769 = vmatpush1.msra.mxu0 0.0
        %770 = vmatprep.subr.mxu0 0.0
        %771 = vmatpush1.msra.mxu0 0.0
        %772 = vmatprep.subr.mxu0 0.0
        %773 = vmatpush1.msra.mxu0 0.0
        %774 = vmatprep.subr.mxu0 0.0
        %775 = vmatpush1.msra.mxu0 0.0
        %776 = vmatprep.subr.mxu0 0.0
        %777 = vmatpush1.msra.mxu0 0.0
        %778 = vmatprep.subr.mxu0 0.0
        %779 = vmatpush1.msra.mxu0 0.0
        %780 = vmatprep.subr.mxu0 0.0
        %781 = vmatpush1.msra.mxu0 0.0
        %782 = vmatprep.subr.mxu0 0.0
        %783 = vmatpush1.msra.mxu0 0.0
        %784 = vmatprep.subr.mxu0 0.0
        %785 = vmatpush1.msra.mxu0 0.0
        %786 = vmatprep.subr.mxu0 0.0
        %787 = vmatpush1.msra.mxu0 0.0
        %788 = vmatprep.subr.mxu0 0.0
        %789 = vmatpush1.msra.mxu0 0.0
        %790 = vmatprep.subr.mxu0 0.0
        %791 = vmatpush1.msra.mxu0 0.0
        %792 = vmatprep.subr.mxu0 0.0
        %793 = vmatpush1.msra.mxu0 0.0
        %794 = vmatprep.subr.mxu0 0.0
        %795 = vmatpush1.msra.mxu0 0.0
        %796 = vmatprep.subr.mxu0 0.0
        %797 = vmatpush1.msra.mxu0 0.0
        %798 = vmatprep.subr.mxu0 0.0
        %799 = vmatpush1.msra.mxu0 0.0
        %800 = vmatprep.subr.mxu0 0.0
        %801 = vmatpush1.msra.mxu0 0.0
        %802 = vmatprep.subr.mxu0 0.0
        %803 = vmatpush1.msra.mxu0 0.0
        %804 = vmatprep.subr.mxu0 0.0
        %805 = vmatpush1.msra.mxu0 0.0
        %806 = vmatprep.subr.mxu0 0.0
        %807 = vmatpush1.msra.mxu0 0.0
        %808 = vmatprep.subr.mxu0 0.0
        %809 = vmatpush1.msra.mxu0 0.0
        %810 = vmatprep.subr.mxu0 0.0
        %811 = vmatpush1.msra.mxu0 0.0
        %812 = vmatprep.subr.mxu0 0.0
        %813 = vmatpush1.msra.mxu0 0.0
        %814 = vmatprep.subr.mxu0 0.0
        %815 = vmatpush1.msra.mxu0 0.0
        %816 = vmatprep.subr.mxu0 0.0
        %817 = vmatpush1.msra.mxu0 0.0
        %818 = vmatprep.subr.mxu0 0.0
        %819 = vmatpush1.msra.mxu0 0.0
        %820 = vmatprep.mubr.f32.mxu0 0.0
        %821 = vmatmul.mubr.f32.gmra.mrb[0].mxu0 %v754
        %v822 = vpop.f32.mrb[0].mxu0
        %v823 = vadd.f32 0.0, %v822
        %v824 = vpop.f32.mrb[0].mxu0
        %825 = vdwg.mxu0
        %v826 = vld [vmem:[#allocation8] sm:$0xff]
        %v827 = vld [vmem:[#allocation8 + $0x8] sm:$0xff]
        %v828 = vld [vmem:[#allocation8 + $0x10] sm:$0xff]
        %v829 = vld [vmem:[#allocation8 + $0x18] sm:$0xff]
        %v831 = vsel %vm752, %v739, 0
        %833 = vmatprep.subr.mxu0 0.0
        %834 = vmatpush1.msra.mxu0 %v826
        %835 = vmatprep.subr.mxu0 0.0
        %836 = vmatpush1.msra.mxu0 %v827
        %837 = vmatprep.subr.mxu0 0.0
        %838 = vmatpush1.msra.mxu0 %v828
        %839 = vmatprep.subr.mxu0 0.0
        %840 = vmatpush1.msra.mxu0 %v829
        %841 = vmatprep.subr.mxu0 0.0
        %842 = vmatpush1.msra.mxu0 0.0
        %843 = vmatprep.subr.mxu0 0.0
        %844 = vmatpush1.msra.mxu0 0.0
        %845 = vmatprep.subr.mxu0 0.0
        %846 = vmatpush1.msra.mxu0 0.0
        %847 = vmatprep.subr.mxu0 0.0
        %848 = vmatpush1.msra.mxu0 0.0
        %849 = vmatprep.subr.mxu0 0.0
        %850 = vmatpush1.msra.mxu0 0.0
        %851 = vmatprep.subr.mxu0 0.0
        %852 = vmatpush1.msra.mxu0 0.0
        %853 = vmatprep.subr.mxu0 0.0
        %854 = vmatpush1.msra.mxu0 0.0
        %855 = vmatprep.subr.mxu0 0.0
        %856 = vmatpush1.msra.mxu0 0.0
        %857 = vmatprep.subr.mxu0 0.0
        %858 = vmatpush1.msra.mxu0 0.0
        %859 = vmatprep.subr.mxu0 0.0
        %860 = vmatpush1.msra.mxu0 0.0
        %861 = vmatprep.subr.mxu0 0.0
        %862 = vmatpush1.msra.mxu0 0.0
        %863 = vmatprep.subr.mxu0 0.0
        %864 = vmatpush1.msra.mxu0 0.0
        %865 = vmatprep.subr.mxu0 0.0
        %866 = vmatpush1.msra.mxu0 0.0
        %867 = vmatprep.subr.mxu0 0.0
        %868 = vmatpush1.msra.mxu0 0.0
        %869 = vmatprep.subr.mxu0 0.0
        %870 = vmatpush1.msra.mxu0 0.0
        %871 = vmatprep.subr.mxu0 0.0
        %872 = vmatpush1.msra.mxu0 0.0
        %873 = vmatprep.subr.mxu0 0.0
        %874 = vmatpush1.msra.mxu0 0.0
        %875 = vmatprep.subr.mxu0 0.0
        %876 = vmatpush1.msra.mxu0 0.0
        %877 = vmatprep.subr.mxu0 0.0
        %878 = vmatpush1.msra.mxu0 0.0
        %879 = vmatprep.subr.mxu0 0.0
        %880 = vmatpush1.msra.mxu0 0.0
        %881 = vmatprep.subr.mxu0 0.0
        %882 = vmatpush1.msra.mxu0 0.0
        %883 = vmatprep.subr.mxu0 0.0
        %884 = vmatpush1.msra.mxu0 0.0
        %885 = vmatprep.subr.mxu0 0.0
        %886 = vmatpush1.msra.mxu0 0.0
        %887 = vmatprep.subr.mxu0 0.0
        %888 = vmatpush1.msra.mxu0 0.0
        %889 = vmatprep.subr.mxu0 0.0
        %890 = vmatpush1.msra.mxu0 0.0
        %891 = vmatprep.subr.mxu0 0.0
        %892 = vmatpush1.msra.mxu0 0.0
        %893 = vmatprep.subr.mxu0 0.0
        %894 = vmatpush1.msra.mxu0 0.0
        %895 = vmatprep.subr.mxu0 0.0
        %896 = vmatpush1.msra.mxu0 0.0
        %897 = vmatprep.mubr.f32.mxu0 0.0
        %898 = vmatmul.mubr.f32.gmra.mrb[0].mxu0 %v831
        %v899 = vpop.f32.mrb[0].mxu0
        %v900 = vadd.f32 0.0, %v899
        %v901 = vpop.f32.mrb[0].mxu0
        %902 = vdwg.mxu0
        %v903 = vld [vmem:[#allocation10] sm:$0xff]
        %v904 = vld [vmem:[#allocation10 + $0x8] sm:$0xff]
        %v905 = vld [vmem:[#allocation10 + $0x10] sm:$0xff]
        %v906 = vld [vmem:[#allocation10 + $0x18] sm:$0xff]
        %907 = vmatprep.subr.mxu0 0.0
        %908 = vmatpush1.msra.mxu0 %v903
        %909 = vmatprep.subr.mxu0 0.0
        %910 = vmatpush1.msra.mxu0 %v904
        %911 = vmatprep.subr.mxu0 0.0
        %912 = vmatpush1.msra.mxu0 %v905
        %913 = vmatprep.subr.mxu0 0.0
        %914 = vmatpush1.msra.mxu0 %v906
        %915 = vmatprep.subr.mxu0 0.0
        %916 = vmatpush1.msra.mxu0 0.0
        %917 = vmatprep.subr.mxu0 0.0
        %918 = vmatpush1.msra.mxu0 0.0
        %919 = vmatprep.subr.mxu0 0.0
        %920 = vmatpush1.msra.mxu0 0.0
        %921 = vmatprep.subr.mxu0 0.0
        %922 = vmatpush1.msra.mxu0 0.0
        %923 = vmatprep.subr.mxu0 0.0
        %924 = vmatpush1.msra.mxu0 0.0
        %925 = vmatprep.subr.mxu0 0.0
        %926 = vmatpush1.msra.mxu0 0.0
        %927 = vmatprep.subr.mxu0 0.0
        %928 = vmatpush1.msra.mxu0 0.0
        %929 = vmatprep.subr.mxu0 0.0
        %930 = vmatpush1.msra.mxu0 0.0
        %931 = vmatprep.subr.mxu0 0.0
        %932 = vmatpush1.msra.mxu0 0.0
        %933 = vmatprep.subr.mxu0 0.0
        %934 = vmatpush1.msra.mxu0 0.0
        %935 = vmatprep.subr.mxu0 0.0
        %936 = vmatpush1.msra.mxu0 0.0
        %937 = vmatprep.subr.mxu0 0.0
        %938 = vmatpush1.msra.mxu0 0.0
        %939 = vmatprep.subr.mxu0 0.0
        %940 = vmatpush1.msra.mxu0 0.0
        %941 = vmatprep.subr.mxu0 0.0
        %942 = vmatpush1.msra.mxu0 0.0
        %943 = vmatprep.subr.mxu0 0.0
        %944 = vmatpush1.msra.mxu0 0.0
        %945 = vmatprep.subr.mxu0 0.0
        %946 = vmatpush1.msra.mxu0 0.0
        %947 = vmatprep.subr.mxu0 0.0
        %948 = vmatpush1.msra.mxu0 0.0
        %949 = vmatprep.subr.mxu0 0.0
        %950 = vmatpush1.msra.mxu0 0.0
        %951 = vmatprep.subr.mxu0 0.0
        %952 = vmatpush1.msra.mxu0 0.0
        %953 = vmatprep.subr.mxu0 0.0
        %954 = vmatpush1.msra.mxu0 0.0
        %955 = vmatprep.subr.mxu0 0.0
        %956 = vmatpush1.msra.mxu0 0.0
        %957 = vmatprep.subr.mxu0 0.0
        %958 = vmatpush1.msra.mxu0 0.0
        %959 = vmatprep.subr.mxu0 0.0
        %960 = vmatpush1.msra.mxu0 0.0
        %961 = vmatprep.subr.mxu0 0.0
        %962 = vmatpush1.msra.mxu0 0.0
        %963 = vmatprep.subr.mxu0 0.0
        %964 = vmatpush1.msra.mxu0 0.0
        %965 = vmatprep.subr.mxu0 0.0
        %966 = vmatpush1.msra.mxu0 0.0
        %967 = vmatprep.subr.mxu0 0.0
        %968 = vmatpush1.msra.mxu0 0.0
        %969 = vmatprep.subr.mxu0 0.0
        %970 = vmatpush1.msra.mxu0 0.0
        %971 = vmatprep.mubr.f32.mxu0 0.0
        %972 = vmatmul.mubr.f32.gmra.mrb[0].mxu0 %v831
        %v973 = vpop.f32.mrb[0].mxu0
        %v974 = vadd.f32 0.0, %v973
        %v975 = vpop.f32.mrb[0].mxu0
        %976 = vdwg.mxu0
        %vm977 = vcmask 130048
        %v979 = vsel %vm977, %v823, 0
        %v982 = vsel %vm977, %v900, 0
        %984 = vmatprep.subr.mxu0 0.0
        %985 = vmatpush1.xpose.msra.mxu0 %v982
        %986 = vmatprep.subr.mxu0 0.0
        %987 = vmatpush1.xpose.msra.mxu0 0.0
        %988 = vmatprep.subr.mxu0 0.0
        %989 = vmatpush1.xpose.msra.mxu0 0.0
        %990 = vmatprep.subr.mxu0 0.0
        %991 = vmatpush1.xpose.msra.mxu0 0.0
        %992 = vmatprep.subr.mxu0 0.0
        %993 = vmatpush1.xpose.msra.mxu0 0.0
        %994 = vmatprep.subr.mxu0 0.0
        %995 = vmatpush1.xpose.msra.mxu0 0.0
        %996 = vmatprep.subr.mxu0 0.0
        %997 = vmatpush1.xpose.msra.mxu0 0.0
        %998 = vmatprep.subr.mxu0 0.0
        %999 = vmatpush1.xpose.msra.mxu0 0.0
        %1000 = vmatprep.subr.mxu0 0.0
        %1001 = vmatpush1.xpose.msra.mxu0 0.0
        %1002 = vmatprep.subr.mxu0 0.0
        %1003 = vmatpush1.xpose.msra.mxu0 0.0
        %1004 = vmatprep.subr.mxu0 0.0
        %1005 = vmatpush1.xpose.msra.mxu0 0.0
        %1006 = vmatprep.subr.mxu0 0.0
        %1007 = vmatpush1.xpose.msra.mxu0 0.0
        %1008 = vmatprep.subr.mxu0 0.0
        %1009 = vmatpush1.xpose.msra.mxu0 0.0
        %1010 = vmatprep.subr.mxu0 0.0
        %1011 = vmatpush1.xpose.msra.mxu0 0.0
        %1012 = vmatprep.subr.mxu0 0.0
        %1013 = vmatpush1.xpose.msra.mxu0 0.0
        %1014 = vmatprep.subr.mxu0 0.0
        %1015 = vmatpush1.xpose.msra.mxu0 0.0
        %1016 = vmatprep.subr.mxu0 0.0
        %1017 = vmatpush1.xpose.msra.mxu0 0.0
        %1018 = vmatprep.subr.mxu0 0.0
        %1019 = vmatpush1.xpose.msra.mxu0 0.0
        %1020 = vmatprep.subr.mxu0 0.0
        %1021 = vmatpush1.xpose.msra.mxu0 0.0
        %1022 = vmatprep.subr.mxu0 0.0
        %1023 = vmatpush1.xpose.msra.mxu0 0.0
        %1024 = vmatprep.subr.mxu0 0.0
        %1025 = vmatpush1.xpose.msra.mxu0 0.0
        %1026 = vmatprep.subr.mxu0 0.0
        %1027 = vmatpush1.xpose.msra.mxu0 0.0
        %1028 = vmatprep.subr.mxu0 0.0
        %1029 = vmatpush1.xpose.msra.mxu0 0.0
        %1030 = vmatprep.subr.mxu0 0.0
        %1031 = vmatpush1.xpose.msra.mxu0 0.0
        %1032 = vmatprep.subr.mxu0 0.0
        %1033 = vmatpush1.xpose.msra.mxu0 0.0
        %1034 = vmatprep.subr.mxu0 0.0
        %1035 = vmatpush1.xpose.msra.mxu0 0.0
        %1036 = vmatprep.subr.mxu0 0.0
        %1037 = vmatpush1.xpose.msra.mxu0 0.0
        %1038 = vmatprep.subr.mxu0 0.0
        %1039 = vmatpush1.xpose.msra.mxu0 0.0
        %1040 = vmatprep.subr.mxu0 0.0
        %1041 = vmatpush1.xpose.msra.mxu0 0.0
        %1042 = vmatprep.subr.mxu0 0.0
        %1043 = vmatpush1.xpose.msra.mxu0 0.0
        %1044 = vmatprep.subr.mxu0 0.0
        %1045 = vmatpush1.xpose.msra.mxu0 0.0
        %1046 = vmatprep.subr.mxu0 0.0
        %1047 = vmatpush1.xpose.msra.mxu0 0.0
        %1048 = vmatprep.mubr.f32.mxu0 0.0
        %1049 = vmatmul.mubr.f32.gmra.mrb[0].mxu0 %v979
        %v1050 = vpop.f32.mrb[0].mxu0
        %v1051 = vadd.f32 0.0, %v1050
        %v1052 = vpop.f32.mrb[0].mxu0
        %1053 = vdwg.mxu0
        %v1054 = vsel %vm747, %v1051, -1e+30
        %vm1055 = vcmask 64512
        %v1056 = vsel %vm1055, %v1054, -inf
        %1057 = vmax.xlane.f32.xlu0 %v1056
        %v1058 = vpop.xlane.xlu0 %1057
        %v1059 = vsub.f32 %v1054, %v1058
        %v1060 = vmul.f32 %v1059, 1.442695
        %v1061 = vpow.pop %v1060
        %v1062 = vsel %vm1055, %v1061, 0.0
        %1063 = vadd.xlane.f32.xlu0 %v1062
        %v1064 = vpop.xlane.xlu0 %1063
        %v1065 = vrcp.pop %v1064
        %v1067 = vsel %vm1055, %v1061, 0
        %1069 = vmatprep.subr.mxu0 0.0
        %1070 = vmatpush1.msra.mxu0 %v974
        %1071 = vmatprep.subr.mxu0 0.0
        %1072 = vmatpush1.msra.mxu0 0.0
        %1073 = vmatprep.subr.mxu0 0.0
        %1074 = vmatpush1.msra.mxu0 0.0
        %1075 = vmatprep.subr.mxu0 0.0
        %1076 = vmatpush1.msra.mxu0 0.0
        %1077 = vmatprep.subr.mxu0 0.0
        %1078 = vmatpush1.msra.mxu0 0.0
        %1079 = vmatprep.subr.mxu0 0.0
        %1080 = vmatpush1.msra.mxu0 0.0
        %1081 = vmatprep.subr.mxu0 0.0
        %1082 = vmatpush1.msra.mxu0 0.0
        %1083 = vmatprep.subr.mxu0 0.0
        %1084 = vmatpush1.msra.mxu0 0.0
        %1085 = vmatprep.subr.mxu0 0.0
        %1086 = vmatpush1.msra.mxu0 0.0
        %1087 = vmatprep.subr.mxu0 0.0
        %1088 = vmatpush1.msra.mxu0 0.0
        %1089 = vmatprep.subr.mxu0 0.0
        %1090 = vmatpush1.msra.mxu0 0.0
        %1091 = vmatprep.subr.mxu0 0.0
        %1092 = vmatpush1.msra.mxu0 0.0
        %1093 = vmatprep.subr.mxu0 0.0
        %1094 = vmatpush1.msra.mxu0 0.0
        %1095 = vmatprep.subr.mxu0 0.0
        %1096 = vmatpush1.msra.mxu0 0.0
        %1097 = vmatprep.subr.mxu0 0.0
        %1098 = vmatpush1.msra.mxu0 0.0
        %1099 = vmatprep.subr.mxu0 0.0
        %1100 = vmatpush1.msra.mxu0 0.0
        %1101 = vmatprep.subr.mxu0 0.0
        %1102 = vmatpush1.msra.mxu0 0.0
        %1103 = vmatprep.subr.mxu0 0.0
        %1104 = vmatpush1.msra.mxu0 0.0
        %1105 = vmatprep.subr.mxu0 0.0
        %1106 = vmatpush1.msra.mxu0 0.0
        %1107 = vmatprep.subr.mxu0 0.0
        %1108 = vmatpush1.msra.mxu0 0.0
        %1109 = vmatprep.subr.mxu0 0.0
        %1110 = vmatpush1.msra.mxu0 0.0
        %1111 = vmatprep.subr.mxu0 0.0
        %1112 = vmatpush1.msra.mxu0 0.0
        %1113 = vmatprep.subr.mxu0 0.0
        %1114 = vmatpush1.msra.mxu0 0.0
        %1115 = vmatprep.subr.mxu0 0.0
        %1116 = vmatpush1.msra.mxu0 0.0
        %1117 = vmatprep.subr.mxu0 0.0
        %1118 = vmatpush1.msra.mxu0 0.0
        %1119 = vmatprep.subr.mxu0 0.0
        %1120 = vmatpush1.msra.mxu0 0.0
        %1121 = vmatprep.subr.mxu0 0.0
        %1122 = vmatpush1.msra.mxu0 0.0
        %1123 = vmatprep.subr.mxu0 0.0
        %1124 = vmatpush1.msra.mxu0 0.0
        %1125 = vmatprep.subr.mxu0 0.0
        %1126 = vmatpush1.msra.mxu0 0.0
        %1127 = vmatprep.subr.mxu0 0.0
        %1128 = vmatpush1.msra.mxu0 0.0
        %1129 = vmatprep.subr.mxu0 0.0
        %1130 = vmatpush1.msra.mxu0 0.0
        %1131 = vmatprep.subr.mxu0 0.0
        %1132 = vmatpush1.msra.mxu0 0.0
        %1133 = vmatprep.mubr.f32.mxu0 0.0
        %1134 = vmatmul.mubr.f32.gmra.mrb[0].mxu0 %v1067
        %v1135 = vpop.f32.mrb[0].mxu0
        %v1136 = vadd.f32 0.0, %v1135
        %v1137 = vpop.f32.mrb[0].mxu0
        %1138 = vdwg.mxu0
        %v1139 = vmul.f32 %v1136, %v1065
        %v1140 = vld [vmem:[#allocation11] sm:$0xff]
        %v1141 = vld [vmem:[#allocation11 + $0x8] sm:$0xff]
        %s1142 = scalar_lea.vmem [#allocation7], 32
        %v1143 = vld [vmem:[%s1142] sm:$0xff]
        %v1144 = vld [vmem:[%s1142 + $0x8] sm:$0xff]
        %v1145 = vld [vmem:[%s1142 + $0x10] sm:$0xff]
        %v1146 = vld [vmem:[%s1142 + $0x18] sm:$0xff]
        %1147 = vmatprep.subr.mxu0 0.0
        %1148 = vmatpush1.msra.mxu0 %v1143
        %1149 = vmatprep.subr.mxu0 0.0
        %1150 = vmatpush1.msra.mxu0 %v1144
        %1151 = vmatprep.subr.mxu0 0.0
        %1152 = vmatpush1.msra.mxu0 %v1145
        %1153 = vmatprep.subr.mxu0 0.0
        %1154 = vmatpush1.msra.mxu0 %v1146
        %1155 = vmatprep.subr.mxu0 0.0
        %1156 = vmatpush1.msra.mxu0 0.0
        %1157 = vmatprep.subr.mxu0 0.0
        %1158 = vmatpush1.msra.mxu0 0.0
        %1159 = vmatprep.subr.mxu0 0.0
        %1160 = vmatpush1.msra.mxu0 0.0
        %1161 = vmatprep.subr.mxu0 0.0
        %1162 = vmatpush1.msra.mxu0 0.0
        %1163 = vmatprep.subr.mxu0 0.0
        %1164 = vmatpush1.msra.mxu0 0.0
        %1165 = vmatprep.subr.mxu0 0.0
        %1166 = vmatpush1.msra.mxu0 0.0
        %1167 = vmatprep.subr.mxu0 0.0
        %1168 = vmatpush1.msra.mxu0 0.0
        %1169 = vmatprep.subr.mxu0 0.0
        %1170 = vmatpush1.msra.mxu0 0.0
        %1171 = vmatprep.subr.mxu0 0.0
        %1172 = vmatpush1.msra.mxu0 0.0
        %1173 = vmatprep.subr.mxu0 0.0
        %1174 = vmatpush1.msra.mxu0 0.0
        %1175 = vmatprep.subr.mxu0 0.0
        %1176 = vmatpush1.msra.mxu0 0.0
        %1177 = vmatprep.subr.mxu0 0.0
        %1178 = vmatpush1.msra.mxu0 0.0
        %1179 = vmatprep.subr.mxu0 0.0
        %1180 = vmatpush1.msra.mxu0 0.0
        %1181 = vmatprep.subr.mxu0 0.0
        %1182 = vmatpush1.msra.mxu0 0.0
        %1183 = vmatprep.subr.mxu0 0.0
        %1184 = vmatpush1.msra.mxu0 0.0
        %1185 = vmatprep.subr.mxu0 0.0
        %1186 = vmatpush1.msra.mxu0 0.0
        %1187 = vmatprep.subr.mxu0 0.0
        %1188 = vmatpush1.msra.mxu0 0.0
        %1189 = vmatprep.subr.mxu0 0.0
        %1190 = vmatpush1.msra.mxu0 0.0
        %1191 = vmatprep.subr.mxu0 0.0
        %1192 = vmatpush1.msra.mxu0 0.0
        %1193 = vmatprep.subr.mxu0 0.0
        %1194 = vmatpush1.msra.mxu0 0.0
        %1195 = vmatprep.subr.mxu0 0.0
        %1196 = vmatpush1.msra.mxu0 0.0
        %1197 = vmatprep.subr.mxu0 0.0
        %1198 = vmatpush1.msra.mxu0 0.0
        %1199 = vmatprep.subr.mxu0 0.0
        %1200 = vmatpush1.msra.mxu0 0.0
        %1201 = vmatprep.subr.mxu0 0.0
        %1202 = vmatpush1.msra.mxu0 0.0
        %1203 = vmatprep.subr.mxu0 0.0
        %1204 = vmatpush1.msra.mxu0 0.0
        %1205 = vmatprep.subr.mxu0 0.0
        %1206 = vmatpush1.msra.mxu0 0.0
        %1207 = vmatprep.subr.mxu0 0.0
        %1208 = vmatpush1.msra.mxu0 0.0
        %1209 = vmatprep.subr.mxu0 0.0
        %1210 = vmatpush1.msra.mxu0 0.0
        %1211 = vmatprep.mubr.f32.mxu0 0.0
        %1212 = vmatmul.mubr.f32.gmra.mrb[0].mxu0 %v754
        %v1213 = vpop.f32.mrb[0].mxu0
        %v1214 = vadd.f32 0.0, %v1213
        %v1215 = vpop.f32.mrb[0].mxu0
        %1216 = vdwg.mxu0
        %s1217 = scalar_lea.vmem [#allocation8], 32
        %v1218 = vld [vmem:[%s1217] sm:$0xff]
        %v1219 = vld [vmem:[%s1217 + $0x8] sm:$0xff]
        %v1220 = vld [vmem:[%s1217 + $0x10] sm:$0xff]
        %v1221 = vld [vmem:[%s1217 + $0x18] sm:$0xff]
        %1222 = vmatprep.subr.mxu0 0.0
        %1223 = vmatpush1.msra.mxu0 %v1218
        %1224 = vmatprep.subr.mxu0 0.0
        %1225 = vmatpush1.msra.mxu0 %v1219
        %1226 = vmatprep.subr.mxu0 0.0
        %1227 = vmatpush1.msra.mxu0 %v1220
        %1228 = vmatprep.subr.mxu0 0.0
        %1229 = vmatpush1.msra.mxu0 %v1221
        %1230 = vmatprep.subr.mxu0 0.0
        %1231 = vmatpush1.msra.mxu0 0.0
        %1232 = vmatprep.subr.mxu0 0.0
        %1233 = vmatpush1.msra.mxu0 0.0
        %1234 = vmatprep.subr.mxu0 0.0
        %1235 = vmatpush1.msra.mxu0 0.0
        %1236 = vmatprep.subr.mxu0 0.0
        %1237 = vmatpush1.msra.mxu0 0.0
        %1238 = vmatprep.subr.mxu0 0.0
        %1239 = vmatpush1.msra.mxu0 0.0
        %1240 = vmatprep.subr.mxu0 0.0
        %1241 = vmatpush1.msra.mxu0 0.0
        %1242 = vmatprep.subr.mxu0 0.0
        %1243 = vmatpush1.msra.mxu0 0.0
        %1244 = vmatprep.subr.mxu0 0.0
        %1245 = vmatpush1.msra.mxu0 0.0
        %1246 = vmatprep.subr.mxu0 0.0
        %1247 = vmatpush1.msra.mxu0 0.0
        %1248 = vmatprep.subr.mxu0 0.0
        %1249 = vmatpush1.msra.mxu0 0.0
        %1250 = vmatprep.subr.mxu0 0.0
        %1251 = vmatpush1.msra.mxu0 0.0
        %1252 = vmatprep.subr.mxu0 0.0
        %1253 = vmatpush1.msra.mxu0 0.0
        %1254 = vmatprep.subr.mxu0 0.0
        %1255 = vmatpush1.msra.mxu0 0.0
        %1256 = vmatprep.subr.mxu0 0.0
        %1257 = vmatpush1.msra.mxu0 0.0
        %1258 = vmatprep.subr.mxu0 0.0
        %1259 = vmatpush1.msra.mxu0 0.0
        %1260 = vmatprep.subr.mxu0 0.0
        %1261 = vmatpush1.msra.mxu0 0.0
        %1262 = vmatprep.subr.mxu0 0.0
        %1263 = vmatpush1.msra.mxu0 0.0
        %1264 = vmatprep.subr.mxu0 0.0
        %1265 = vmatpush1.msra.mxu0 0.0
        %1266 = vmatprep.subr.mxu0 0.0
        %1267 = vmatpush1.msra.mxu0 0.0
        %1268 = vmatprep.subr.mxu0 0.0
        %1269 = vmatpush1.msra.mxu0 0.0
        %1270 = vmatprep.subr.mxu0 0.0
        %1271 = vmatpush1.msra.mxu0 0.0
        %1272 = vmatprep.subr.mxu0 0.0
        %1273 = vmatpush1.msra.mxu0 0.0
        %1274 = vmatprep.subr.mxu0 0.0
        %1275 = vmatpush1.msra.mxu0 0.0
        %1276 = vmatprep.subr.mxu0 0.0
        %1277 = vmatpush1.msra.mxu0 0.0
        %1278 = vmatprep.subr.mxu0 0.0
        %1279 = vmatpush1.msra.mxu0 0.0
        %1280 = vmatprep.subr.mxu0 0.0
        %1281 = vmatpush1.msra.mxu0 0.0
        %1282 = vmatprep.subr.mxu0 0.0
        %1283 = vmatpush1.msra.mxu0 0.0
        %1284 = vmatprep.subr.mxu0 0.0
        %1285 = vmatpush1.msra.mxu0 0.0
        %1286 = vmatprep.mubr.f32.mxu0 0.0
        %1287 = vmatmul.mubr.f32.gmra.mrb[0].mxu0 %v831
        %v1288 = vpop.f32.mrb[0].mxu0
        %v1289 = vadd.f32 0.0, %v1288
        %v1290 = vpop.f32.mrb[0].mxu0
        %1291 = vdwg.mxu0
        %s1292 = scalar_lea.vmem [#allocation10], 32
        %v1293 = vld [vmem:[%s1292] sm:$0xff]
        %v1294 = vld [vmem:[%s1292 + $0x8] sm:$0xff]
        %v1295 = vld [vmem:[%s1292 + $0x10] sm:$0xff]
        %v1296 = vld [vmem:[%s1292 + $0x18] sm:$0xff]
        %1297 = vmatprep.subr.mxu0 0.0
        %1298 = vmatpush1.msra.mxu0 %v1293
        %1299 = vmatprep.subr.mxu0 0.0
        %1300 = vmatpush1.msra.mxu0 %v1294
        %1301 = vmatprep.subr.mxu0 0.0
        %1302 = vmatpush1.msra.mxu0 %v1295
        %1303 = vmatprep.subr.mxu0 0.0
        %1304 = vmatpush1.msra.mxu0 %v1296
        %1305 = vmatprep.subr.mxu0 0.0
        %1306 = vmatpush1.msra.mxu0 0.0
        %1307 = vmatprep.subr.mxu0 0.0
        %1308 = vmatpush1.msra.mxu0 0.0
        %1309 = vmatprep.subr.mxu0 0.0
        %1310 = vmatpush1.msra.mxu0 0.0
        %1311 = vmatprep.subr.mxu0 0.0
        %1312 = vmatpush1.msra.mxu0 0.0
        %1313 = vmatprep.subr.mxu0 0.0
        %1314 = vmatpush1.msra.mxu0 0.0
        %1315 = vmatprep.subr.mxu0 0.0
        %1316 = vmatpush1.msra.mxu0 0.0
        %1317 = vmatprep.subr.mxu0 0.0
        %1318 = vmatpush1.msra.mxu0 0.0
        %1319 = vmatprep.subr.mxu0 0.0
        %1320 = vmatpush1.msra.mxu0 0.0
        %1321 = vmatprep.subr.mxu0 0.0
        %1322 = vmatpush1.msra.mxu0 0.0
        %1323 = vmatprep.subr.mxu0 0.0
        %1324 = vmatpush1.msra.mxu0 0.0
        %1325 = vmatprep.subr.mxu0 0.0
        %1326 = vmatpush1.msra.mxu0 0.0
        %1327 = vmatprep.subr.mxu0 0.0
        %1328 = vmatpush1.msra.mxu0 0.0
        %1329 = vmatprep.subr.mxu0 0.0
        %1330 = vmatpush1.msra.mxu0 0.0
        %1331 = vmatprep.subr.mxu0 0.0
        %1332 = vmatpush1.msra.mxu0 0.0
        %1333 = vmatprep.subr.mxu0 0.0
        %1334 = vmatpush1.msra.mxu0 0.0
        %1335 = vmatprep.subr.mxu0 0.0
        %1336 = vmatpush1.msra.mxu0 0.0
        %1337 = vmatprep.subr.mxu0 0.0
        %1338 = vmatpush1.msra.mxu0 0.0
        %1339 = vmatprep.subr.mxu0 0.0
        %1340 = vmatpush1.msra.mxu0 0.0
        %1341 = vmatprep.subr.mxu0 0.0
        %1342 = vmatpush1.msra.mxu0 0.0
        %1343 = vmatprep.subr.mxu0 0.0
        %1344 = vmatpush1.msra.mxu0 0.0
        %1345 = vmatprep.subr.mxu0 0.0
        %1346 = vmatpush1.msra.mxu0 0.0
        %1347 = vmatprep.subr.mxu0 0.0
        %1348 = vmatpush1.msra.mxu0 0.0
        %1349 = vmatprep.subr.mxu0 0.0
        %1350 = vmatpush1.msra.mxu0 0.0
        %1351 = vmatprep.subr.mxu0 0.0
        %1352 = vmatpush1.msra.mxu0 0.0
        %1353 = vmatprep.subr.mxu0 0.0
        %1354 = vmatpush1.msra.mxu0 0.0
        %1355 = vmatprep.subr.mxu0 0.0
        %1356 = vmatpush1.msra.mxu0 0.0
        %1357 = vmatprep.subr.mxu0 0.0
        %1358 = vmatpush1.msra.mxu0 0.0
        %1359 = vmatprep.subr.mxu0 0.0
        %1360 = vmatpush1.msra.mxu0 0.0
        %1361 = vmatprep.mubr.f32.mxu0 0.0
        %1362 = vmatmul.mubr.f32.gmra.mrb[0].mxu0 %v831
        %v1363 = vpop.f32.mrb[0].mxu0
        %v1364 = vadd.f32 0.0, %v1363
        %v1365 = vpop.f32.mrb[0].mxu0
        %1366 = vdwg.mxu0
        %v1368 = vsel %vm977, %v1214, 0
        %v1371 = vsel %vm977, %v1289, 0
        %1373 = vmatprep.subr.mxu0 0.0
        %1374 = vmatpush1.xpose.msra.mxu0 %v1371
        %1375 = vmatprep.subr.mxu0 0.0
        %1376 = vmatpush1.xpose.msra.mxu0 0.0
        %1377 = vmatprep.subr.mxu0 0.0
        %1378 = vmatpush1.xpose.msra.mxu0 0.0
        %1379 = vmatprep.subr.mxu0 0.0
        %1380 = vmatpush1.xpose.msra.mxu0 0.0
        %1381 = vmatprep.subr.mxu0 0.0
        %1382 = vmatpush1.xpose.msra.mxu0 0.0
        %1383 = vmatprep.subr.mxu0 0.0
        %1384 = vmatpush1.xpose.msra.mxu0 0.0
        %1385 = vmatprep.subr.mxu0 0.0
        %1386 = vmatpush1.xpose.msra.mxu0 0.0
        %1387 = vmatprep.subr.mxu0 0.0
        %1388 = vmatpush1.xpose.msra.mxu0 0.0
        %1389 = vmatprep.subr.mxu0 0.0
        %1390 = vmatpush1.xpose.msra.mxu0 0.0
        %1391 = vmatprep.subr.mxu0 0.0
        %1392 = vmatpush1.xpose.msra.mxu0 0.0
        %1393 = vmatprep.subr.mxu0 0.0
        %1394 = vmatpush1.xpose.msra.mxu0 0.0
        %1395 = vmatprep.subr.mxu0 0.0
        %1396 = vmatpush1.xpose.msra.mxu0 0.0
        %1397 = vmatprep.subr.mxu0 0.0
        %1398 = vmatpush1.xpose.msra.mxu0 0.0
        %1399 = vmatprep.subr.mxu0 0.0
        %1400 = vmatpush1.xpose.msra.mxu0 0.0
        %1401 = vmatprep.subr.mxu0 0.0
        %1402 = vmatpush1.xpose.msra.mxu0 0.0
        %1403 = vmatprep.subr.mxu0 0.0
        %1404 = vmatpush1.xpose.msra.mxu0 0.0
        %1405 = vmatprep.subr.mxu0 0.0
        %1406 = vmatpush1.xpose.msra.mxu0 0.0
        %1407 = vmatprep.subr.mxu0 0.0
        %1408 = vmatpush1.xpose.msra.mxu0 0.0
        %1409 = vmatprep.subr.mxu0 0.0
        %1410 = vmatpush1.xpose.msra.mxu0 0.0
        %1411 = vmatprep.subr.mxu0 0.0
        %1412 = vmatpush1.xpose.msra.mxu0 0.0
        %1413 = vmatprep.subr.mxu0 0.0
        %1414 = vmatpush1.xpose.msra.mxu0 0.0
        %1415 = vmatprep.subr.mxu0 0.0
        %1416 = vmatpush1.xpose.msra.mxu0 0.0
        %1417 = vmatprep.subr.mxu0 0.0
        %1418 = vmatpush1.xpose.msra.mxu0 0.0
        %1419 = vmatprep.subr.mxu0 0.0
        %1420 = vmatpush1.xpose.msra.mxu0 0.0
        %1421 = vmatprep.subr.mxu0 0.0
        %1422 = vmatpush1.xpose.msra.mxu0 0.0
        %1423 = vmatprep.subr.mxu0 0.0
        %1424 = vmatpush1.xpose.msra.mxu0 0.0
        %1425 = vmatprep.subr.mxu0 0.0
        %1426 = vmatpush1.xpose.msra.mxu0 0.0
        %1427 = vmatprep.subr.mxu0 0.0
        %1428 = vmatpush1.xpose.msra.mxu0 0.0
        %1429 = vmatprep.subr.mxu0 0.0
        %1430 = vmatpush1.xpose.msra.mxu0 0.0
        %1431 = vmatprep.subr.mxu0 0.0
        %1432 = vmatpush1.xpose.msra.mxu0 0.0
        %1433 = vmatprep.subr.mxu0 0.0
        %1434 = vmatpush1.xpose.msra.mxu0 0.0
        %1435 = vmatprep.subr.mxu0 0.0
        %1436 = vmatpush1.xpose.msra.mxu0 0.0
        %1437 = vmatprep.mubr.f32.mxu0 0.0
        %1438 = vmatmul.mubr.f32.gmra.mrb[0].mxu0 %v1368
        %v1439 = vpop.f32.mrb[0].mxu0
        %v1440 = vadd.f32 0.0, %v1439
        %v1441 = vpop.f32.mrb[0].mxu0
        %1442 = vdwg.mxu0
        %v1443 = vsel %vm747, %v1440, -1e+30
        %v1444 = vsel %vm1055, %v1443, -inf
        %1445 = vmax.xlane.f32.xlu0 %v1444
        %v1446 = vpop.xlane.xlu0 %1445
        %v1447 = vsub.f32 %v1443, %v1446
        %v1448 = vmul.f32 %v1447, 1.442695
        %v1449 = vpow.pop %v1448
        %v1450 = vsel %vm1055, %v1449, 0.0
        %1451 = vadd.xlane.f32.xlu0 %v1450
        %v1452 = vpop.xlane.xlu0 %1451
        %v1453 = vrcp.pop %v1452
        %v1455 = vsel %vm1055, %v1449, 0
        %1457 = vmatprep.subr.mxu0 0.0
        %1458 = vmatpush1.msra.mxu0 %v1364
        %1459 = vmatprep.subr.mxu0 0.0
        %1460 = vmatpush1.msra.mxu0 0.0
        %1461 = vmatprep.subr.mxu0 0.0
        %1462 = vmatpush1.msra.mxu0 0.0
        %1463 = vmatprep.subr.mxu0 0.0
        %1464 = vmatpush1.msra.mxu0 0.0
        %1465 = vmatprep.subr.mxu0 0.0
        %1466 = vmatpush1.msra.mxu0 0.0
        %1467 = vmatprep.subr.mxu0 0.0
        %1468 = vmatpush1.msra.mxu0 0.0
        %1469 = vmatprep.subr.mxu0 0.0
        %1470 = vmatpush1.msra.mxu0 0.0
        %1471 = vmatprep.subr.mxu0 0.0
        %1472 = vmatpush1.msra.mxu0 0.0
        %1473 = vmatprep.subr.mxu0 0.0
        %1474 = vmatpush1.msra.mxu0 0.0
        %1475 = vmatprep.subr.mxu0 0.0
        %1476 = vmatpush1.msra.mxu0 0.0
        %1477 = vmatprep.subr.mxu0 0.0
        %1478 = vmatpush1.msra.mxu0 0.0
        %1479 = vmatprep.subr.mxu0 0.0
        %1480 = vmatpush1.msra.mxu0 0.0
        %1481 = vmatprep.subr.mxu0 0.0
        %1482 = vmatpush1.msra.mxu0 0.0
        %1483 = vmatprep.subr.mxu0 0.0
        %1484 = vmatpush1.msra.mxu0 0.0
        %1485 = vmatprep.subr.mxu0 0.0
        %1486 = vmatpush1.msra.mxu0 0.0
        %1487 = vmatprep.subr.mxu0 0.0
        %1488 = vmatpush1.msra.mxu0 0.0
        %1489 = vmatprep.subr.mxu0 0.0
        %1490 = vmatpush1.msra.mxu0 0.0
        %1491 = vmatprep.subr.mxu0 0.0
        %1492 = vmatpush1.msra.mxu0 0.0
        %1493 = vmatprep.subr.mxu0 0.0
        %1494 = vmatpush1.msra.mxu0 0.0
        %1495 = vmatprep.subr.mxu0 0.0
        %1496 = vmatpush1.msra.mxu0 0.0
        %1497 = vmatprep.subr.mxu0 0.0
        %1498 = vmatpush1.msra.mxu0 0.0
        %1499 = vmatprep.subr.mxu0 0.0
        %1500 = vmatpush1.msra.mxu0 0.0
        %1501 = vmatprep.subr.mxu0 0.0
        %1502 = vmatpush1.msra.mxu0 0.0
        %1503 = vmatprep.subr.mxu0 0.0
        %1504 = vmatpush1.msra.mxu0 0.0
        %1505 = vmatprep.subr.mxu0 0.0
        %1506 = vmatpush1.msra.mxu0 0.0
        %1507 = vmatprep.subr.mxu0 0.0
        %1508 = vmatpush1.msra.mxu0 0.0
        %1509 = vmatprep.subr.mxu0 0.0
        %1510 = vmatpush1.msra.mxu0 0.0
        %1511 = vmatprep.subr.mxu0 0.0
        %1512 = vmatpush1.msra.mxu0 0.0
        %1513 = vmatprep.subr.mxu0 0.0
        %1514 = vmatpush1.msra.mxu0 0.0
        %1515 = vmatprep.subr.mxu0 0.0
        %1516 = vmatpush1.msra.mxu0 0.0
        %1517 = vmatprep.subr.mxu0 0.0
        %1518 = vmatpush1.msra.mxu0 0.0
        %1519 = vmatprep.subr.mxu0 0.0
        %1520 = vmatpush1.msra.mxu0 0.0
        %1521 = vmatprep.mubr.f32.mxu0 0.0
        %1522 = vmatmul.mubr.f32.gmra.mrb[0].mxu0 %v1455
        %v1523 = vpop.f32.mrb[0].mxu0
        %v1524 = vadd.f32 0.0, %v1523
        %v1525 = vpop.f32.mrb[0].mxu0
        %1526 = vdwg.mxu0
        %v1527 = vmul.f32 %v1524, %v1453
        %s1528 = scalar_lea.vmem [#allocation11], 16
        %v1529 = vld [vmem:[%s1528] sm:$0xff]
        %v1530 = vld [vmem:[%s1528 + $0x8] sm:$0xff]
        %v1532 = vsel %vm977, %v1527, 0
        %1534 = vmatprep.subr.mxu0 0.0
        %1535 = vmatpush1.msra.mxu0 %v1529
        %1536 = vmatprep.subr.mxu0 0.0
        %1537 = vmatpush1.msra.mxu0 %v1530
        %1538 = vmatprep.subr.mxu0 0.0
        %1539 = vmatpush1.msra.mxu0 0.0
        %1540 = vmatprep.subr.mxu0 0.0
        %1541 = vmatpush1.msra.mxu0 0.0
        %1542 = vmatprep.subr.mxu0 0.0
        %1543 = vmatpush1.msra.mxu0 0.0
        %1544 = vmatprep.subr.mxu0 0.0
        %1545 = vmatpush1.msra.mxu0 0.0
        %1546 = vmatprep.subr.mxu0 0.0
        %1547 = vmatpush1.msra.mxu0 0.0
        %1548 = vmatprep.subr.mxu0 0.0
        %1549 = vmatpush1.msra.mxu0 0.0
        %1550 = vmatprep.subr.mxu0 0.0
        %1551 = vmatpush1.msra.mxu0 0.0
        %1552 = vmatprep.subr.mxu0 0.0
        %1553 = vmatpush1.msra.mxu0 0.0
        %1554 = vmatprep.subr.mxu0 0.0
        %1555 = vmatpush1.msra.mxu0 0.0
        %1556 = vmatprep.subr.mxu0 0.0
        %1557 = vmatpush1.msra.mxu0 0.0
        %1558 = vmatprep.subr.mxu0 0.0
        %1559 = vmatpush1.msra.mxu0 0.0
        %1560 = vmatprep.subr.mxu0 0.0
        %1561 = vmatpush1.msra.mxu0 0.0
        %1562 = vmatprep.subr.mxu0 0.0
        %1563 = vmatpush1.msra.mxu0 0.0
        %1564 = vmatprep.subr.mxu0 0.0
        %1565 = vmatpush1.msra.mxu0 0.0
        %1566 = vmatprep.subr.mxu0 0.0
        %1567 = vmatpush1.msra.mxu0 0.0
        %1568 = vmatprep.subr.mxu0 0.0
        %1569 = vmatpush1.msra.mxu0 0.0
        %1570 = vmatprep.subr.mxu0 0.0
        %1571 = vmatpush1.msra.mxu0 0.0
        %1572 = vmatprep.subr.mxu0 0.0
        %1573 = vmatpush1.msra.mxu0 0.0
        %1574 = vmatprep.subr.mxu0 0.0
        %1575 = vmatpush1.msra.mxu0 0.0
        %1576 = vmatprep.subr.mxu0 0.0
        %1577 = vmatpush1.msra.mxu0 0.0
        %1578 = vmatprep.subr.mxu0 0.0
        %1579 = vmatpush1.msra.mxu0 0.0
        %1580 = vmatprep.subr.mxu0 0.0
        %1581 = vmatpush1.msra.mxu0 0.0
        %1582 = vmatprep.subr.mxu0 0.0
        %1583 = vmatpush1.msra.mxu0 0.0
        %1584 = vmatprep.subr.mxu0 0.0
        %1585 = vmatpush1.msra.mxu0 0.0
        %1586 = vmatprep.subr.mxu0 0.0
        %1587 = vmatpush1.msra.mxu0 0.0
        %1588 = vmatprep.subr.mxu0 0.0
        %1589 = vmatpush1.msra.mxu0 0.0
        %1590 = vmatprep.subr.mxu0 0.0
        %1591 = vmatpush1.msra.mxu0 0.0
        %1592 = vmatprep.subr.mxu0 0.0
        %1593 = vmatpush1.msra.mxu0 0.0
        %1594 = vmatprep.subr.mxu0 0.0
        %1595 = vmatpush1.msra.mxu0 0.0
        %1596 = vmatprep.subr.mxu0 0.0
        %1597 = vmatpush1.msra.mxu0 0.0
        %1598 = vmatprep.mubr.f32.mxu0 0.0
        %1599 = vmatmul.mubr.f32.gmra.mrb[0].mxu0 %v1532
        %v1600 = vpop.f32.mrb[0].mxu0
        %v1601 = vadd.f32 0.0, %v1600
        %v1602 = vpop.f32.mrb[0].mxu0
        %1603 = vdwg.mxu0
        %v1605 = vsel %vm977, %v1139, 0
        %1607 = vmatprep.subr.mxu0 0.0
        %1608 = vmatpush1.msra.mxu0 %v1140
        %1609 = vmatprep.subr.mxu0 0.0
        %1610 = vmatpush1.msra.mxu0 %v1141
        %1611 = vmatprep.subr.mxu0 0.0
        %1612 = vmatpush1.msra.mxu0 0.0
        %1613 = vmatprep.subr.mxu0 0.0
        %1614 = vmatpush1.msra.mxu0 0.0
        %1615 = vmatprep.subr.mxu0 0.0
        %1616 = vmatpush1.msra.mxu0 0.0
        %1617 = vmatprep.subr.mxu0 0.0
        %1618 = vmatpush1.msra.mxu0 0.0
        %1619 = vmatprep.subr.mxu0 0.0
        %1620 = vmatpush1.msra.mxu0 0.0
        %1621 = vmatprep.subr.mxu0 0.0
        %1622 = vmatpush1.msra.mxu0 0.0
        %1623 = vmatprep.subr.mxu0 0.0
        %1624 = vmatpush1.msra.mxu0 0.0
        %1625 = vmatprep.subr.mxu0 0.0
        %1626 = vmatpush1.msra.mxu0 0.0
        %1627 = vmatprep.subr.mxu0 0.0
        %1628 = vmatpush1.msra.mxu0 0.0
        %1629 = vmatprep.subr.mxu0 0.0
        %1630 = vmatpush1.msra.mxu0 0.0
        %1631 = vmatprep.subr.mxu0 0.0
        %1632 = vmatpush1.msra.mxu0 0.0
        %1633 = vmatprep.subr.mxu0 0.0
        %1634 = vmatpush1.msra.mxu0 0.0
        %1635 = vmatprep.subr.mxu0 0.0
        %1636 = vmatpush1.msra.mxu0 0.0
        %1637 = vmatprep.subr.mxu0 0.0
        %1638 = vmatpush1.msra.mxu0 0.0
        %1639 = vmatprep.subr.mxu0 0.0
        %1640 = vmatpush1.msra.mxu0 0.0
        %1641 = vmatprep.subr.mxu0 0.0
        %1642 = vmatpush1.msra.mxu0 0.0
        %1643 = vmatprep.subr.mxu0 0.0
        %1644 = vmatpush1.msra.mxu0 0.0
        %1645 = vmatprep.subr.mxu0 0.0
        %1646 = vmatpush1.msra.mxu0 0.0
        %1647 = vmatprep.subr.mxu0 0.0
        %1648 = vmatpush1.msra.mxu0 0.0
        %1649 = vmatprep.subr.mxu0 0.0
        %1650 = vmatpush1.msra.mxu0 0.0
        %1651 = vmatprep.subr.mxu0 0.0
        %1652 = vmatpush1.msra.mxu0 0.0
        %1653 = vmatprep.subr.mxu0 0.0
        %1654 = vmatpush1.msra.mxu0 0.0
        %1655 = vmatprep.subr.mxu0 0.0
        %1656 = vmatpush1.msra.mxu0 0.0
        %1657 = vmatprep.subr.mxu0 0.0
        %1658 = vmatpush1.msra.mxu0 0.0
        %1659 = vmatprep.subr.mxu0 0.0
        %1660 = vmatpush1.msra.mxu0 0.0
        %1661 = vmatprep.subr.mxu0 0.0
        %1662 = vmatpush1.msra.mxu0 0.0
        %1663 = vmatprep.subr.mxu0 0.0
        %1664 = vmatpush1.msra.mxu0 0.0
        %1665 = vmatprep.subr.mxu0 0.0
        %1666 = vmatpush1.msra.mxu0 0.0
        %1667 = vmatprep.subr.mxu0 0.0
        %1668 = vmatpush1.msra.mxu0 0.0
        %1669 = vmatprep.subr.mxu0 0.0
        %1670 = vmatpush1.msra.mxu0 0.0
        %1671 = vmatprep.mubr.f32.mxu0 0.0
        %1672 = vmatmul.mubr.f32.gmra.mrb[0].mxu0 %v1605
        %v1673 = vpop.f32.mrb[0].mxu0
        %v1674 = vadd.f32 %v1601, %v1673
        %v1675 = vpop.f32.mrb[0].mxu0
        %1676 = vdwg.mxu0
        %s1677 = scalar_lea.vmem [#allocation7], 64
        %v1678 = vld [vmem:[%s1677] sm:$0xff]
        %v1679 = vld [vmem:[%s1677 + $0x8] sm:$0xff]
        %v1680 = vld [vmem:[%s1677 + $0x10] sm:$0xff]
        %v1681 = vld [vmem:[%s1677 + $0x18] sm:$0xff]
        %1682 = vmatprep.subr.mxu0 0.0
        %1683 = vmatpush1.msra.mxu0 %v1678
        %1684 = vmatprep.subr.mxu0 0.0
        %1685 = vmatpush1.msra.mxu0 %v1679
        %1686 = vmatprep.subr.mxu0 0.0
        %1687 = vmatpush1.msra.mxu0 %v1680
        %1688 = vmatprep.subr.mxu0 0.0
        %1689 = vmatpush1.msra.mxu0 %v1681
        %1690 = vmatprep.subr.mxu0 0.0
        %1691 = vmatpush1.msra.mxu0 0.0
        %1692 = vmatprep.subr.mxu0 0.0
        %1693 = vmatpush1.msra.mxu0 0.0
        %1694 = vmatprep.subr.mxu0 0.0
        %1695 = vmatpush1.msra.mxu0 0.0
        %1696 = vmatprep.subr.mxu0 0.0
        %1697 = vmatpush1.msra.mxu0 0.0
        %1698 = vmatprep.subr.mxu0 0.0
        %1699 = vmatpush1.msra.mxu0 0.0
        %1700 = vmatprep.subr.mxu0 0.0
        %1701 = vmatpush1.msra.mxu0 0.0
        %1702 = vmatprep.subr.mxu0 0.0
        %1703 = vmatpush1.msra.mxu0 0.0
        %1704 = vmatprep.subr.mxu0 0.0
        %1705 = vmatpush1.msra.mxu0 0.0
        %1706 = vmatprep.subr.mxu0 0.0
        %1707 = vmatpush1.msra.mxu0 0.0
        %1708 = vmatprep.subr.mxu0 0.0
        %1709 = vmatpush1.msra.mxu0 0.0
        %1710 = vmatprep.subr.mxu0 0.0
        %1711 = vmatpush1.msra.mxu0 0.0
        %1712 = vmatprep.subr.mxu0 0.0
        %1713 = vmatpush1.msra.mxu0 0.0
        %1714 = vmatprep.subr.mxu0 0.0
        %1715 = vmatpush1.msra.mxu0 0.0
        %1716 = vmatprep.subr.mxu0 0.0
        %1717 = vmatpush1.msra.mxu0 0.0
        %1718 = vmatprep.subr.mxu0 0.0
        %1719 = vmatpush1.msra.mxu0 0.0
        %1720 = vmatprep.subr.mxu0 0.0
        %1721 = vmatpush1.msra.mxu0 0.0
        %1722 = vmatprep.subr.mxu0 0.0
        %1723 = vmatpush1.msra.mxu0 0.0
        %1724 = vmatprep.subr.mxu0 0.0
        %1725 = vmatpush1.msra.mxu0 0.0
        %1726 = vmatprep.subr.mxu0 0.0
        %1727 = vmatpush1.msra.mxu0 0.0
        %1728 = vmatprep.subr.mxu0 0.0
        %1729 = vmatpush1.msra.mxu0 0.0
        %1730 = vmatprep.subr.mxu0 0.0
        %1731 = vmatpush1.msra.mxu0 0.0
        %1732 = vmatprep.subr.mxu0 0.0
        %1733 = vmatpush1.msra.mxu0 0.0
        %1734 = vmatprep.subr.mxu0 0.0
        %1735 = vmatpush1.msra.mxu0 0.0
        %1736 = vmatprep.subr.mxu0 0.0
        %1737 = vmatpush1.msra.mxu0 0.0
        %1738 = vmatprep.subr.mxu0 0.0
        %1739 = vmatpush1.msra.mxu0 0.0
        %1740 = vmatprep.subr.mxu0 0.0
        %1741 = vmatpush1.msra.mxu0 0.0
        %1742 = vmatprep.subr.mxu0 0.0
        %1743 = vmatpush1.msra.mxu0 0.0
        %1744 = vmatprep.subr.mxu0 0.0
        %1745 = vmatpush1.msra.mxu0 0.0
        %1746 = vmatprep.mubr.f32.mxu0 0.0
        %1747 = vmatmul.mubr.f32.gmra.mrb[0].mxu0 %v754
        %v1748 = vpop.f32.mrb[0].mxu0
        %v1749 = vadd.f32 0.0, %v1748
        %v1750 = vpop.f32.mrb[0].mxu0
        %1751 = vdwg.mxu0
        %s1752 = scalar_lea.vmem [#allocation8], 64
        %v1753 = vld [vmem:[%s1752] sm:$0xff]
        %v1754 = vld [vmem:[%s1752 + $0x8] sm:$0xff]
        %v1755 = vld [vmem:[%s1752 + $0x10] sm:$0xff]
        %v1756 = vld [vmem:[%s1752 + $0x18] sm:$0xff]
        %1757 = vmatprep.subr.mxu0 0.0
        %1758 = vmatpush1.msra.mxu0 %v1753
        %1759 = vmatprep.subr.mxu0 0.0
        %1760 = vmatpush1.msra.mxu0 %v1754
        %1761 = vmatprep.subr.mxu0 0.0
        %1762 = vmatpush1.msra.mxu0 %v1755
        %1763 = vmatprep.subr.mxu0 0.0
        %1764 = vmatpush1.msra.mxu0 %v1756
        %1765 = vmatprep.subr.mxu0 0.0
        %1766 = vmatpush1.msra.mxu0 0.0
        %1767 = vmatprep.subr.mxu0 0.0
        %1768 = vmatpush1.msra.mxu0 0.0
        %1769 = vmatprep.subr.mxu0 0.0
        %1770 = vmatpush1.msra.mxu0 0.0
        %1771 = vmatprep.subr.mxu0 0.0
        %1772 = vmatpush1.msra.mxu0 0.0
        %1773 = vmatprep.subr.mxu0 0.0
        %1774 = vmatpush1.msra.mxu0 0.0
        %1775 = vmatprep.subr.mxu0 0.0
        %1776 = vmatpush1.msra.mxu0 0.0
        %1777 = vmatprep.subr.mxu0 0.0
        %1778 = vmatpush1.msra.mxu0 0.0
        %1779 = vmatprep.subr.mxu0 0.0
        %1780 = vmatpush1.msra.mxu0 0.0
        %1781 = vmatprep.subr.mxu0 0.0
        %1782 = vmatpush1.msra.mxu0 0.0
        %1783 = vmatprep.subr.mxu0 0.0
        %1784 = vmatpush1.msra.mxu0 0.0
        %1785 = vmatprep.subr.mxu0 0.0
        %1786 = vmatpush1.msra.mxu0 0.0
        %1787 = vmatprep.subr.mxu0 0.0
        %1788 = vmatpush1.msra.mxu0 0.0
        %1789 = vmatprep.subr.mxu0 0.0
        %1790 = vmatpush1.msra.mxu0 0.0
        %1791 = vmatprep.subr.mxu0 0.0
        %1792 = vmatpush1.msra.mxu0 0.0
        %1793 = vmatprep.subr.mxu0 0.0
        %1794 = vmatpush1.msra.mxu0 0.0
        %1795 = vmatprep.subr.mxu0 0.0
        %1796 = vmatpush1.msra.mxu0 0.0
        %1797 = vmatprep.subr.mxu0 0.0
        %1798 = vmatpush1.msra.mxu0 0.0
        %1799 = vmatprep.subr.mxu0 0.0
        %1800 = vmatpush1.msra.mxu0 0.0
        %1801 = vmatprep.subr.mxu0 0.0
        %1802 = vmatpush1.msra.mxu0 0.0
        %1803 = vmatprep.subr.mxu0 0.0
        %1804 = vmatpush1.msra.mxu0 0.0
        %1805 = vmatprep.subr.mxu0 0.0
        %1806 = vmatpush1.msra.mxu0 0.0
        %1807 = vmatprep.subr.mxu0 0.0
        %1808 = vmatpush1.msra.mxu0 0.0
        %1809 = vmatprep.subr.mxu0 0.0
        %1810 = vmatpush1.msra.mxu0 0.0
        %1811 = vmatprep.subr.mxu0 0.0
        %1812 = vmatpush1.msra.mxu0 0.0
        %1813 = vmatprep.subr.mxu0 0.0
        %1814 = vmatpush1.msra.mxu0 0.0
        %1815 = vmatprep.subr.mxu0 0.0
        %1816 = vmatpush1.msra.mxu0 0.0
        %1817 = vmatprep.subr.mxu0 0.0
        %1818 = vmatpush1.msra.mxu0 0.0
        %1819 = vmatprep.subr.mxu0 0.0
        %1820 = vmatpush1.msra.mxu0 0.0
        %1821 = vmatprep.mubr.f32.mxu0 0.0
        %1822 = vmatmul.mubr.f32.gmra.mrb[0].mxu0 %v831
        %v1823 = vpop.f32.mrb[0].mxu0
        %v1824 = vadd.f32 0.0, %v1823
        %v1825 = vpop.f32.mrb[0].mxu0
        %1826 = vdwg.mxu0
        %s1827 = scalar_lea.vmem [#allocation10], 64
        %v1828 = vld [vmem:[%s1827] sm:$0xff]
        %v1829 = vld [vmem:[%s1827 + $0x8] sm:$0xff]
        %v1830 = vld [vmem:[%s1827 + $0x10] sm:$0xff]
        %v1831 = vld [vmem:[%s1827 + $0x18] sm:$0xff]
        %1832 = vmatprep.subr.mxu0 0.0
        %1833 = vmatpush1.msra.mxu0 %v1828
        %1834 = vmatprep.subr.mxu0 0.0
        %1835 = vmatpush1.msra.mxu0 %v1829
        %1836 = vmatprep.subr.mxu0 0.0
        %1837 = vmatpush1.msra.mxu0 %v1830
        %1838 = vmatprep.subr.mxu0 0.0
        %1839 = vmatpush1.msra.mxu0 %v1831
        %1840 = vmatprep.subr.mxu0 0.0
        %1841 = vmatpush1.msra.mxu0 0.0
        %1842 = vmatprep.subr.mxu0 0.0
        %1843 = vmatpush1.msra.mxu0 0.0
        %1844 = vmatprep.subr.mxu0 0.0
        %1845 = vmatpush1.msra.mxu0 0.0
        %1846 = vmatprep.subr.mxu0 0.0
        %1847 = vmatpush1.msra.mxu0 0.0
        %1848 = vmatprep.subr.mxu0 0.0
        %1849 = vmatpush1.msra.mxu0 0.0
        %1850 = vmatprep.subr.mxu0 0.0
        %1851 = vmatpush1.msra.mxu0 0.0
        %1852 = vmatprep.subr.mxu0 0.0
        %1853 = vmatpush1.msra.mxu0 0.0
        %1854 = vmatprep.subr.mxu0 0.0
        %1855 = vmatpush1.msra.mxu0 0.0
        %1856 = vmatprep.subr.mxu0 0.0
        %1857 = vmatpush1.msra.mxu0 0.0
        %1858 = vmatprep.subr.mxu0 0.0
        %1859 = vmatpush1.msra.mxu0 0.0
        %1860 = vmatprep.subr.mxu0 0.0
        %1861 = vmatpush1.msra.mxu0 0.0
        %1862 = vmatprep.subr.mxu0 0.0
        %1863 = vmatpush1.msra.mxu0 0.0
        %1864 = vmatprep.subr.mxu0 0.0
        %1865 = vmatpush1.msra.mxu0 0.0
        %1866 = vmatprep.subr.mxu0 0.0
        %1867 = vmatpush1.msra.mxu0 0.0
        %1868 = vmatprep.subr.mxu0 0.0
        %1869 = vmatpush1.msra.mxu0 0.0
        %1870 = vmatprep.subr.mxu0 0.0
        %1871 = vmatpush1.msra.mxu0 0.0
        %1872 = vmatprep.subr.mxu0 0.0
        %1873 = vmatpush1.msra.mxu0 0.0
        %1874 = vmatprep.subr.mxu0 0.0
        %1875 = vmatpush1.msra.mxu0 0.0
        %1876 = vmatprep.subr.mxu0 0.0
        %1877 = vmatpush1.msra.mxu0 0.0
        %1878 = vmatprep.subr.mxu0 0.0
        %1879 = vmatpush1.msra.mxu0 0.0
        %1880 = vmatprep.subr.mxu0 0.0
        %1881 = vmatpush1.msra.mxu0 0.0
        %1882 = vmatprep.subr.mxu0 0.0
        %1883 = vmatpush1.msra.mxu0 0.0
        %1884 = vmatprep.subr.mxu0 0.0
        %1885 = vmatpush1.msra.mxu0 0.0
        %1886 = vmatprep.subr.mxu0 0.0
        %1887 = vmatpush1.msra.mxu0 0.0
        %1888 = vmatprep.subr.mxu0 0.0
        %1889 = vmatpush1.msra.mxu0 0.0
        %1890 = vmatprep.subr.mxu0 0.0
        %1891 = vmatpush1.msra.mxu0 0.0
        %1892 = vmatprep.subr.mxu0 0.0
        %1893 = vmatpush1.msra.mxu0 0.0
        %1894 = vmatprep.subr.mxu0 0.0
        %1895 = vmatpush1.msra.mxu0 0.0
        %1896 = vmatprep.mubr.f32.mxu0 0.0
        %1897 = vmatmul.mubr.f32.gmra.mrb[0].mxu0 %v831
        %v1898 = vpop.f32.mrb[0].mxu0
        %v1899 = vadd.f32 0.0, %v1898
        %v1900 = vpop.f32.mrb[0].mxu0
        %1901 = vdwg.mxu0
        %v1903 = vsel %vm977, %v1749, 0
        %v1906 = vsel %vm977, %v1824, 0
        %1908 = vmatprep.subr.mxu0 0.0
        %1909 = vmatpush1.xpose.msra.mxu0 %v1906
        %1910 = vmatprep.subr.mxu0 0.0
        %1911 = vmatpush1.xpose.msra.mxu0 0.0
        %1912 = vmatprep.subr.mxu0 0.0
        %1913 = vmatpush1.xpose.msra.mxu0 0.0
        %1914 = vmatprep.subr.mxu0 0.0
        %1915 = vmatpush1.xpose.msra.mxu0 0.0
        %1916 = vmatprep.subr.mxu0 0.0
        %1917 = vmatpush1.xpose.msra.mxu0 0.0
        %1918 = vmatprep.subr.mxu0 0.0
        %1919 = vmatpush1.xpose.msra.mxu0 0.0
        %1920 = vmatprep.subr.mxu0 0.0
        %1921 = vmatpush1.xpose.msra.mxu0 0.0
        %1922 = vmatprep.subr.mxu0 0.0
        %1923 = vmatpush1.xpose.msra.mxu0 0.0
        %1924 = vmatprep.subr.mxu0 0.0
        %1925 = vmatpush1.xpose.msra.mxu0 0.0
        %1926 = vmatprep.subr.mxu0 0.0
        %1927 = vmatpush1.xpose.msra.mxu0 0.0
        %1928 = vmatprep.subr.mxu0 0.0
        %1929 = vmatpush1.xpose.msra.mxu0 0.0
        %1930 = vmatprep.subr.mxu0 0.0
        %1931 = vmatpush1.xpose.msra.mxu0 0.0
        %1932 = vmatprep.subr.mxu0 0.0
        %1933 = vmatpush1.xpose.msra.mxu0 0.0
        %1934 = vmatprep.subr.mxu0 0.0
        %1935 = vmatpush1.xpose.msra.mxu0 0.0
        %1936 = vmatprep.subr.mxu0 0.0
        %1937 = vmatpush1.xpose.msra.mxu0 0.0
        %1938 = vmatprep.subr.mxu0 0.0
        %1939 = vmatpush1.xpose.msra.mxu0 0.0
        %1940 = vmatprep.subr.mxu0 0.0
        %1941 = vmatpush1.xpose.msra.mxu0 0.0
        %1942 = vmatprep.subr.mxu0 0.0
        %1943 = vmatpush1.xpose.msra.mxu0 0.0
        %1944 = vmatprep.subr.mxu0 0.0
        %1945 = vmatpush1.xpose.msra.mxu0 0.0
        %1946 = vmatprep.subr.mxu0 0.0
        %1947 = vmatpush1.xpose.msra.mxu0 0.0
        %1948 = vmatprep.subr.mxu0 0.0
        %1949 = vmatpush1.xpose.msra.mxu0 0.0
        %1950 = vmatprep.subr.mxu0 0.0
        %1951 = vmatpush1.xpose.msra.mxu0 0.0
        %1952 = vmatprep.subr.mxu0 0.0
        %1953 = vmatpush1.xpose.msra.mxu0 0.0
        %1954 = vmatprep.subr.mxu0 0.0
        %1955 = vmatpush1.xpose.msra.mxu0 0.0
        %1956 = vmatprep.subr.mxu0 0.0
        %1957 = vmatpush1.xpose.msra.mxu0 0.0
        %1958 = vmatprep.subr.mxu0 0.0
        %1959 = vmatpush1.xpose.msra.mxu0 0.0
        %1960 = vmatprep.subr.mxu0 0.0
        %1961 = vmatpush1.xpose.msra.mxu0 0.0
        %1962 = vmatprep.subr.mxu0 0.0
        %1963 = vmatpush1.xpose.msra.mxu0 0.0
        %1964 = vmatprep.subr.mxu0 0.0
        %1965 = vmatpush1.xpose.msra.mxu0 0.0
        %1966 = vmatprep.subr.mxu0 0.0
        %1967 = vmatpush1.xpose.msra.mxu0 0.0
        %1968 = vmatprep.subr.mxu0 0.0
        %1969 = vmatpush1.xpose.msra.mxu0 0.0
        %1970 = vmatprep.subr.mxu0 0.0
        %1971 = vmatpush1.xpose.msra.mxu0 0.0
        %1972 = vmatprep.mubr.f32.mxu0 0.0
        %1973 = vmatmul.mubr.f32.gmra.mrb[0].mxu0 %v1903
        %v1974 = vpop.f32.mrb[0].mxu0
        %v1975 = vadd.f32 0.0, %v1974
        %v1976 = vpop.f32.mrb[0].mxu0
        %1977 = vdwg.mxu0
        %v1978 = vsel %vm747, %v1975, -1e+30
        %v1979 = vsel %vm1055, %v1978, -inf
        %1980 = vmax.xlane.f32.xlu0 %v1979
        %v1981 = vpop.xlane.xlu0 %1980
        %v1982 = vsub.f32 %v1978, %v1981
        %v1983 = vmul.f32 %v1982, 1.442695
        %v1984 = vpow.pop %v1983
        %v1985 = vsel %vm1055, %v1984, 0.0
        %1986 = vadd.xlane.f32.xlu0 %v1985
        %v1987 = vpop.xlane.xlu0 %1986
        %v1988 = vrcp.pop %v1987
        %v1990 = vsel %vm1055, %v1984, 0
        %1992 = vmatprep.subr.mxu0 0.0
        %1993 = vmatpush1.msra.mxu0 %v1899
        %1994 = vmatprep.subr.mxu0 0.0
        %1995 = vmatpush1.msra.mxu0 0.0
        %1996 = vmatprep.subr.mxu0 0.0
        %1997 = vmatpush1.msra.mxu0 0.0
        %1998 = vmatprep.subr.mxu0 0.0
        %1999 = vmatpush1.msra.mxu0 0.0
        %2000 = vmatprep.subr.mxu0 0.0
        %2001 = vmatpush1.msra.mxu0 0.0
        %2002 = vmatprep.subr.mxu0 0.0
        %2003 = vmatpush1.msra.mxu0 0.0
        %2004 = vmatprep.subr.mxu0 0.0
        %2005 = vmatpush1.msra.mxu0 0.0
        %2006 = vmatprep.subr.mxu0 0.0
        %2007 = vmatpush1.msra.mxu0 0.0
        %2008 = vmatprep.subr.mxu0 0.0
        %2009 = vmatpush1.msra.mxu0 0.0
        %2010 = vmatprep.subr.mxu0 0.0
        %2011 = vmatpush1.msra.mxu0 0.0
        %2012 = vmatprep.subr.mxu0 0.0
        %2013 = vmatpush1.msra.mxu0 0.0
        %2014 = vmatprep.subr.mxu0 0.0
        %2015 = vmatpush1.msra.mxu0 0.0
        %2016 = vmatprep.subr.mxu0 0.0
        %2017 = vmatpush1.msra.mxu0 0.0
        %2018 = vmatprep.subr.mxu0 0.0
        %2019 = vmatpush1.msra.mxu0 0.0
        %2020 = vmatprep.subr.mxu0 0.0
        %2021 = vmatpush1.msra.mxu0 0.0
        %2022 = vmatprep.subr.mxu0 0.0
        %2023 = vmatpush1.msra.mxu0 0.0
        %2024 = vmatprep.subr.mxu0 0.0
        %2025 = vmatpush1.msra.mxu0 0.0
        %2026 = vmatprep.subr.mxu0 0.0
        %2027 = vmatpush1.msra.mxu0 0.0
        %2028 = vmatprep.subr.mxu0 0.0
        %2029 = vmatpush1.msra.mxu0 0.0
        %2030 = vmatprep.subr.mxu0 0.0
        %2031 = vmatpush1.msra.mxu0 0.0
        %2032 = vmatprep.subr.mxu0 0.0
        %2033 = vmatpush1.msra.mxu0 0.0
        %2034 = vmatprep.subr.mxu0 0.0
        %2035 = vmatpush1.msra.mxu0 0.0
        %2036 = vmatprep.subr.mxu0 0.0
        %2037 = vmatpush1.msra.mxu0 0.0
        %2038 = vmatprep.subr.mxu0 0.0
        %2039 = vmatpush1.msra.mxu0 0.0
        %2040 = vmatprep.subr.mxu0 0.0
        %2041 = vmatpush1.msra.mxu0 0.0
        %2042 = vmatprep.subr.mxu0 0.0
        %2043 = vmatpush1.msra.mxu0 0.0
        %2044 = vmatprep.subr.mxu0 0.0
        %2045 = vmatpush1.msra.mxu0 0.0
        %2046 = vmatprep.subr.mxu0 0.0
        %2047 = vmatpush1.msra.mxu0 0.0
        %2048 = vmatprep.subr.mxu0 0.0
        %2049 = vmatpush1.msra.mxu0 0.0
        %2050 = vmatprep.subr.mxu0 0.0
        %2051 = vmatpush1.msra.mxu0 0.0
        %2052 = vmatprep.subr.mxu0 0.0
        %2053 = vmatpush1.msra.mxu0 0.0
        %2054 = vmatprep.subr.mxu0 0.0
        %2055 = vmatpush1.msra.mxu0 0.0
        %2056 = vmatprep.mubr.f32.mxu0 0.0
        %2057 = vmatmul.mubr.f32.gmra.mrb[0].mxu0 %v1990
        %v2058 = vpop.f32.mrb[0].mxu0
        %v2059 = vadd.f32 0.0, %v2058
        %v2060 = vpop.f32.mrb[0].mxu0
        %2061 = vdwg.mxu0
        %v2062 = vmul.f32 %v2059, %v1988
        %s2063 = scalar_lea.vmem [#allocation11], 32
        %v2064 = vld [vmem:[%s2063] sm:$0xff]
        %v2065 = vld [vmem:[%s2063 + $0x8] sm:$0xff]
        %v2067 = vsel %vm977, %v2062, 0
        %2069 = vmatprep.subr.mxu0 0.0
        %2070 = vmatpush1.msra.mxu0 %v2064
        %2071 = vmatprep.subr.mxu0 0.0
        %2072 = vmatpush1.msra.mxu0 %v2065
        %2073 = vmatprep.subr.mxu0 0.0
        %2074 = vmatpush1.msra.mxu0 0.0
        %2075 = vmatprep.subr.mxu0 0.0
        %2076 = vmatpush1.msra.mxu0 0.0
        %2077 = vmatprep.subr.mxu0 0.0
        %2078 = vmatpush1.msra.mxu0 0.0
        %2079 = vmatprep.subr.mxu0 0.0
        %2080 = vmatpush1.msra.mxu0 0.0
        %2081 = vmatprep.subr.mxu0 0.0
        %2082 = vmatpush1.msra.mxu0 0.0
        %2083 = vmatprep.subr.mxu0 0.0
        %2084 = vmatpush1.msra.mxu0 0.0
        %2085 = vmatprep.subr.mxu0 0.0
        %2086 = vmatpush1.msra.mxu0 0.0
        %2087 = vmatprep.subr.mxu0 0.0
        %2088 = vmatpush1.msra.mxu0 0.0
        %2089 = vmatprep.subr.mxu0 0.0
        %2090 = vmatpush1.msra.mxu0 0.0
        %2091 = vmatprep.subr.mxu0 0.0
        %2092 = vmatpush1.msra.mxu0 0.0
        %2093 = vmatprep.subr.mxu0 0.0
        %2094 = vmatpush1.msra.mxu0 0.0
        %2095 = vmatprep.subr.mxu0 0.0
        %2096 = vmatpush1.msra.mxu0 0.0
        %2097 = vmatprep.subr.mxu0 0.0
        %2098 = vmatpush1.msra.mxu0 0.0
        %2099 = vmatprep.subr.mxu0 0.0
        %2100 = vmatpush1.msra.mxu0 0.0
        %2101 = vmatprep.subr.mxu0 0.0
        %2102 = vmatpush1.msra.mxu0 0.0
        %2103 = vmatprep.subr.mxu0 0.0
        %2104 = vmatpush1.msra.mxu0 0.0
        %2105 = vmatprep.subr.mxu0 0.0
        %2106 = vmatpush1.msra.mxu0 0.0
        %2107 = vmatprep.subr.mxu0 0.0
        %2108 = vmatpush1.msra.mxu0 0.0
        %2109 = vmatprep.subr.mxu0 0.0
        %2110 = vmatpush1.msra.mxu0 0.0
        %2111 = vmatprep.subr.mxu0 0.0
        %2112 = vmatpush1.msra.mxu0 0.0
        %2113 = vmatprep.subr.mxu0 0.0
        %2114 = vmatpush1.msra.mxu0 0.0
        %2115 = vmatprep.subr.mxu0 0.0
        %2116 = vmatpush1.msra.mxu0 0.0
        %2117 = vmatprep.subr.mxu0 0.0
        %2118 = vmatpush1.msra.mxu0 0.0
        %2119 = vmatprep.subr.mxu0 0.0
        %2120 = vmatpush1.msra.mxu0 0.0
        %2121 = vmatprep.subr.mxu0 0.0
        %2122 = vmatpush1.msra.mxu0 0.0
        %2123 = vmatprep.subr.mxu0 0.0
        %2124 = vmatpush1.msra.mxu0 0.0
        %2125 = vmatprep.subr.mxu0 0.0
        %2126 = vmatpush1.msra.mxu0 0.0
        %2127 = vmatprep.subr.mxu0 0.0
        %2128 = vmatpush1.msra.mxu0 0.0
        %2129 = vmatprep.subr.mxu0 0.0
        %2130 = vmatpush1.msra.mxu0 0.0
        %2131 = vmatprep.subr.mxu0 0.0
        %2132 = vmatpush1.msra.mxu0 0.0
        %2133 = vmatprep.mubr.f32.mxu0 0.0
        %2134 = vmatmul.mubr.f32.gmra.mrb[0].mxu0 %v2067
        %v2135 = vpop.f32.mrb[0].mxu0
        %v2136 = vadd.f32 0.0, %v2135
        %v2137 = vpop.f32.mrb[0].mxu0
        %2138 = vdwg.mxu0
        %v2139 = vadd.f32 %v1674, %v2136
        %s2140 = scalar_lea.vmem [#allocation7], 96
        %v2141 = vld [vmem:[%s2140] sm:$0xff]
        %v2142 = vld [vmem:[%s2140 + $0x8] sm:$0xff]
        %v2143 = vld [vmem:[%s2140 + $0x10] sm:$0xff]
        %v2144 = vld [vmem:[%s2140 + $0x18] sm:$0xff]
        %2145 = vmatprep.subr.mxu0 0.0
        %2146 = vmatpush1.msra.mxu0 %v2141
        %2147 = vmatprep.subr.mxu0 0.0
        %2148 = vmatpush1.msra.mxu0 %v2142
        %2149 = vmatprep.subr.mxu0 0.0
        %2150 = vmatpush1.msra.mxu0 %v2143
        %2151 = vmatprep.subr.mxu0 0.0
        %2152 = vmatpush1.msra.mxu0 %v2144
        %2153 = vmatprep.subr.mxu0 0.0
        %2154 = vmatpush1.msra.mxu0 0.0
        %2155 = vmatprep.subr.mxu0 0.0
        %2156 = vmatpush1.msra.mxu0 0.0
        %2157 = vmatprep.subr.mxu0 0.0
        %2158 = vmatpush1.msra.mxu0 0.0
        %2159 = vmatprep.subr.mxu0 0.0
        %2160 = vmatpush1.msra.mxu0 0.0
        %2161 = vmatprep.subr.mxu0 0.0
        %2162 = vmatpush1.msra.mxu0 0.0
        %2163 = vmatprep.subr.mxu0 0.0
        %2164 = vmatpush1.msra.mxu0 0.0
        %2165 = vmatprep.subr.mxu0 0.0
        %2166 = vmatpush1.msra.mxu0 0.0
        %2167 = vmatprep.subr.mxu0 0.0
        %2168 = vmatpush1.msra.mxu0 0.0
        %2169 = vmatprep.subr.mxu0 0.0
        %2170 = vmatpush1.msra.mxu0 0.0
        %2171 = vmatprep.subr.mxu0 0.0
        %2172 = vmatpush1.msra.mxu0 0.0
        %2173 = vmatprep.subr.mxu0 0.0
        %2174 = vmatpush1.msra.mxu0 0.0
        %2175 = vmatprep.subr.mxu0 0.0
        %2176 = vmatpush1.msra.mxu0 0.0
        %2177 = vmatprep.subr.mxu0 0.0
        %2178 = vmatpush1.msra.mxu0 0.0
        %2179 = vmatprep.subr.mxu0 0.0
        %2180 = vmatpush1.msra.mxu0 0.0
        %2181 = vmatprep.subr.mxu0 0.0
        %2182 = vmatpush1.msra.mxu0 0.0
        %2183 = vmatprep.subr.mxu0 0.0
        %2184 = vmatpush1.msra.mxu0 0.0
        %2185 = vmatprep.subr.mxu0 0.0
        %2186 = vmatpush1.msra.mxu0 0.0
        %2187 = vmatprep.subr.mxu0 0.0
        %2188 = vmatpush1.msra.mxu0 0.0
        %2189 = vmatprep.subr.mxu0 0.0
        %2190 = vmatpush1.msra.mxu0 0.0
        %2191 = vmatprep.subr.mxu0 0.0
        %2192 = vmatpush1.msra.mxu0 0.0
        %2193 = vmatprep.subr.mxu0 0.0
        %2194 = vmatpush1.msra.mxu0 0.0
        %2195 = vmatprep.subr.mxu0 0.0
        %2196 = vmatpush1.msra.mxu0 0.0
        %2197 = vmatprep.subr.mxu0 0.0
        %2198 = vmatpush1.msra.mxu0 0.0
        %2199 = vmatprep.subr.mxu0 0.0
        %2200 = vmatpush1.msra.mxu0 0.0
        %2201 = vmatprep.subr.mxu0 0.0
        %2202 = vmatpush1.msra.mxu0 0.0
        %2203 = vmatprep.subr.mxu0 0.0
        %2204 = vmatpush1.msra.mxu0 0.0
        %2205 = vmatprep.subr.mxu0 0.0
        %2206 = vmatpush1.msra.mxu0 0.0
        %2207 = vmatprep.subr.mxu0 0.0
        %2208 = vmatpush1.msra.mxu0 0.0
        %2209 = vmatprep.mubr.f32.mxu0 0.0
        %2210 = vmatmul.mubr.f32.gmra.mrb[0].mxu0 %v754
        %v2211 = vpop.f32.mrb[0].mxu0
        %v2212 = vadd.f32 0.0, %v2211
        %v2213 = vpop.f32.mrb[0].mxu0
        %2214 = vdwg.mxu0
        %s2215 = scalar_lea.vmem [#allocation8], 96
        %v2216 = vld [vmem:[%s2215] sm:$0xff]
        %v2217 = vld [vmem:[%s2215 + $0x8] sm:$0xff]
        %v2218 = vld [vmem:[%s2215 + $0x10] sm:$0xff]
        %v2219 = vld [vmem:[%s2215 + $0x18] sm:$0xff]
        %2220 = vmatprep.subr.mxu0 0.0
        %2221 = vmatpush1.msra.mxu0 %v2216
        %2222 = vmatprep.subr.mxu0 0.0
        %2223 = vmatpush1.msra.mxu0 %v2217
        %2224 = vmatprep.subr.mxu0 0.0
        %2225 = vmatpush1.msra.mxu0 %v2218
        %2226 = vmatprep.subr.mxu0 0.0
        %2227 = vmatpush1.msra.mxu0 %v2219
        %2228 = vmatprep.subr.mxu0 0.0
        %2229 = vmatpush1.msra.mxu0 0.0
        %2230 = vmatprep.subr.mxu0 0.0
        %2231 = vmatpush1.msra.mxu0 0.0
        %2232 = vmatprep.subr.mxu0 0.0
        %2233 = vmatpush1.msra.mxu0 0.0
        %2234 = vmatprep.subr.mxu0 0.0
        %2235 = vmatpush1.msra.mxu0 0.0
        %2236 = vmatprep.subr.mxu0 0.0
        %2237 = vmatpush1.msra.mxu0 0.0
        %2238 = vmatprep.subr.mxu0 0.0
        %2239 = vmatpush1.msra.mxu0 0.0
        %2240 = vmatprep.subr.mxu0 0.0
        %2241 = vmatpush1.msra.mxu0 0.0
        %2242 = vmatprep.subr.mxu0 0.0
        %2243 = vmatpush1.msra.mxu0 0.0
        %2244 = vmatprep.subr.mxu0 0.0
        %2245 = vmatpush1.msra.mxu0 0.0
        %2246 = vmatprep.subr.mxu0 0.0
        %2247 = vmatpush1.msra.mxu0 0.0
        %2248 = vmatprep.subr.mxu0 0.0
        %2249 = vmatpush1.msra.mxu0 0.0
        %2250 = vmatprep.subr.mxu0 0.0
        %2251 = vmatpush1.msra.mxu0 0.0
        %2252 = vmatprep.subr.mxu0 0.0
        %2253 = vmatpush1.msra.mxu0 0.0
        %2254 = vmatprep.subr.mxu0 0.0
        %2255 = vmatpush1.msra.mxu0 0.0
        %2256 = vmatprep.subr.mxu0 0.0
        %2257 = vmatpush1.msra.mxu0 0.0
        %2258 = vmatprep.subr.mxu0 0.0
        %2259 = vmatpush1.msra.mxu0 0.0
        %2260 = vmatprep.subr.mxu0 0.0
        %2261 = vmatpush1.msra.mxu0 0.0
        %2262 = vmatprep.subr.mxu0 0.0
        %2263 = vmatpush1.msra.mxu0 0.0
        %2264 = vmatprep.subr.mxu0 0.0
        %2265 = vmatpush1.msra.mxu0 0.0
        %2266 = vmatprep.subr.mxu0 0.0
        %2267 = vmatpush1.msra.mxu0 0.0
        %2268 = vmatprep.subr.mxu0 0.0
        %2269 = vmatpush1.msra.mxu0 0.0
        %2270 = vmatprep.subr.mxu0 0.0
        %2271 = vmatpush1.msra.mxu0 0.0
        %2272 = vmatprep.subr.mxu0 0.0
        %2273 = vmatpush1.msra.mxu0 0.0
        %2274 = vmatprep.subr.mxu0 0.0
        %2275 = vmatpush1.msra.mxu0 0.0
        %2276 = vmatprep.subr.mxu0 0.0
        %2277 = vmatpush1.msra.mxu0 0.0
        %2278 = vmatprep.subr.mxu0 0.0
        %2279 = vmatpush1.msra.mxu0 0.0
        %2280 = vmatprep.subr.mxu0 0.0
        %2281 = vmatpush1.msra.mxu0 0.0
        %2282 = vmatprep.subr.mxu0 0.0
        %2283 = vmatpush1.msra.mxu0 0.0
        %2284 = vmatprep.mubr.f32.mxu0 0.0
        %2285 = vmatmul.mubr.f32.gmra.mrb[0].mxu0 %v831
        %v2286 = vpop.f32.mrb[0].mxu0
        %v2287 = vadd.f32 0.0, %v2286
        %v2288 = vpop.f32.mrb[0].mxu0
        %2289 = vdwg.mxu0
        %s2290 = scalar_lea.vmem [#allocation10], 96
        %v2291 = vld [vmem:[%s2290] sm:$0xff]
        %v2292 = vld [vmem:[%s2290 + $0x8] sm:$0xff]
        %v2293 = vld [vmem:[%s2290 + $0x10] sm:$0xff]
        %v2294 = vld [vmem:[%s2290 + $0x18] sm:$0xff]
        %2295 = vmatprep.subr.mxu0 0.0
        %2296 = vmatpush1.msra.mxu0 %v2291
        %2297 = vmatprep.subr.mxu0 0.0
        %2298 = vmatpush1.msra.mxu0 %v2292
        %2299 = vmatprep.subr.mxu0 0.0
        %2300 = vmatpush1.msra.mxu0 %v2293
        %2301 = vmatprep.subr.mxu0 0.0
        %2302 = vmatpush1.msra.mxu0 %v2294
        %2303 = vmatprep.subr.mxu0 0.0
        %2304 = vmatpush1.msra.mxu0 0.0
        %2305 = vmatprep.subr.mxu0 0.0
        %2306 = vmatpush1.msra.mxu0 0.0
        %2307 = vmatprep.subr.mxu0 0.0
        %2308 = vmatpush1.msra.mxu0 0.0
        %2309 = vmatprep.subr.mxu0 0.0
        %2310 = vmatpush1.msra.mxu0 0.0
        %2311 = vmatprep.subr.mxu0 0.0
        %2312 = vmatpush1.msra.mxu0 0.0
        %2313 = vmatprep.subr.mxu0 0.0
        %2314 = vmatpush1.msra.mxu0 0.0
        %2315 = vmatprep.subr.mxu0 0.0
        %2316 = vmatpush1.msra.mxu0 0.0
        %2317 = vmatprep.subr.mxu0 0.0
        %2318 = vmatpush1.msra.mxu0 0.0
        %2319 = vmatprep.subr.mxu0 0.0
        %2320 = vmatpush1.msra.mxu0 0.0
        %2321 = vmatprep.subr.mxu0 0.0
        %2322 = vmatpush1.msra.mxu0 0.0
        %2323 = vmatprep.subr.mxu0 0.0
        %2324 = vmatpush1.msra.mxu0 0.0
        %2325 = vmatprep.subr.mxu0 0.0
        %2326 = vmatpush1.msra.mxu0 0.0
        %2327 = vmatprep.subr.mxu0 0.0
        %2328 = vmatpush1.msra.mxu0 0.0
        %2329 = vmatprep.subr.mxu0 0.0
        %2330 = vmatpush1.msra.mxu0 0.0
        %2331 = vmatprep.subr.mxu0 0.0
        %2332 = vmatpush1.msra.mxu0 0.0
        %2333 = vmatprep.subr.mxu0 0.0
        %2334 = vmatpush1.msra.mxu0 0.0
        %2335 = vmatprep.subr.mxu0 0.0
        %2336 = vmatpush1.msra.mxu0 0.0
        %2337 = vmatprep.subr.mxu0 0.0
        %2338 = vmatpush1.msra.mxu0 0.0
        %2339 = vmatprep.subr.mxu0 0.0
        %2340 = vmatpush1.msra.mxu0 0.0
        %2341 = vmatprep.subr.mxu0 0.0
        %2342 = vmatpush1.msra.mxu0 0.0
        %2343 = vmatprep.subr.mxu0 0.0
        %2344 = vmatpush1.msra.mxu0 0.0
        %2345 = vmatprep.subr.mxu0 0.0
        %2346 = vmatpush1.msra.mxu0 0.0
        %2347 = vmatprep.subr.mxu0 0.0
        %2348 = vmatpush1.msra.mxu0 0.0
        %2349 = vmatprep.subr.mxu0 0.0
        %2350 = vmatpush1.msra.mxu0 0.0
        %2351 = vmatprep.subr.mxu0 0.0
        %2352 = vmatpush1.msra.mxu0 0.0
        %2353 = vmatprep.subr.mxu0 0.0
        %2354 = vmatpush1.msra.mxu0 0.0
        %2355 = vmatprep.subr.mxu0 0.0
        %2356 = vmatpush1.msra.mxu0 0.0
        %2357 = vmatprep.subr.mxu0 0.0
        %2358 = vmatpush1.msra.mxu0 0.0
        %2359 = vmatprep.mubr.f32.mxu0 0.0
        %2360 = vmatmul.mubr.f32.gmra.mrb[0].mxu0 %v831
        %v2361 = vpop.f32.mrb[0].mxu0
        %v2362 = vadd.f32 0.0, %v2361
        %v2363 = vpop.f32.mrb[0].mxu0
        %2364 = vdwg.mxu0
        %v2366 = vsel %vm977, %v2212, 0
        %v2369 = vsel %vm977, %v2287, 0
        %2371 = vmatprep.subr.mxu0 0.0
        %2372 = vmatpush1.xpose.msra.mxu0 %v2369
        %2373 = vmatprep.subr.mxu0 0.0
        %2374 = vmatpush1.xpose.msra.mxu0 0.0
        %2375 = vmatprep.subr.mxu0 0.0
        %2376 = vmatpush1.xpose.msra.mxu0 0.0
        %2377 = vmatprep.subr.mxu0 0.0
        %2378 = vmatpush1.xpose.msra.mxu0 0.0
        %2379 = vmatprep.subr.mxu0 0.0
        %2380 = vmatpush1.xpose.msra.mxu0 0.0
        %2381 = vmatprep.subr.mxu0 0.0
        %2382 = vmatpush1.xpose.msra.mxu0 0.0
        %2383 = vmatprep.subr.mxu0 0.0
        %2384 = vmatpush1.xpose.msra.mxu0 0.0
        %2385 = vmatprep.subr.mxu0 0.0
        %2386 = vmatpush1.xpose.msra.mxu0 0.0
        %2387 = vmatprep.subr.mxu0 0.0
        %2388 = vmatpush1.xpose.msra.mxu0 0.0
        %2389 = vmatprep.subr.mxu0 0.0
        %2390 = vmatpush1.xpose.msra.mxu0 0.0
        %2391 = vmatprep.subr.mxu0 0.0
        %2392 = vmatpush1.xpose.msra.mxu0 0.0
        %2393 = vmatprep.subr.mxu0 0.0
        %2394 = vmatpush1.xpose.msra.mxu0 0.0
        %2395 = vmatprep.subr.mxu0 0.0
        %2396 = vmatpush1.xpose.msra.mxu0 0.0
        %2397 = vmatprep.subr.mxu0 0.0
        %2398 = vmatpush1.xpose.msra.mxu0 0.0
        %2399 = vmatprep.subr.mxu0 0.0
        %2400 = vmatpush1.xpose.msra.mxu0 0.0
        %2401 = vmatprep.subr.mxu0 0.0
        %2402 = vmatpush1.xpose.msra.mxu0 0.0
        %2403 = vmatprep.subr.mxu0 0.0
        %2404 = vmatpush1.xpose.msra.mxu0 0.0
        %2405 = vmatprep.subr.mxu0 0.0
        %2406 = vmatpush1.xpose.msra.mxu0 0.0
        %2407 = vmatprep.subr.mxu0 0.0
        %2408 = vmatpush1.xpose.msra.mxu0 0.0
        %2409 = vmatprep.subr.mxu0 0.0
        %2410 = vmatpush1.xpose.msra.mxu0 0.0
        %2411 = vmatprep.subr.mxu0 0.0
        %2412 = vmatpush1.xpose.msra.mxu0 0.0
        %2413 = vmatprep.subr.mxu0 0.0
        %2414 = vmatpush1.xpose.msra.mxu0 0.0
        %2415 = vmatprep.subr.mxu0 0.0
        %2416 = vmatpush1.xpose.msra.mxu0 0.0
        %2417 = vmatprep.subr.mxu0 0.0
        %2418 = vmatpush1.xpose.msra.mxu0 0.0
        %2419 = vmatprep.subr.mxu0 0.0
        %2420 = vmatpush1.xpose.msra.mxu0 0.0
        %2421 = vmatprep.subr.mxu0 0.0
        %2422 = vmatpush1.xpose.msra.mxu0 0.0
        %2423 = vmatprep.subr.mxu0 0.0
        %2424 = vmatpush1.xpose.msra.mxu0 0.0
        %2425 = vmatprep.subr.mxu0 0.0
        %2426 = vmatpush1.xpose.msra.mxu0 0.0
        %2427 = vmatprep.subr.mxu0 0.0
        %2428 = vmatpush1.xpose.msra.mxu0 0.0
        %2429 = vmatprep.subr.mxu0 0.0
        %2430 = vmatpush1.xpose.msra.mxu0 0.0
        %2431 = vmatprep.subr.mxu0 0.0
        %2432 = vmatpush1.xpose.msra.mxu0 0.0
        %2433 = vmatprep.subr.mxu0 0.0
        %2434 = vmatpush1.xpose.msra.mxu0 0.0
        %2435 = vmatprep.mubr.f32.mxu0 0.0
        %2436 = vmatmul.mubr.f32.gmra.mrb[0].mxu0 %v2366
        %v2437 = vpop.f32.mrb[0].mxu0
        %v2438 = vadd.f32 0.0, %v2437
        %v2439 = vpop.f32.mrb[0].mxu0
        %2440 = vdwg.mxu0
        %v2441 = vsel %vm747, %v2438, -1e+30
        %v2442 = vsel %vm1055, %v2441, -inf
        %2443 = vmax.xlane.f32.xlu0 %v2442
        %v2444 = vpop.xlane.xlu0 %2443
        %v2445 = vsub.f32 %v2441, %v2444
        %v2446 = vmul.f32 %v2445, 1.442695
        %v2447 = vpow.pop %v2446
        %v2448 = vsel %vm1055, %v2447, 0.0
        %2449 = vadd.xlane.f32.xlu0 %v2448
        %v2450 = vpop.xlane.xlu0 %2449
        %v2451 = vrcp.pop %v2450
        %v2453 = vsel %vm1055, %v2447, 0
        %2455 = vmatprep.subr.mxu0 0.0
        %2456 = vmatpush1.msra.mxu0 %v2362
        %2457 = vmatprep.subr.mxu0 0.0
        %2458 = vmatpush1.msra.mxu0 0.0
        %2459 = vmatprep.subr.mxu0 0.0
        %2460 = vmatpush1.msra.mxu0 0.0
        %2461 = vmatprep.subr.mxu0 0.0
        %2462 = vmatpush1.msra.mxu0 0.0
        %2463 = vmatprep.subr.mxu0 0.0
        %2464 = vmatpush1.msra.mxu0 0.0
        %2465 = vmatprep.subr.mxu0 0.0
        %2466 = vmatpush1.msra.mxu0 0.0
        %2467 = vmatprep.subr.mxu0 0.0
        %2468 = vmatpush1.msra.mxu0 0.0
        %2469 = vmatprep.subr.mxu0 0.0
        %2470 = vmatpush1.msra.mxu0 0.0
        %2471 = vmatprep.subr.mxu0 0.0
        %2472 = vmatpush1.msra.mxu0 0.0
        %2473 = vmatprep.subr.mxu0 0.0
        %2474 = vmatpush1.msra.mxu0 0.0
        %2475 = vmatprep.subr.mxu0 0.0
        %2476 = vmatpush1.msra.mxu0 0.0
        %2477 = vmatprep.subr.mxu0 0.0
        %2478 = vmatpush1.msra.mxu0 0.0
        %2479 = vmatprep.subr.mxu0 0.0
        %2480 = vmatpush1.msra.mxu0 0.0
        %2481 = vmatprep.subr.mxu0 0.0
        %2482 = vmatpush1.msra.mxu0 0.0
        %2483 = vmatprep.subr.mxu0 0.0
        %2484 = vmatpush1.msra.mxu0 0.0
        %2485 = vmatprep.subr.mxu0 0.0
        %2486 = vmatpush1.msra.mxu0 0.0
        %2487 = vmatprep.subr.mxu0 0.0
        %2488 = vmatpush1.msra.mxu0 0.0
        %2489 = vmatprep.subr.mxu0 0.0
        %2490 = vmatpush1.msra.mxu0 0.0
        %2491 = vmatprep.subr.mxu0 0.0
        %2492 = vmatpush1.msra.mxu0 0.0
        %2493 = vmatprep.subr.mxu0 0.0
        %2494 = vmatpush1.msra.mxu0 0.0
        %2495 = vmatprep.subr.mxu0 0.0
        %2496 = vmatpush1.msra.mxu0 0.0
        %2497 = vmatprep.subr.mxu0 0.0
        %2498 = vmatpush1.msra.mxu0 0.0
        %2499 = vmatprep.subr.mxu0 0.0
        %2500 = vmatpush1.msra.mxu0 0.0
        %2501 = vmatprep.subr.mxu0 0.0
        %2502 = vmatpush1.msra.mxu0 0.0
        %2503 = vmatprep.subr.mxu0 0.0
        %2504 = vmatpush1.msra.mxu0 0.0
        %2505 = vmatprep.subr.mxu0 0.0
        %2506 = vmatpush1.msra.mxu0 0.0
        %2507 = vmatprep.subr.mxu0 0.0
        %2508 = vmatpush1.msra.mxu0 0.0
        %2509 = vmatprep.subr.mxu0 0.0
        %2510 = vmatpush1.msra.mxu0 0.0
        %2511 = vmatprep.subr.mxu0 0.0
        %2512 = vmatpush1.msra.mxu0 0.0
        %2513 = vmatprep.subr.mxu0 0.0
        %2514 = vmatpush1.msra.mxu0 0.0
        %2515 = vmatprep.subr.mxu0 0.0
        %2516 = vmatpush1.msra.mxu0 0.0
        %2517 = vmatprep.subr.mxu0 0.0
        %2518 = vmatpush1.msra.mxu0 0.0
        %2519 = vmatprep.mubr.f32.mxu0 0.0
        %2520 = vmatmul.mubr.f32.gmra.mrb[0].mxu0 %v2453
        %v2521 = vpop.f32.mrb[0].mxu0
        %v2522 = vadd.f32 0.0, %v2521
        %v2523 = vpop.f32.mrb[0].mxu0
        %2524 = vdwg.mxu0
        %v2525 = vmul.f32 %v2522, %v2451
        %s2526 = scalar_lea.vmem [#allocation11], 48
        %v2527 = vld [vmem:[%s2526] sm:$0xff]
        %v2528 = vld [vmem:[%s2526 + $0x8] sm:$0xff]
        %v2530 = vsel %vm977, %v2525, 0
        %2532 = vmatprep.subr.mxu0 0.0
        %2533 = vmatpush1.msra.mxu0 %v2527
        %2534 = vmatprep.subr.mxu0 0.0
        %2535 = vmatpush1.msra.mxu0 %v2528
        %2536 = vmatprep.subr.mxu0 0.0
        %2537 = vmatpush1.msra.mxu0 0.0
        %2538 = vmatprep.subr.mxu0 0.0
        %2539 = vmatpush1.msra.mxu0 0.0
        %2540 = vmatprep.subr.mxu0 0.0
        %2541 = vmatpush1.msra.mxu0 0.0
        %2542 = vmatprep.subr.mxu0 0.0
        %2543 = vmatpush1.msra.mxu0 0.0
        %2544 = vmatprep.subr.mxu0 0.0
        %2545 = vmatpush1.msra.mxu0 0.0
        %2546 = vmatprep.subr.mxu0 0.0
        %2547 = vmatpush1.msra.mxu0 0.0
        %2548 = vmatprep.subr.mxu0 0.0
        %2549 = vmatpush1.msra.mxu0 0.0
        %2550 = vmatprep.subr.mxu0 0.0
        %2551 = vmatpush1.msra.mxu0 0.0
        %2552 = vmatprep.subr.mxu0 0.0
        %2553 = vmatpush1.msra.mxu0 0.0
        %2554 = vmatprep.subr.mxu0 0.0
        %2555 = vmatpush1.msra.mxu0 0.0
        %2556 = vmatprep.subr.mxu0 0.0
        %2557 = vmatpush1.msra.mxu0 0.0
        %2558 = vmatprep.subr.mxu0 0.0
        %2559 = vmatpush1.msra.mxu0 0.0
        %2560 = vmatprep.subr.mxu0 0.0
        %2561 = vmatpush1.msra.mxu0 0.0
        %2562 = vmatprep.subr.mxu0 0.0
        %2563 = vmatpush1.msra.mxu0 0.0
        %2564 = vmatprep.subr.mxu0 0.0
        %2565 = vmatpush1.msra.mxu0 0.0
        %2566 = vmatprep.subr.mxu0 0.0
        %2567 = vmatpush1.msra.mxu0 0.0
        %2568 = vmatprep.subr.mxu0 0.0
        %2569 = vmatpush1.msra.mxu0 0.0
        %2570 = vmatprep.subr.mxu0 0.0
        %2571 = vmatpush1.msra.mxu0 0.0
        %2572 = vmatprep.subr.mxu0 0.0
        %2573 = vmatpush1.msra.mxu0 0.0
        %2574 = vmatprep.subr.mxu0 0.0
        %2575 = vmatpush1.msra.mxu0 0.0
        %2576 = vmatprep.subr.mxu0 0.0
        %2577 = vmatpush1.msra.mxu0 0.0
        %2578 = vmatprep.subr.mxu0 0.0
        %2579 = vmatpush1.msra.mxu0 0.0
        %2580 = vmatprep.subr.mxu0 0.0
        %2581 = vmatpush1.msra.mxu0 0.0
        %2582 = vmatprep.subr.mxu0 0.0
        %2583 = vmatpush1.msra.mxu0 0.0
        %2584 = vmatprep.subr.mxu0 0.0
        %2585 = vmatpush1.msra.mxu0 0.0
        %2586 = vmatprep.subr.mxu0 0.0
        %2587 = vmatpush1.msra.mxu0 0.0
        %2588 = vmatprep.subr.mxu0 0.0
        %2589 = vmatpush1.msra.mxu0 0.0
        %2590 = vmatprep.subr.mxu0 0.0
        %2591 = vmatpush1.msra.mxu0 0.0
        %2592 = vmatprep.subr.mxu0 0.0
        %2593 = vmatpush1.msra.mxu0 0.0
        %2594 = vmatprep.subr.mxu0 0.0
        %2595 = vmatpush1.msra.mxu0 0.0
        %2596 = vmatprep.mubr.f32.mxu0 0.0
        %2597 = vmatmul.mubr.f32.gmra.mrb[0].mxu0 %v2530
        %v2598 = vpop.f32.mrb[0].mxu0
        %v2599 = vadd.f32 0.0, %v2598
        %v2600 = vpop.f32.mrb[0].mxu0
        %2601 = vdwg.mxu0
        %v2602 = vadd.f32 %v2139, %v2599
        %v2603 = vld [vmem:[#allocation13] sm:$0x1]
        %v2605 = vlaneseq
        %v2606 = vshrl.u32 %v2605, 7
        %v2607 = vsub.s32 0, %v2606
        %v2608 = vrot.slane %v2603, %v2607
        %v2610 = vadd.f32 %v2602, %v2608
        %v2611 = vadd.f32 %v2610, %v738
        %v2612 = vld [vmem:[#allocation14] sm:$0x1]
        %v2613 = vld [vmem:[#allocation16] sm:$0x1]
        %v2614 = vsel %vm752, %v2611, 0.0
        %2615 = vadd.xlane.f32.xlu0 %v2614
        %v2616 = vpop.xlane.xlu0 %2615
        %v2617 = vrcp.pop 32.0
        %v2618 = vmul.f32 %v2616, %v2617
        %v2619 = vsub.f32 %v2611, %v2618
        %v2620 = vmul.f32 %v2619, %v2619
        %v2621 = vsel %vm752, %v2620, 0.0
        %2622 = vadd.xlane.f32.xlu0 %v2621
        %v2623 = vpop.xlane.xlu0 %2622
        %v2624 = vmul.f32 %v2623, %v2617
        %v2625 = vadd.f32 %v2624, 1e-05
        %v2626 = vrsqrt.pop %v2625
        %v2627 = vmul.f32 %v2619, %v2626
        %v2629 = vlaneseq
        %v2630 = vshrl.u32 %v2629, 7
        %v2631 = vsub.s32 0, %v2630
        %v2632 = vrot.slane %v2612, %v2631
        %v2634 = vmul.f32 %v2627, %v2632
        %v2636 = vlaneseq
        %v2637 = vshrl.u32 %v2636, 7
        %v2638 = vsub.s32 0, %v2637
        %v2639 = vrot.slane %v2613, %v2638
        %v2641 = vadd.f32 %v2634, %v2639
        %v2642 = vld [vmem:[#allocation17] sm:$0xff]
        %v2643 = vld [vmem:[#allocation17 + $0x8] sm:$0xff]
        %v2644 = vld [vmem:[#allocation17 + $0x10] sm:$0xff]
        %v2645 = vld [vmem:[#allocation17 + $0x18] sm:$0xff]
        %v2646 = vld [vmem:[#allocation19] sm:$0x1]
        %v2648 = vlaneseq
        %v2649 = vshrl.u32 %v2648, 7
        %v2650 = vsub.s32 0, %v2649
        %v2651 = vrot.slane %v2646, %v2650
        %v2654 = vsel %vm752, %v2641, 0
        %2656 = vmatprep.subr.mxu0 0.0
        %2657 = vmatpush1.msra.mxu0 %v2642
        %2658 = vmatprep.subr.mxu0 0.0
        %2659 = vmatpush1.msra.mxu0 %v2643
        %2660 = vmatprep.subr.mxu0 0.0
        %2661 = vmatpush1.msra.mxu0 %v2644
        %2662 = vmatprep.subr.mxu0 0.0
        %2663 = vmatpush1.msra.mxu0 %v2645
        %2664 = vmatprep.subr.mxu0 0.0
        %2665 = vmatpush1.msra.mxu0 0.0
        %2666 = vmatprep.subr.mxu0 0.0
        %2667 = vmatpush1.msra.mxu0 0.0
        %2668 = vmatprep.subr.mxu0 0.0
        %2669 = vmatpush1.msra.mxu0 0.0
        %2670 = vmatprep.subr.mxu0 0.0
        %2671 = vmatpush1.msra.mxu0 0.0
        %2672 = vmatprep.subr.mxu0 0.0
        %2673 = vmatpush1.msra.mxu0 0.0
        %2674 = vmatprep.subr.mxu0 0.0
        %2675 = vmatpush1.msra.mxu0 0.0
        %2676 = vmatprep.subr.mxu0 0.0
        %2677 = vmatpush1.msra.mxu0 0.0
        %2678 = vmatprep.subr.mxu0 0.0
        %2679 = vmatpush1.msra.mxu0 0.0
        %2680 = vmatprep.subr.mxu0 0.0
        %2681 = vmatpush1.msra.mxu0 0.0
        %2682 = vmatprep.subr.mxu0 0.0
        %2683 = vmatpush1.msra.mxu0 0.0
        %2684 = vmatprep.subr.mxu0 0.0
        %2685 = vmatpush1.msra.mxu0 0.0
        %2686 = vmatprep.subr.mxu0 0.0
        %2687 = vmatpush1.msra.mxu0 0.0
        %2688 = vmatprep.subr.mxu0 0.0
        %2689 = vmatpush1.msra.mxu0 0.0
        %2690 = vmatprep.subr.mxu0 0.0
        %2691 = vmatpush1.msra.mxu0 0.0
        %2692 = vmatprep.subr.mxu0 0.0
        %2693 = vmatpush1.msra.mxu0 0.0
        %2694 = vmatprep.subr.mxu0 0.0
        %2695 = vmatpush1.msra.mxu0 0.0
        %2696 = vmatprep.subr.mxu0 0.0
        %2697 = vmatpush1.msra.mxu0 0.0
        %2698 = vmatprep.subr.mxu0 0.0
        %2699 = vmatpush1.msra.mxu0 0.0
        %2700 = vmatprep.subr.mxu0 0.0
        %2701 = vmatpush1.msra.mxu0 0.0
        %2702 = vmatprep.subr.mxu0 0.0
        %2703 = vmatpush1.msra.mxu0 0.0
        %2704 = vmatprep.subr.mxu0 0.0
        %2705 = vmatpush1.msra.mxu0 0.0
        %2706 = vmatprep.subr.mxu0 0.0
        %2707 = vmatpush1.msra.mxu0 0.0
        %2708 = vmatprep.subr.mxu0 0.0
        %2709 = vmatpush1.msra.mxu0 0.0
        %2710 = vmatprep.subr.mxu0 0.0
        %2711 = vmatpush1.msra.mxu0 0.0
        %2712 = vmatprep.subr.mxu0 0.0
        %2713 = vmatpush1.msra.mxu0 0.0
        %2714 = vmatprep.subr.mxu0 0.0
        %2715 = vmatpush1.msra.mxu0 0.0
        %2716 = vmatprep.subr.mxu0 0.0
        %2717 = vmatpush1.msra.mxu0 0.0
        %2718 = vmatprep.subr.mxu0 0.0
        %2719 = vmatpush1.msra.mxu0 0.0
        %2720 = vmatprep.mubr.f32.mxu0 0.0
        %2721 = vmatmul.mubr.f32.gmra.mrb[0].mxu0 %v2654
        %v2722 = vpop.f32.mrb[0].mxu0
        %v2723 = vadd.f32 %v2651, %v2722
        %v2724 = vpop.f32.mrb[0].mxu0
        %2725 = vdwg.mxu0
        %v2726 = vmax.f32 %v2723, 0.0
        %v2727 = vld [vmem:[#allocation20] sm:$0xff]
        %v2728 = vld [vmem:[#allocation20 + $0x8] sm:$0xff]
        %v2729 = vld [vmem:[#allocation20 + $0x10] sm:$0xff]
        %v2730 = vld [vmem:[#allocation20 + $0x18] sm:$0xff]
        %v2731 = vld [vmem:[#allocation20 + $0x20] sm:$0xff]
        %v2732 = vld [vmem:[#allocation20 + $0x28] sm:$0xff]
        %v2733 = vld [vmem:[#allocation20 + $0x30] sm:$0xff]
        %v2734 = vld [vmem:[#allocation20 + $0x38] sm:$0xff]
        %v2735 = vld [vmem:[#allocation20 + $0x40] sm:$0xff]
        %v2736 = vld [vmem:[#allocation20 + $0x48] sm:$0xff]
        %v2737 = vld [vmem:[#allocation20 + $0x50] sm:$0xff]
        %v2738 = vld [vmem:[#allocation20 + $0x58] sm:$0xff]
        %v2739 = vld [vmem:[#allocation20 + $0x60] sm:$0xff]
        %v2740 = vld [vmem:[#allocation20 + $0x68] sm:$0xff]
        %v2741 = vld [vmem:[#allocation20 + $0x70] sm:$0xff]
        %v2742 = vld [vmem:[#allocation20 + $0x78] sm:$0xff]
        %v2743 = vld [vmem:[#allocation22] sm:$0x1]
        %v2745 = vlaneseq
        %v2746 = vshrl.u32 %v2745, 7
        %v2747 = vsub.s32 0, %v2746
        %v2748 = vrot.slane %v2743, %v2747
        %2750 = vmatprep.subr.mxu0 0.0
        %2751 = vmatpush1.msra.mxu0 %v2727
        %2752 = vmatprep.subr.mxu0 0.0
        %2753 = vmatpush1.msra.mxu0 %v2728
        %2754 = vmatprep.subr.mxu0 0.0
        %2755 = vmatpush1.msra.mxu0 %v2729
        %2756 = vmatprep.subr.mxu0 0.0
        %2757 = vmatpush1.msra.mxu0 %v2730
        %2758 = vmatprep.subr.mxu0 0.0
        %2759 = vmatpush1.msra.mxu0 %v2731
        %2760 = vmatprep.subr.mxu0 0.0
        %2761 = vmatpush1.msra.mxu0 %v2732
        %2762 = vmatprep.subr.mxu0 0.0
        %2763 = vmatpush1.msra.mxu0 %v2733
        %2764 = vmatprep.subr.mxu0 0.0
        %2765 = vmatpush1.msra.mxu0 %v2734
        %2766 = vmatprep.subr.mxu0 0.0
        %2767 = vmatpush1.msra.mxu0 %v2735
        %2768 = vmatprep.subr.mxu0 0.0
        %2769 = vmatpush1.msra.mxu0 %v2736
        %2770 = vmatprep.subr.mxu0 0.0
        %2771 = vmatpush1.msra.mxu0 %v2737
        %2772 = vmatprep.subr.mxu0 0.0
        %2773 = vmatpush1.msra.mxu0 %v2738
        %2774 = vmatprep.subr.mxu0 0.0
        %2775 = vmatpush1.msra.mxu0 %v2739
        %2776 = vmatprep.subr.mxu0 0.0
        %2777 = vmatpush1.msra.mxu0 %v2740
        %2778 = vmatprep.subr.mxu0 0.0
        %2779 = vmatpush1.msra.mxu0 %v2741
        %2780 = vmatprep.subr.mxu0 0.0
        %2781 = vmatpush1.msra.mxu0 %v2742
        %2782 = vmatprep.subr.mxu0 0.0
        %2783 = vmatpush1.msra.mxu0 0.0
        %2784 = vmatprep.subr.mxu0 0.0
        %2785 = vmatpush1.msra.mxu0 0.0
        %2786 = vmatprep.subr.mxu0 0.0
        %2787 = vmatpush1.msra.mxu0 0.0
        %2788 = vmatprep.subr.mxu0 0.0
        %2789 = vmatpush1.msra.mxu0 0.0
        %2790 = vmatprep.subr.mxu0 0.0
        %2791 = vmatpush1.msra.mxu0 0.0
        %2792 = vmatprep.subr.mxu0 0.0
        %2793 = vmatpush1.msra.mxu0 0.0
        %2794 = vmatprep.subr.mxu0 0.0
        %2795 = vmatpush1.msra.mxu0 0.0
        %2796 = vmatprep.subr.mxu0 0.0
        %2797 = vmatpush1.msra.mxu0 0.0
        %2798 = vmatprep.subr.mxu0 0.0
        %2799 = vmatpush1.msra.mxu0 0.0
        %2800 = vmatprep.subr.mxu0 0.0
        %2801 = vmatpush1.msra.mxu0 0.0
        %2802 = vmatprep.subr.mxu0 0.0
        %2803 = vmatpush1.msra.mxu0 0.0
        %2804 = vmatprep.subr.mxu0 0.0
        %2805 = vmatpush1.msra.mxu0 0.0
        %2806 = vmatprep.subr.mxu0 0.0
        %2807 = vmatpush1.msra.mxu0 0.0
        %2808 = vmatprep.subr.mxu0 0.0
        %2809 = vmatpush1.msra.mxu0 0.0
        %2810 = vmatprep.subr.mxu0 0.0
        %2811 = vmatpush1.msra.mxu0 0.0
        %2812 = vmatprep.subr.mxu0 0.0
        %2813 = vmatpush1.msra.mxu0 0.0
        %2814 = vmatprep.mubr.f32.mxu0 0.0
        %2815 = vmatmul.mubr.f32.gmra.mrb[0].mxu0 %v2726
        %v2816 = vpop.f32.mrb[0].mxu0
        %v2817 = vadd.f32 %v2748, %v2816
        %v2818 = vpop.f32.mrb[0].mxu0
        %2819 = vdwg.mxu0
        %v2820 = vadd.f32 %v2817, %v2641
        %v2821 = vld [vmem:[#allocation23] sm:$0x1]
        %v2822 = vld [vmem:[#allocation25] sm:$0x1]
        %v2823 = vsel %vm752, %v2820, 0.0
        %2824 = vadd.xlane.f32.xlu0 %v2823
        %v2825 = vpop.xlane.xlu0 %2824
        %v2826 = vmul.f32 %v2825, %v2617
        %v2827 = vsub.f32 %v2820, %v2826
        %v2828 = vmul.f32 %v2827, %v2827
        %v2829 = vsel %vm752, %v2828, 0.0
        %2830 = vadd.xlane.f32.xlu0 %v2829
        %v2831 = vpop.xlane.xlu0 %2830
        %v2832 = vmul.f32 %v2831, %v2617
        %v2833 = vadd.f32 %v2832, 1e-05
        %v2834 = vrsqrt.pop %v2833
        %v2835 = vmul.f32 %v2827, %v2834
        %v2837 = vlaneseq
        %v2838 = vshrl.u32 %v2837, 7
        %v2839 = vsub.s32 0, %v2838
        %v2840 = vrot.slane %v2821, %v2839
        %v2842 = vmul.f32 %v2835, %v2840
        %v2844 = vlaneseq
        %v2845 = vshrl.u32 %v2844, 7
        %v2846 = vsub.s32 0, %v2845
        %v2847 = vrot.slane %v2822, %v2846
        %v2849 = vadd.f32 %v2842, %v2847
        %2850 = vst.msk [vmem:[%s737] sm:$0xff] %vm752, %v2849
        %s2851 = sand.u32 %s390, 1
        %s2852 = scalar_lea.sflag [#allocation4], %s2851
        %s2853 = sand.u32 %s390, 1
        %s2854 = smul.addr %s2853, 8
        %s2855 = scalar_lea.vmem [#allocation26], %s2854
        // Predicated region
        $region141: #{tpu_custom_call.1} parent=79 // pred_check
          %p2856 = pneg %p400
        $region142: #{tpu_custom_call.1} parent=79 // pred_check_branch
          %2858 = sbr.rel (%p2856) target = $region144
        $region143: #{tpu_custom_call.1} parent=79 // pred_region
          %s2860 = ssub.s32 128, 128
          %2861 = vsyncadd %s2852, %s2860
          %s2862 = sadd.s32 %s46, %s45
          %s2863 = smul.addr %s2862, 128
          %s2864 = scalar_lea.hbm %s15, %s2863
          %s2866 = sshll.u32 %s2855, 4
          %s2867 = int_to_ptr.vmem [resolvable:$true] %s2866
          %2869 = dma.vmem_to_hbm [thread:$0]  %s2867, 128, %s2864, %s2852
        $region144: #{tpu_custom_call.1} parent=79 // pred_fallthru
          _
      $region80: #{tpu_custom_call.1} parent=5 // pred_fallthru
        _
      %p2870 = scmp.le.s32.totalorder 2, %s36
      // Predicated region
      $region145: #{tpu_custom_call.1} parent=5 // pred_check
        %p2871 = pneg %p2870
      $region146: #{tpu_custom_call.1} parent=5 // pred_check_branch
        %2873 = sbr.rel (%p2871) target = $region148
      $region147: #{tpu_custom_call.1} parent=5 // pred_region
        %s2874 = ssub.s32 %s36, 2
        // Predicated region
        $region149: #{tpu_custom_call.1} parent=147 // pred_check
          %p2875 = pneg %p406
        $region150: #{tpu_custom_call.1} parent=147 // pred_check_branch
          %2877 = sbr.rel (%p2875) target = $region152
        $region151: #{tpu_custom_call.1} parent=147 // pred_region
          %s2878 = sand.u32 %s391, 1
          %s2879 = scalar_lea.sflag [#allocation4], %s2878
          %s2880 = sand.u32 %s391, 1
          %s2881 = smul.addr %s2880, 8
          %s2882 = scalar_lea.vmem [#allocation26], %s2881
          %2883 = dma.done %s2879, 128
        $region152: #{tpu_custom_call.1} parent=147 // pred_fallthru
          _
      $region148: #{tpu_custom_call.1} parent=5 // pred_fallthru
        _
    $region6: #{tpu_custom_call.1} parent=1 // loop_footer
      %s40 = sadd.s32 1, %s36
    $region7: #{tpu_custom_call.1} parent=1 // loop_footer_branch
      %35 = sbr.rel target = $region3
    $region8: #{tpu_custom_call.1} parent=1 // loop_exit
      _
    %2884 = vsyncpa [#allocation3], 1
    %s2885 = scalar_lea.sflag [#allocation3], 1
    %2886 = vsyncpa %s2885, 1
    %2887 = vsyncpa [#allocation6], 1
    %s2888 = scalar_lea.sflag [#allocation6], 1
    %2889 = vsyncpa %s2888, 1
    %2890 = vsyncpa [#allocation9], 1
    %2891 = vsyncpa [#allocation12], 1
    %2892 = vsyncpa [#allocation15], 1
    %2893 = vsyncpa [#allocation18], 1
    %2894 = vsyncpa [#allocation21], 1
    %2895 = vsyncpa [#allocation24], 1
    %2896 = vsyncpa [#allocation4], 1
    %s2897 = scalar_lea.sflag [#allocation4], 1
    %2898 = vsyncpa %s2897, 1

</llo_original>
